<compile_context>
chip_gen: v6e
topology: v6e:2x2x1
jax: 0.10.0
libtpu: 0.0.40
codegen_flags: <defaults>
</compile_context>

<pallas_src>
import jax
import jax.numpy as jnp
from jax.experimental import pallas as pl
from jax.experimental.pallas import tpu as pltpu

STATE_DIM = 200
HID1 = 512
HID2 = 1024
ACTION_SPACE = 400

STATE_PAD = 256    # 200 -> 256 (multiple of 128) for aligned lane loads
ACTION_PAD = 512   # 400 -> 512 (multiple of 128) for lane-dense output stores
NEG_BIAS = -1e30   # padded logit lanes -> exp underflows to 0 in the softmax

TB_CAP = 1024      # max batch-tile rows (v6e sweet spot; fits v7x VMEM with
                   # single-buffered weights)


def _round_up(x, m):
    return ((x + m - 1) // m) * m


def policy_kernel(x_ref, w1_ref, b1_ref, w2_ref, b2_ref, w3_ref, b3_ref, o_ref):
    x = x_ref[...]  # bf16 [TB, STATE_PAD]

    # fc1 + ReLU  (bf16 MXU, f32 accumulate)
    h1 = jnp.dot(x, w1_ref[...], preferred_element_type=jnp.float32) + b1_ref[...]
    h1 = jnp.maximum(h1, 0.0)

    # fc2 + ReLU
    h2 = jnp.dot(h1.astype(w2_ref.dtype), w2_ref[...],
                 preferred_element_type=jnp.float32) + b2_ref[...]
    h2 = jnp.maximum(h2, 0.0)

    # fc3 + numerically stable softmax over the (padded) action axis.
    logits = jnp.dot(h2.astype(w3_ref.dtype), w3_ref[...],
                     preferred_element_type=jnp.float32) + b3_ref[...]
    m = jnp.max(logits, axis=-1, keepdims=True)
    e = jnp.exp(logits - m)                 # padded lanes: exp(-1e30 - m) == 0
    denom = jnp.sum(e, axis=-1, keepdims=True)
    # Exact divide (negligible cost; rows sum to 1 at f32 precision).
    o_ref[...] = (e / denom).astype(o_ref.dtype)


def prepare_params(params):
    """One-time (cache this!) pad + bf16 cast of the weights/biases.

    params: (w1[200,512], b1[1,512], w2[512,1024], b2[1,1024],
             w3[1024,400], b3[1,400])  -- all f32, weights as [in, out].
    """
    w1, b1, w2, b2, w3, b3 = params
    w1p = jnp.pad(w1, ((0, STATE_PAD - STATE_DIM), (0, 0))).astype(jnp.bfloat16)
    w2p = w2.astype(jnp.bfloat16)
    w3p = jnp.pad(w3, ((0, 0), (0, ACTION_PAD - ACTION_SPACE))).astype(jnp.bfloat16)
    b3p = jnp.pad(b3, ((0, 0), (0, ACTION_PAD - ACTION_SPACE)),
                  constant_values=NEG_BIAS)
    return (w1p, b1, w2p, b2, w3p, b3p)


def _choose_batch_tile(B):
    """Balanced batch tiles; >= 2 grid steps once B > 128 (v7x megacore)."""
    min_tiles = 2 if B > 128 else 1
    tiles = max(min_tiles, -(-B // TB_CAP))
    # Multiple of 16 rows (bf16 output sublane packing), balanced across tiles.
    tb = _round_up(-(-B // tiles), 16)
    return tb


def supervised_policy_forward(state, prepared_params, return_padded=False):
    """state: [B, STATE_DIM] f32 -> action_prob: [B, ACTION_SPACE] bf16.

    prepared_params: output of prepare_params() (cached once at init).
    return_padded=True returns the full [B_pad, ACTION_PAD] buffer and skips
    the output slice (avoids an extra HBM read/write when the consumer can
    mask/ignore padded lanes).
    """
    w1p, b1, w2p, b2, w3p, b3p = prepared_params
    B = state.shape[0]

    # Activation prep (per-call, unavoidable): pad K and batch, cast to bf16.
    TB = _choose_batch_tile(B)
    B_pad = _round_up(B, TB)
    x = jnp.pad(state, ((0, B_pad - B), (0, STATE_PAD - STATE_DIM))).astype(jnp.bfloat16)

    grid = (B_pad // TB,)

    # Weights/biases: constant block index -> DMA'd once, resident across the
    # grid; single-buffered (pl.Buffered(1)) since they never change.
    def _resident(shape):
        return pl.BlockSpec(shape, lambda i: (0, 0), pipeline_mode=pl.Buffered(1))

    in_specs = [
        pl.BlockSpec((TB, STATE_PAD), lambda i: (i, 0)),
        _resident((STATE_PAD, HID1)),
        _resident((1, HID1)),
        _resident((HID1, HID2)),
        _resident((1, HID2)),
        _resident((HID2, ACTION_PAD)),
        _resident((1, ACTION_PAD)),
    ]
    out_specs = pl.BlockSpec((TB, ACTION_PAD), lambda i: (i, 0))

    weight_bytes = 2 * (STATE_PAD * HID1 + HID1 * HID2 + HID2 * ACTION_PAD)  # bf16
    bias_bytes = 4 * (HID1 + HID2 + ACTION_PAD)
    act_bytes = B_pad * (2 * STATE_PAD + 2 * ACTION_PAD)                     # bf16 in/out
    cost = pl.CostEstimate(
        flops=2 * B_pad * (STATE_PAD * HID1 + HID1 * HID2 + HID2 * ACTION_PAD),
        transcendentals=B_pad * ACTION_PAD,
        bytes_accessed=weight_bytes + bias_bytes + act_bytes,
    )

    out = pl.pallas_call(
        policy_kernel,
        out_shape=jax.ShapeDtypeStruct((B_pad, ACTION_PAD), jnp.bfloat16),
        grid=grid,
        in_specs=in_specs,
        out_specs=out_specs,
        compiler_params=pltpu.CompilerParams(
            dimension_semantics=("parallel",),     # megacore-shard batch tiles
            vmem_limit_bytes=48 * 1024 * 1024,     # TB=1024 working set << 48 MiB
        ),
        cost_estimate=cost,
    )(x, w1p, b1, w2p, b2, w3p, b3p)

    if return_padded:
        return out
    # TODO(synk): fusing the downstream consumer (argmax / sampling / loss) into
    # the kernel epilogue would avoid this extra slice pass over the output.
    return out[:B, :ACTION_SPACE]


def init_params(key):
    """Deterministic synthetic parameters (xavier-ish scaling), f32, [in, out]."""
    k1, k2, k3 = jax.random.split(key, 3)

    def xavier(k, fan_in, fan_out):
        scale = jnp.sqrt(2.0 / (fan_in + fan_out)).astype(jnp.float32)
        return jax.random.normal(k, (fan_in, fan_out), dtype=jnp.float32) * scale

    w1 = xavier(k1, STATE_DIM, HID1)
    b1 = jnp.zeros((1, HID1), dtype=jnp.float32)
    w2 = xavier(k2, HID1, HID2)
    b2 = jnp.zeros((1, HID2), dtype=jnp.float32)
    w3 = xavier(k3, HID2, ACTION_SPACE)
    b3 = jnp.zeros((1, ACTION_SPACE), dtype=jnp.float32)
    return (w1, b1, w2, b2, w3, b3)


def reference_forward(state, params):
    """Plain-JAX reference mirroring the kernel's bf16-weight / f32-accumulate math."""
    w1, b1, w2, b2, w3, b3 = params
    xb = state.astype(jnp.bfloat16)
    w1b, w2b, w3b = (w.astype(jnp.bfloat16) for w in (w1, w2, w3))
    h1 = jnp.maximum(jnp.dot(xb, w1b, preferred_element_type=jnp.float32) + b1, 0.0)
    h2 = jnp.maximum(
        jnp.dot(h1.astype(jnp.bfloat16), w2b, preferred_element_type=jnp.float32) + b2,
        0.0)
    logits = jnp.dot(h2.astype(jnp.bfloat16), w3b,
                     preferred_element_type=jnp.float32) + b3
    return jax.nn.softmax(logits, axis=1)


# TODO(synk): compute_loss / Adam optimizer from SupervisedPolicy are training-side
# and not part of the forward pass; only forward() is implemented here.

if __name__ == "__main__":
    key = jax.random.PRNGKey(0)
    k_params, k_state = jax.random.split(key)

    params = init_params(k_params)
    prepared = prepare_params(params)          # one-time pad + bf16 cast (cached)

    batch = 2
    state = jax.random.normal(k_state, (batch, STATE_DIM), dtype=jnp.float32)

    out = supervised_policy_forward(state, prepared)
    out = jax.block_until_ready(out)

    ref = reference_forward(state, params)
    assert out.shape == (batch, ACTION_SPACE)

    out_f32 = out.astype(jnp.float32)
    # Rows sum to 1 (slack for the final bf16 cast of the probabilities).
    assert jnp.allclose(jnp.sum(out_f32, axis=1), 1.0, atol=5e-3)
    # Match the bf16-weight reference (slack for bf16 output quantization).
    assert jnp.allclose(out_f32, ref, atol=5e-4, rtol=3e-2)

    print("KERNEL_OK")
</pallas_src>

<mosaic_0001>
module attributes {stable_mosaic.version = 11 : i64} {
  func.func @policy_kernel(%arg0: i32, %arg1: memref<16x256xbf16, #tpu.memory_space<vmem>>, %arg2: memref<256x512xbf16, #tpu.memory_space<vmem>>, %arg3: memref<1x512xf32, #tpu.memory_space<vmem>>, %arg4: memref<512x1024xbf16, #tpu.memory_space<vmem>>, %arg5: memref<1x1024xf32, #tpu.memory_space<vmem>>, %arg6: memref<1024x512xbf16, #tpu.memory_space<vmem>>, %arg7: memref<1x512xf32, #tpu.memory_space<vmem>>, %arg8: memref<16x512xbf16, #tpu.memory_space<vmem>>) attributes {dimension_semantics = [#tpu.dimension_semantics<parallel>], iteration_bounds = array<i64: 1>, scalar_prefetch = 0 : i64, scratch_operands = 0 : i64, tpu.core_type = #tpu.core_type<tc>, window_params = [{transform_indices = @transform_0, window_bounds = array<i64: 16, 256>}, {pipeline_mode = #tpu.pipeline_mode<synchronous>, transform_indices = @transform_1, window_bounds = array<i64: 256, 512>}, {pipeline_mode = #tpu.pipeline_mode<synchronous>, transform_indices = @transform_2, window_bounds = array<i64: 1, 512>}, {pipeline_mode = #tpu.pipeline_mode<synchronous>, transform_indices = @transform_3, window_bounds = array<i64: 512, 1024>}, {pipeline_mode = #tpu.pipeline_mode<synchronous>, transform_indices = @transform_4, window_bounds = array<i64: 1, 1024>}, {pipeline_mode = #tpu.pipeline_mode<synchronous>, transform_indices = @transform_5, window_bounds = array<i64: 1024, 512>}, {pipeline_mode = #tpu.pipeline_mode<synchronous>, transform_indices = @transform_6, window_bounds = array<i64: 1, 512>}, {transform_indices = @transform_7, window_bounds = array<i64: 16, 512>}]} {
    %c0 = arith.constant 0 : index
    %c0_0 = arith.constant 0 : index
    %0 = vector.load %arg1[%c0, %c0_0] : memref<16x256xbf16, #tpu.memory_space<vmem>>, vector<16x256xbf16>
    %c0_1 = arith.constant 0 : index
    %c0_2 = arith.constant 0 : index
    %1 = vector.load %arg2[%c0_1, %c0_2] : memref<256x512xbf16, #tpu.memory_space<vmem>>, vector<256x512xbf16>
    %cst = arith.constant dense<0.000000e+00> : vector<16x512xf32>
    %2 = tpu.matmul %0, %1, %cst {dimension_numbers = #tpu.dot_dimension_numbers<[1], [0], [0], [1], [0, 0, 1, 1], [], []>} : vector<16x256xbf16>, vector<256x512xbf16>, vector<16x512xf32> -> vector<16x512xf32>
    %c0_3 = arith.constant 0 : index
    %c0_4 = arith.constant 0 : index
    %3 = vector.load %arg3[%c0_3, %c0_4] : memref<1x512xf32, #tpu.memory_space<vmem>>, vector<1x512xf32>
    %4 = vector.broadcast %3 : vector<1x512xf32> to vector<16x512xf32>
    %5 = arith.addf %2, %4 : vector<16x512xf32>
    %cst_5 = arith.constant 0.000000e+00 : f32
    %6 = vector.broadcast %cst_5 : f32 to vector<16x512xf32>
    %7 = arith.maximumf %5, %6 : vector<16x512xf32>
    %8 = arith.truncf %7 : vector<16x512xf32> to vector<16x512xbf16>
    %c0_6 = arith.constant 0 : index
    %c0_7 = arith.constant 0 : index
    %9 = vector.load %arg4[%c0_6, %c0_7] : memref<512x1024xbf16, #tpu.memory_space<vmem>>, vector<512x1024xbf16>
    %cst_8 = arith.constant dense<0.000000e+00> : vector<16x1024xf32>
    %10 = tpu.matmul %8, %9, %cst_8 {dimension_numbers = #tpu.dot_dimension_numbers<[1], [0], [0], [1], [0, 0, 1, 1], [], []>} : vector<16x512xbf16>, vector<512x1024xbf16>, vector<16x1024xf32> -> vector<16x1024xf32>
    %c0_9 = arith.constant 0 : index
    %c0_10 = arith.constant 0 : index
    %11 = vector.load %arg5[%c0_9, %c0_10] : memref<1x1024xf32, #tpu.memory_space<vmem>>, vector<1x1024xf32>
    %12 = vector.broadcast %11 : vector<1x1024xf32> to vector<16x1024xf32>
    %13 = arith.addf %10, %12 : vector<16x1024xf32>
    %cst_11 = arith.constant 0.000000e+00 : f32
    %14 = vector.broadcast %cst_11 : f32 to vector<16x1024xf32>
    %15 = arith.maximumf %13, %14 : vector<16x1024xf32>
    %16 = arith.truncf %15 : vector<16x1024xf32> to vector<16x1024xbf16>
    %c0_12 = arith.constant 0 : index
    %c0_13 = arith.constant 0 : index
    %17 = vector.load %arg6[%c0_12, %c0_13] : memref<1024x512xbf16, #tpu.memory_space<vmem>>, vector<1024x512xbf16>
    %cst_14 = arith.constant dense<0.000000e+00> : vector<16x512xf32>
    %18 = tpu.matmul %16, %17, %cst_14 {dimension_numbers = #tpu.dot_dimension_numbers<[1], [0], [0], [1], [0, 0, 1, 1], [], []>} : vector<16x1024xbf16>, vector<1024x512xbf16>, vector<16x512xf32> -> vector<16x512xf32>
    %c0_15 = arith.constant 0 : index
    %c0_16 = arith.constant 0 : index
    %19 = vector.load %arg7[%c0_15, %c0_16] : memref<1x512xf32, #tpu.memory_space<vmem>>, vector<1x512xf32>
    %20 = vector.broadcast %19 : vector<1x512xf32> to vector<16x512xf32>
    %21 = arith.addf %18, %20 : vector<16x512xf32>
    %cst_17 = arith.constant dense<0xFF800000> : vector<16xf32>
    %22 = vector.multi_reduction <maximumf>, %21, %cst_17 [1] : vector<16x512xf32> to vector<16xf32>
    %23 = vector.shape_cast %22 : vector<16xf32> to vector<16x1xf32>
    %24 = vector.broadcast %23 : vector<16x1xf32> to vector<16x512xf32>
    %25 = arith.subf %21, %24 : vector<16x512xf32>
    %26 = math.exp %25 : vector<16x512xf32>
    %cst_18 = arith.constant dense<0.000000e+00> : vector<16xf32>
    %27 = vector.multi_reduction <add>, %26, %cst_18 [1] : vector<16x512xf32> to vector<16xf32>
    %28 = vector.shape_cast %27 : vector<16xf32> to vector<16x1xf32>
    %29 = vector.broadcast %28 : vector<16x1xf32> to vector<16x512xf32>
    %30 = arith.divf %26, %29 : vector<16x512xf32>
    %31 = arith.truncf %30 : vector<16x512xf32> to vector<16x512xbf16>
    %c0_19 = arith.constant 0 : index
    %c0_20 = arith.constant 0 : index
    %32 = vector.load %arg8[%c0_19, %c0_20] : memref<16x512xbf16, #tpu.memory_space<vmem>>, vector<16x512xbf16>
    tpu.vector_store %arg8[%c0_19, %c0_20], %31 {strides = array<i32>} : memref<16x512xbf16, #tpu.memory_space<vmem>>, vector<16x512xbf16>,
    return
  }
  func.func @transform_0(%arg0: i32) -> (i32, i32) {
    %c0_i32 = arith.constant 0 : i32
    %c0_i32_0 = arith.constant 0 : i32
    return %arg0, %c0_i32 : i32, i32
  }
  func.func @transform_1(%arg0: i32) -> (i32, i32) {
    %c0_i32 = arith.constant 0 : i32
    %c0_i32_0 = arith.constant 0 : i32
    %c0_i32_1 = arith.constant 0 : i32
    return %c0_i32, %c0_i32_0 : i32, i32
  }
  func.func @transform_2(%arg0: i32) -> (i32, i32) {
    %c0_i32 = arith.constant 0 : i32
    %c0_i32_0 = arith.constant 0 : i32
    %c0_i32_1 = arith.constant 0 : i32
    return %c0_i32, %c0_i32_0 : i32, i32
  }
  func.func @transform_3(%arg0: i32) -> (i32, i32) {
    %c0_i32 = arith.constant 0 : i32
    %c0_i32_0 = arith.constant 0 : i32
    %c0_i32_1 = arith.constant 0 : i32
    return %c0_i32, %c0_i32_0 : i32, i32
  }
  func.func @transform_4(%arg0: i32) -> (i32, i32) {
    %c0_i32 = arith.constant 0 : i32
    %c0_i32_0 = arith.constant 0 : i32
    %c0_i32_1 = arith.constant 0 : i32
    return %c0_i32, %c0_i32_0 : i32, i32
  }
  func.func @transform_5(%arg0: i32) -> (i32, i32) {
    %c0_i32 = arith.constant 0 : i32
    %c0_i32_0 = arith.constant 0 : i32
    %c0_i32_1 = arith.constant 0 : i32
    return %c0_i32, %c0_i32_0 : i32, i32
  }
  func.func @transform_6(%arg0: i32) -> (i32, i32) {
    %c0_i32 = arith.constant 0 : i32
    %c0_i32_0 = arith.constant 0 : i32
    %c0_i32_1 = arith.constant 0 : i32
    return %c0_i32, %c0_i32_0 : i32, i32
  }
  func.func @transform_7(%arg0: i32) -> (i32, i32) {
    %c0_i32 = arith.constant 0 : i32
    %c0_i32_0 = arith.constant 0 : i32
    return %arg0, %c0_i32 : i32, i32
  }
}

</mosaic_0001>

<llo_original>
// kernel: tpu_custom_call.1
$region0: #{tpu_custom_call.1}
  #allocation0 [shape = 'u32[]', space=smem, size = 0x4, offset = 0x4, fixed_abs, tag = 'smem constant byte address 0x4 - core index']
  #allocation1 [shape = 'u32[144,128]{1,0:T(1,128)}', space=vmem, size = 0x12000, scoped, tag = 'internal scratch']
  %s0 = inlined_call_operand.hbm [shape: bf16[16,256], index: 0, kind: input, shape index: {}]
  %s1 = inlined_call_operand.hbm [shape: bf16[256,512], index: 1, kind: input, shape index: {}]
  %s2 = inlined_call_operand.hbm [shape: f32[1,512], index: 2, kind: input, shape index: {}]
  %s3 = inlined_call_operand.hbm [shape: bf16[512,1024], index: 3, kind: input, shape index: {}]
  %s4 = inlined_call_operand.hbm [shape: f32[1,1024], index: 4, kind: input, shape index: {}]
  %s5 = inlined_call_operand.hbm [shape: bf16[1024,512], index: 5, kind: input, shape index: {}]
  %s6 = inlined_call_operand.vmem [shape: f32[1,512], index: 6, kind: input, shape index: {}]
  %s7 = inlined_call_operand.hbm [shape: bf16[16,512], index: 7, kind: output, shape index: {}]
  %s8 = sld [smem:[#allocation0]]
  $region62: #{tpu_custom_call.1} parent=0
    _
  %s10 = ssub.s32 1, %s8
  %s11 = scalar_select 0, %s10, %s8
  $region1: #{tpu_custom_call.1} parent=0
    #allocation2 [shape = 'u8[8192]{0}', space=vmem, size = 0x2000, scoped, tag = 'input window, operand 0, single buffered']
    #allocation3 [shape = 's32[1]{0}', space=sflag, size = 0x4, scoped, tag = 'scoped memory for tpu_custom_call.1']
    #allocation4 [shape = 's32[1]{0}', space=sflag, size = 0x4, scoped, tag = 'scoped memory for tpu_custom_call.1']
    #allocation5 [shape = 'u8[262144]{0}', space=vmem, size = 0x40000, scoped, tag = 'input window, operand 1, single buffered']
    #allocation6 [shape = 's32[1]{0}', space=sflag, size = 0x4, scoped, tag = 'scoped memory for tpu_custom_call.1']
    #allocation7 [shape = 'u8[2048]{0}', space=vmem, size = 0x800, scoped, tag = 'input window, operand 2, single buffered']
    #allocation8 [shape = 'u8[1048576]{0}', space=vmem, size = 0x100000, scoped, tag = 'input window, operand 3, single buffered']
    #allocation9 [shape = 's32[1]{0}', space=sflag, size = 0x4, scoped, tag = 'scoped memory for tpu_custom_call.1']
    #allocation10 [shape = 'u8[4096]{0}', space=vmem, size = 0x1000, scoped, tag = 'input window, operand 4, single buffered']
    #allocation11 [shape = 'u8[1048576]{0}', space=vmem, size = 0x100000, scoped, tag = 'input window, operand 5, single buffered']
    #allocation12 [shape = 's32[1]{0}', space=sflag, size = 0x4, scoped, tag = 'scoped memory for tpu_custom_call.1']
    #allocation13 [shape = 'u8[16384]{0}', space=vmem, size = 0x4000, scoped, tag = 'output window, operand 0, single buffered']
    %12 = vsyncpa [#allocation3], 0
    %13 = vsyncpa [#allocation6], 0
    %14 = vsyncpa [#allocation9], 0
    %15 = vsyncpa [#allocation12], 0
    %16 = vsyncpa [#allocation4], 0
    // Predicated region
    $region2: #{tpu_custom_call.1} parent=1 // pred_check
      _
    $region3: #{tpu_custom_call.1} parent=1 // pred_check_branch
      %18 = sbr.rel (0) target = $region5
    $region4: #{tpu_custom_call.1} parent=1 // pred_region
      %s20 = ssub.s32 256, 256
      %21 = vsyncadd [#allocation3], %s20
      %s22 = sshll.u32 [#allocation2], 4
      %s23 = int_to_ptr.vmem [resolvable:$true] %s22
      %28 = dma.hbm_to_vmem [thread:$0]  %s0, 256, %s23, [#allocation3], 128, 128, 8
    $region5: #{tpu_custom_call.1} parent=1 // pred_fallthru
      _
    // Predicated region
    $region6: #{tpu_custom_call.1} parent=1 // pred_check
      _
    $region7: #{tpu_custom_call.1} parent=1 // pred_check_branch
      %30 = sbr.rel (0) target = $region9
    $region8: #{tpu_custom_call.1} parent=1 // pred_region
      %s32 = ssub.s32 8192, 8192
      %33 = vsyncadd [#allocation6], %s32
      %s34 = sshll.u32 [#allocation5], 4
      %s35 = int_to_ptr.vmem [resolvable:$true] %s34
      %40 = dma.hbm_to_vmem [thread:$0]  %s1, 8192, %s35, [#allocation6], 256, 256, 16
    $region9: #{tpu_custom_call.1} parent=1 // pred_fallthru
      _
    // Predicated region
    $region10: #{tpu_custom_call.1} parent=1 // pred_check
      _
    $region11: #{tpu_custom_call.1} parent=1 // pred_check_branch
      %42 = sbr.rel (0) target = $region13
    $region12: #{tpu_custom_call.1} parent=1 // pred_region
      %s44 = ssub.s32 64, 64
      %45 = vsyncadd [#allocation6], %s44
      %s47 = sshll.u32 [#allocation7], 4
      %s48 = int_to_ptr.vmem [resolvable:$true] %s47
      %50 = dma.hbm_to_vmem [thread:$0]  %s2, 64, %s48, [#allocation6]
    $region13: #{tpu_custom_call.1} parent=1 // pred_fallthru
      _
    // Predicated region
    $region14: #{tpu_custom_call.1} parent=1 // pred_check
      _
    $region15: #{tpu_custom_call.1} parent=1 // pred_check_branch
      %52 = sbr.rel (0) target = $region17
    $region16: #{tpu_custom_call.1} parent=1 // pred_region
      %s54 = ssub.s32 32768, 32768
      %55 = vsyncadd [#allocation9], %s54
      %s56 = sshll.u32 [#allocation8], 4
      %s57 = int_to_ptr.vmem [resolvable:$true] %s56
      %62 = dma.hbm_to_vmem [thread:$0]  %s3, 32768, %s57, [#allocation9], 512, 512, 32
    $region17: #{tpu_custom_call.1} parent=1 // pred_fallthru
      _
    // Predicated region
    $region18: #{tpu_custom_call.1} parent=1 // pred_check
      _
    $region19: #{tpu_custom_call.1} parent=1 // pred_check_branch
      %64 = sbr.rel (0) target = $region21
    $region20: #{tpu_custom_call.1} parent=1 // pred_region
      %s66 = ssub.s32 128, 128
      %67 = vsyncadd [#allocation9], %s66
      %s69 = sshll.u32 [#allocation10], 4
      %s70 = int_to_ptr.vmem [resolvable:$true] %s69
      %72 = dma.hbm_to_vmem [thread:$0]  %s4, 128, %s70, [#allocation9]
    $region21: #{tpu_custom_call.1} parent=1 // pred_fallthru
      _
    // Predicated region
    $region22: #{tpu_custom_call.1} parent=1 // pred_check
      _
    $region23: #{tpu_custom_call.1} parent=1 // pred_check_branch
      %74 = sbr.rel (0) target = $region25
    $region24: #{tpu_custom_call.1} parent=1 // pred_region
      %s76 = ssub.s32 32768, 32768
      %77 = vsyncadd [#allocation12], %s76
      %s78 = sshll.u32 [#allocation11], 4
      %s79 = int_to_ptr.vmem [resolvable:$true] %s78
      %84 = dma.hbm_to_vmem [thread:$0]  %s5, 32768, %s79, [#allocation12], 256, 256, 16
    $region25: #{tpu_custom_call.1} parent=1 // pred_fallthru
      _
    // Predicated region
    $region26: #{tpu_custom_call.1} parent=1 // pred_check
      _
    $region27: #{tpu_custom_call.1} parent=1 // pred_check_branch
      %86 = sbr.rel (0) target = $region29
    $region28: #{tpu_custom_call.1} parent=1 // pred_region
      _
    $region29: #{tpu_custom_call.1} parent=1 // pred_fallthru
      _
    // Predicated region
    $region30: #{tpu_custom_call.1} parent=1 // pred_check
      _
    $region31: #{tpu_custom_call.1} parent=1 // pred_check_branch
      %88 = sbr.rel (0) target = $region33
    $region32: #{tpu_custom_call.1} parent=1 // pred_region
      %89 = dma.done [#allocation3], 256
    $region33: #{tpu_custom_call.1} parent=1 // pred_fallthru
      _
    // Predicated region
    $region34: #{tpu_custom_call.1} parent=1 // pred_check
      _
    $region35: #{tpu_custom_call.1} parent=1 // pred_check_branch
      %91 = sbr.rel (0) target = $region37
    $region36: #{tpu_custom_call.1} parent=1 // pred_region
      %92 = dma.done [#allocation6], 8192
    $region37: #{tpu_custom_call.1} parent=1 // pred_fallthru
      _
    // Predicated region
    $region38: #{tpu_custom_call.1} parent=1 // pred_check
      _
    $region39: #{tpu_custom_call.1} parent=1 // pred_check_branch
      %94 = sbr.rel (0) target = $region41
    $region40: #{tpu_custom_call.1} parent=1 // pred_region
      %95 = dma.done [#allocation6], 64
    $region41: #{tpu_custom_call.1} parent=1 // pred_fallthru
      _
    // Predicated region
    $region42: #{tpu_custom_call.1} parent=1 // pred_check
      _
    $region43: #{tpu_custom_call.1} parent=1 // pred_check_branch
      %97 = sbr.rel (0) target = $region45
    $region44: #{tpu_custom_call.1} parent=1 // pred_region
      %98 = dma.done [#allocation9], 32768
    $region45: #{tpu_custom_call.1} parent=1 // pred_fallthru
      _
    // Predicated region
    $region46: #{tpu_custom_call.1} parent=1 // pred_check
      _
    $region47: #{tpu_custom_call.1} parent=1 // pred_check_branch
      %100 = sbr.rel (0) target = $region49
    $region48: #{tpu_custom_call.1} parent=1 // pred_region
      %101 = dma.done [#allocation9], 128
    $region49: #{tpu_custom_call.1} parent=1 // pred_fallthru
      _
    // Predicated region
    $region50: #{tpu_custom_call.1} parent=1 // pred_check
      _
    $region51: #{tpu_custom_call.1} parent=1 // pred_check_branch
      %103 = sbr.rel (0) target = $region53
    $region52: #{tpu_custom_call.1} parent=1 // pred_region
      %104 = dma.done [#allocation12], 32768
    $region53: #{tpu_custom_call.1} parent=1 // pred_fallthru
      _
    %v105 = vld [vmem:[#allocation2] sm:$0xff]
    %v106 = vld [vmem:[#allocation2 + $0x8] sm:$0xff]
    %v107 = vld [vmem:[#allocation5] sm:$0xff]
    %v108 = vld [vmem:[#allocation5 + $0x8] sm:$0xff]
    %v109 = vld [vmem:[#allocation5 + $0x10] sm:$0xff]
    %v110 = vld [vmem:[#allocation5 + $0x18] sm:$0xff]
    %v111 = vld [vmem:[#allocation5 + $0x20] sm:$0xff]
    %v112 = vld [vmem:[#allocation5 + $0x28] sm:$0xff]
    %v113 = vld [vmem:[#allocation5 + $0x30] sm:$0xff]
    %v114 = vld [vmem:[#allocation5 + $0x38] sm:$0xff]
    %v115 = vld [vmem:[#allocation5 + $0x40] sm:$0xff]
    %v116 = vld [vmem:[#allocation5 + $0x48] sm:$0xff]
    %v117 = vld [vmem:[#allocation5 + $0x50] sm:$0xff]
    %v118 = vld [vmem:[#allocation5 + $0x58] sm:$0xff]
    %v119 = vld [vmem:[#allocation5 + $0x60] sm:$0xff]
    %v120 = vld [vmem:[#allocation5 + $0x68] sm:$0xff]
    %v121 = vld [vmem:[#allocation5 + $0x70] sm:$0xff]
    %v122 = vld [vmem:[#allocation5 + $0x78] sm:$0xff]
    %v123 = vld [vmem:[#allocation5 + $0x80] sm:$0xff]
    %v124 = vld [vmem:[#allocation5 + $0x88] sm:$0xff]
    %v125 = vld [vmem:[#allocation5 + $0x90] sm:$0xff]
    %v126 = vld [vmem:[#allocation5 + $0x98] sm:$0xff]
    %v127 = vld [vmem:[#allocation5 + $0xa0] sm:$0xff]
    %v128 = vld [vmem:[#allocation5 + $0xa8] sm:$0xff]
    %v129 = vld [vmem:[#allocation5 + $0xb0] sm:$0xff]
    %v130 = vld [vmem:[#allocation5 + $0xb8] sm:$0xff]
    %v131 = vld [vmem:[#allocation5 + $0xc0] sm:$0xff]
    %v132 = vld [vmem:[#allocation5 + $0xc8] sm:$0xff]
    %v133 = vld [vmem:[#allocation5 + $0xd0] sm:$0xff]
    %v134 = vld [vmem:[#allocation5 + $0xd8] sm:$0xff]
    %v135 = vld [vmem:[#allocation5 + $0xe0] sm:$0xff]
    %v136 = vld [vmem:[#allocation5 + $0xe8] sm:$0xff]
    %v137 = vld [vmem:[#allocation5 + $0xf0] sm:$0xff]
    %v138 = vld [vmem:[#allocation5 + $0xf8] sm:$0xff]
    %v139 = vld [vmem:[#allocation5 + $0x100] sm:$0xff]
    %v140 = vld [vmem:[#allocation5 + $0x108] sm:$0xff]
    %v141 = vld [vmem:[#allocation5 + $0x110] sm:$0xff]
    %v142 = vld [vmem:[#allocation5 + $0x118] sm:$0xff]
    %v143 = vld [vmem:[#allocation5 + $0x120] sm:$0xff]
    %v144 = vld [vmem:[#allocation5 + $0x128] sm:$0xff]
    %v145 = vld [vmem:[#allocation5 + $0x130] sm:$0xff]
    %v146 = vld [vmem:[#allocation5 + $0x138] sm:$0xff]
    %v147 = vld [vmem:[#allocation5 + $0x140] sm:$0xff]
    %v148 = vld [vmem:[#allocation5 + $0x148] sm:$0xff]
    %v149 = vld [vmem:[#allocation5 + $0x150] sm:$0xff]
    %v150 = vld [vmem:[#allocation5 + $0x158] sm:$0xff]
    %v151 = vld [vmem:[#allocation5 + $0x160] sm:$0xff]
    %v152 = vld [vmem:[#allocation5 + $0x168] sm:$0xff]
    %v153 = vld [vmem:[#allocation5 + $0x170] sm:$0xff]
    %v154 = vld [vmem:[#allocation5 + $0x178] sm:$0xff]
    %v155 = vld [vmem:[#allocation5 + $0x180] sm:$0xff]
    %v156 = vld [vmem:[#allocation5 + $0x188] sm:$0xff]
    %v157 = vld [vmem:[#allocation5 + $0x190] sm:$0xff]
    %v158 = vld [vmem:[#allocation5 + $0x198] sm:$0xff]
    %v159 = vld [vmem:[#allocation5 + $0x1a0] sm:$0xff]
    %v160 = vld [vmem:[#allocation5 + $0x1a8] sm:$0xff]
    %v161 = vld [vmem:[#allocation5 + $0x1b0] sm:$0xff]
    %v162 = vld [vmem:[#allocation5 + $0x1b8] sm:$0xff]
    %v163 = vld [vmem:[#allocation5 + $0x1c0] sm:$0xff]
    %v164 = vld [vmem:[#allocation5 + $0x1c8] sm:$0xff]
    %v165 = vld [vmem:[#allocation5 + $0x1d0] sm:$0xff]
    %v166 = vld [vmem:[#allocation5 + $0x1d8] sm:$0xff]
    %v167 = vld [vmem:[#allocation5 + $0x1e0] sm:$0xff]
    %v168 = vld [vmem:[#allocation5 + $0x1e8] sm:$0xff]
    %v169 = vld [vmem:[#allocation5 + $0x1f0] sm:$0xff]
    %v170 = vld [vmem:[#allocation5 + $0x1f8] sm:$0xff]
    %v171 = vld [vmem:[#allocation7] sm:$0xf]
    %v173 = vlaneseq
    %v174 = vshrl.u32 %v173, 7
    %v175 = vsub.s32 0, %v174
    %v176 = vrot.slane %v171, %v175
    %v177 = vlaneseq
    %v178 = vshrl.u32 %v177, 7
    %v179 = vsub.s32 1, %v178
    %v180 = vrot.slane %v171, %v179
    %v181 = vlaneseq
    %v182 = vshrl.u32 %v181, 7
    %v183 = vsub.s32 2, %v182
    %v184 = vrot.slane %v171, %v183
    %v185 = vlaneseq
    %v186 = vshrl.u32 %v185, 7
    %v187 = vsub.s32 3, %v186
    %v188 = vrot.slane %v171, %v187
    %v195 = vunpack.c.l.b16 %v105
    %v196 = vunpack.c.h.b16 %v105
    %v197 = vunpack.c.l.b16 %v106
    %v198 = vunpack.c.h.b16 %v106
    %v199 = vpack.c.b16 %v197, %v195
    %v200 = vpack.c.b16 %v198, %v196
    %v267 = vunpack.c.l.b16 %v107
    %v268 = vunpack.c.h.b16 %v107
    %v269 = vunpack.c.l.b16 %v108
    %v270 = vunpack.c.h.b16 %v108
    %v271 = vunpack.c.l.b16 %v109
    %v272 = vunpack.c.h.b16 %v109
    %v273 = vunpack.c.l.b16 %v110
    %v274 = vunpack.c.h.b16 %v110
    %v275 = vunpack.c.l.b16 %v111
    %v276 = vunpack.c.h.b16 %v111
    %v277 = vunpack.c.l.b16 %v112
    %v278 = vunpack.c.h.b16 %v112
    %v279 = vunpack.c.l.b16 %v113
    %v280 = vunpack.c.h.b16 %v113
    %v281 = vunpack.c.l.b16 %v114
    %v282 = vunpack.c.h.b16 %v114
    %v283 = vunpack.c.l.b16 %v115
    %v284 = vunpack.c.h.b16 %v115
    %v285 = vunpack.c.l.b16 %v116
    %v286 = vunpack.c.h.b16 %v116
    %v287 = vunpack.c.l.b16 %v117
    %v288 = vunpack.c.h.b16 %v117
    %v289 = vunpack.c.l.b16 %v118
    %v290 = vunpack.c.h.b16 %v118
    %v291 = vunpack.c.l.b16 %v119
    %v292 = vunpack.c.h.b16 %v119
    %v293 = vunpack.c.l.b16 %v120
    %v294 = vunpack.c.h.b16 %v120
    %v295 = vunpack.c.l.b16 %v121
    %v296 = vunpack.c.h.b16 %v121
    %v297 = vunpack.c.l.b16 %v122
    %v298 = vunpack.c.h.b16 %v122
    %v299 = vunpack.c.l.b16 %v123
    %v300 = vunpack.c.h.b16 %v123
    %v301 = vunpack.c.l.b16 %v124
    %v302 = vunpack.c.h.b16 %v124
    %v303 = vunpack.c.l.b16 %v125
    %v304 = vunpack.c.h.b16 %v125
    %v305 = vunpack.c.l.b16 %v126
    %v306 = vunpack.c.h.b16 %v126
    %v307 = vunpack.c.l.b16 %v127
    %v308 = vunpack.c.h.b16 %v127
    %v309 = vunpack.c.l.b16 %v128
    %v310 = vunpack.c.h.b16 %v128
    %v311 = vunpack.c.l.b16 %v129
    %v312 = vunpack.c.h.b16 %v129
    %v313 = vunpack.c.l.b16 %v130
    %v314 = vunpack.c.h.b16 %v130
    %v315 = vunpack.c.l.b16 %v131
    %v316 = vunpack.c.h.b16 %v131
    %v317 = vunpack.c.l.b16 %v132
    %v318 = vunpack.c.h.b16 %v132
    %v319 = vunpack.c.l.b16 %v133
    %v320 = vunpack.c.h.b16 %v133
    %v321 = vunpack.c.l.b16 %v134
    %v322 = vunpack.c.h.b16 %v134
    %v323 = vunpack.c.l.b16 %v135
    %v324 = vunpack.c.h.b16 %v135
    %v325 = vunpack.c.l.b16 %v136
    %v326 = vunpack.c.h.b16 %v136
    %v327 = vunpack.c.l.b16 %v137
    %v328 = vunpack.c.h.b16 %v137
    %v329 = vunpack.c.l.b16 %v138
    %v330 = vunpack.c.h.b16 %v138
    %v331 = vunpack.c.l.b16 %v139
    %v332 = vunpack.c.h.b16 %v139
    %v333 = vunpack.c.l.b16 %v140
    %v334 = vunpack.c.h.b16 %v140
    %v335 = vunpack.c.l.b16 %v141
    %v336 = vunpack.c.h.b16 %v141
    %v337 = vunpack.c.l.b16 %v142
    %v338 = vunpack.c.h.b16 %v142
    %v339 = vunpack.c.l.b16 %v143
    %v340 = vunpack.c.h.b16 %v143
    %v341 = vunpack.c.l.b16 %v144
    %v342 = vunpack.c.h.b16 %v144
    %v343 = vunpack.c.l.b16 %v145
    %v344 = vunpack.c.h.b16 %v145
    %v345 = vunpack.c.l.b16 %v146
    %v346 = vunpack.c.h.b16 %v146
    %v347 = vunpack.c.l.b16 %v147
    %v348 = vunpack.c.h.b16 %v147
    %v349 = vunpack.c.l.b16 %v148
    %v350 = vunpack.c.h.b16 %v148
    %v351 = vunpack.c.l.b16 %v149
    %v352 = vunpack.c.h.b16 %v149
    %v353 = vunpack.c.l.b16 %v150
    %v354 = vunpack.c.h.b16 %v150
    %v355 = vunpack.c.l.b16 %v151
    %v356 = vunpack.c.h.b16 %v151
    %v357 = vunpack.c.l.b16 %v152
    %v358 = vunpack.c.h.b16 %v152
    %v359 = vunpack.c.l.b16 %v153
    %v360 = vunpack.c.h.b16 %v153
    %v361 = vunpack.c.l.b16 %v154
    %v362 = vunpack.c.h.b16 %v154
    %v363 = vunpack.c.l.b16 %v155
    %v364 = vunpack.c.h.b16 %v155
    %v365 = vunpack.c.l.b16 %v156
    %v366 = vunpack.c.h.b16 %v156
    %v367 = vunpack.c.l.b16 %v157
    %v368 = vunpack.c.h.b16 %v157
    %v369 = vunpack.c.l.b16 %v158
    %v370 = vunpack.c.h.b16 %v158
    %v371 = vunpack.c.l.b16 %v159
    %v372 = vunpack.c.h.b16 %v159
    %v373 = vunpack.c.l.b16 %v160
    %v374 = vunpack.c.h.b16 %v160
    %v375 = vunpack.c.l.b16 %v161
    %v376 = vunpack.c.h.b16 %v161
    %v377 = vunpack.c.l.b16 %v162
    %v378 = vunpack.c.h.b16 %v162
    %v379 = vunpack.c.l.b16 %v163
    %v380 = vunpack.c.h.b16 %v163
    %v381 = vunpack.c.l.b16 %v164
    %v382 = vunpack.c.h.b16 %v164
    %v383 = vunpack.c.l.b16 %v165
    %v384 = vunpack.c.h.b16 %v165
    %v385 = vunpack.c.l.b16 %v166
    %v386 = vunpack.c.h.b16 %v166
    %v387 = vunpack.c.l.b16 %v167
    %v388 = vunpack.c.h.b16 %v167
    %v389 = vunpack.c.l.b16 %v168
    %v390 = vunpack.c.h.b16 %v168
    %v391 = vunpack.c.l.b16 %v169
    %v392 = vunpack.c.h.b16 %v169
    %v393 = vunpack.c.l.b16 %v170
    %v394 = vunpack.c.h.b16 %v170
    %v395 = vpack.c.b16 %v271, %v267
    %v396 = vpack.c.b16 %v272, %v268
    %v397 = vpack.c.b16 %v273, %v269
    %v398 = vpack.c.b16 %v274, %v270
    %v399 = vpack.c.b16 %v279, %v275
    %v400 = vpack.c.b16 %v280, %v276
    %v401 = vpack.c.b16 %v281, %v277
    %v402 = vpack.c.b16 %v282, %v278
    %v403 = vpack.c.b16 %v287, %v283
    %v404 = vpack.c.b16 %v288, %v284
    %v405 = vpack.c.b16 %v289, %v285
    %v406 = vpack.c.b16 %v290, %v286
    %v407 = vpack.c.b16 %v295, %v291
    %v408 = vpack.c.b16 %v296, %v292
    %v409 = vpack.c.b16 %v297, %v293
    %v410 = vpack.c.b16 %v298, %v294
    %v411 = vpack.c.b16 %v303, %v299
    %v412 = vpack.c.b16 %v304, %v300
    %v413 = vpack.c.b16 %v305, %v301
    %v414 = vpack.c.b16 %v306, %v302
    %v415 = vpack.c.b16 %v311, %v307
    %v416 = vpack.c.b16 %v312, %v308
    %v417 = vpack.c.b16 %v313, %v309
    %v418 = vpack.c.b16 %v314, %v310
    %v419 = vpack.c.b16 %v319, %v315
    %v420 = vpack.c.b16 %v320, %v316
    %v421 = vpack.c.b16 %v321, %v317
    %v422 = vpack.c.b16 %v322, %v318
    %v423 = vpack.c.b16 %v327, %v323
    %v424 = vpack.c.b16 %v328, %v324
    %v425 = vpack.c.b16 %v329, %v325
    %v426 = vpack.c.b16 %v330, %v326
    %v427 = vpack.c.b16 %v335, %v331
    %v428 = vpack.c.b16 %v336, %v332
    %v429 = vpack.c.b16 %v337, %v333
    %v430 = vpack.c.b16 %v338, %v334
    %v431 = vpack.c.b16 %v343, %v339
    %v432 = vpack.c.b16 %v344, %v340
    %v433 = vpack.c.b16 %v345, %v341
    %v434 = vpack.c.b16 %v346, %v342
    %v435 = vpack.c.b16 %v351, %v347
    %v436 = vpack.c.b16 %v352, %v348
    %v437 = vpack.c.b16 %v353, %v349
    %v438 = vpack.c.b16 %v354, %v350
    %v439 = vpack.c.b16 %v359, %v355
    %v440 = vpack.c.b16 %v360, %v356
    %v441 = vpack.c.b16 %v361, %v357
    %v442 = vpack.c.b16 %v362, %v358
    %v443 = vpack.c.b16 %v367, %v363
    %v444 = vpack.c.b16 %v368, %v364
    %v445 = vpack.c.b16 %v369, %v365
    %v446 = vpack.c.b16 %v370, %v366
    %v447 = vpack.c.b16 %v375, %v371
    %v448 = vpack.c.b16 %v376, %v372
    %v449 = vpack.c.b16 %v377, %v373
    %v450 = vpack.c.b16 %v378, %v374
    %v451 = vpack.c.b16 %v383, %v379
    %v452 = vpack.c.b16 %v384, %v380
    %v453 = vpack.c.b16 %v385, %v381
    %v454 = vpack.c.b16 %v386, %v382
    %v455 = vpack.c.b16 %v391, %v387
    %v456 = vpack.c.b16 %v392, %v388
    %v457 = vpack.c.b16 %v393, %v389
    %v458 = vpack.c.b16 %v394, %v390
    %523 = vmatprep.subr.bf16.mxu0 %v424
    %524 = vmatpush1.bf16.msra.mxu0 %v423
    %525 = vmatprep.subr.bf16.mxu0 %v420
    %526 = vmatpush1.bf16.msra.mxu0 %v419
    %527 = vmatprep.subr.bf16.mxu0 %v416
    %528 = vmatpush1.bf16.msra.mxu0 %v415
    %529 = vmatprep.subr.bf16.mxu0 %v412
    %530 = vmatpush1.bf16.msra.mxu0 %v411
    %531 = vmatprep.subr.bf16.mxu0 %v408
    %532 = vmatpush1.bf16.msra.mxu0 %v407
    %533 = vmatprep.subr.bf16.mxu0 %v404
    %534 = vmatpush1.bf16.msra.mxu0 %v403
    %535 = vmatprep.subr.bf16.mxu0 %v400
    %536 = vmatpush1.bf16.msra.mxu0 %v399
    %537 = vmatprep.subr.bf16.mxu0 %v396
    %538 = vmatpush1.bf16.msra.mxu0 %v395
    %539 = vmatprep.subr.bf16.mxu0 %v456
    %540 = vmatpush2.bf16.msra.mxu0 %v455
    %541 = vmatprep.subr.bf16.mxu0 %v452
    %542 = vmatpush2.bf16.msra.mxu0 %v451
    %543 = vmatprep.subr.bf16.mxu0 %v448
    %544 = vmatpush2.bf16.msra.mxu0 %v447
    %545 = vmatprep.subr.bf16.mxu0 %v444
    %546 = vmatpush2.bf16.msra.mxu0 %v443
    %547 = vmatprep.subr.bf16.mxu0 %v440
    %548 = vmatpush2.bf16.msra.mxu0 %v439
    %549 = vmatprep.subr.bf16.mxu0 %v436
    %550 = vmatpush2.bf16.msra.mxu0 %v435
    %551 = vmatprep.subr.bf16.mxu0 %v432
    %552 = vmatpush2.bf16.msra.mxu0 %v431
    %553 = vmatprep.subr.bf16.mxu0 %v428
    %554 = vmatpush2.bf16.msra.mxu0 %v427
    %555 = vmatprep.mubr.bf16.mxu0 %v200
    %556 = vmatmul.mubr.bf16.gmra.mxu0 %v199
    %v557 = vpop.f32.mrf.mxu0
    %v558 = vadd.f32 %v176, %v557
    %v559 = vpop.f32.mrf.mxu0
    %v560 = vadd.f32 %v180, %v559
    %v561 = vpop.f32.mrf.mxu0
    %v562 = vadd.f32 %v176, %v561
    %v563 = vpop.f32.mrf.mxu0
    %v564 = vadd.f32 %v180, %v563
    %565 = vdwg.mxu0
    %566 = vmatprep.subr.bf16.mxu0 %v426
    %567 = vmatpush1.bf16.msra.mxu0 %v425
    %568 = vmatprep.subr.bf16.mxu0 %v422
    %569 = vmatpush1.bf16.msra.mxu0 %v421
    %570 = vmatprep.subr.bf16.mxu0 %v418
    %571 = vmatpush1.bf16.msra.mxu0 %v417
    %572 = vmatprep.subr.bf16.mxu0 %v414
    %573 = vmatpush1.bf16.msra.mxu0 %v413
    %574 = vmatprep.subr.bf16.mxu0 %v410
    %575 = vmatpush1.bf16.msra.mxu0 %v409
    %576 = vmatprep.subr.bf16.mxu0 %v406
    %577 = vmatpush1.bf16.msra.mxu0 %v405
    %578 = vmatprep.subr.bf16.mxu0 %v402
    %579 = vmatpush1.bf16.msra.mxu0 %v401
    %580 = vmatprep.subr.bf16.mxu0 %v398
    %581 = vmatpush1.bf16.msra.mxu0 %v397
    %582 = vmatprep.subr.bf16.mxu0 %v458
    %583 = vmatpush2.bf16.msra.mxu0 %v457
    %584 = vmatprep.subr.bf16.mxu0 %v454
    %585 = vmatpush2.bf16.msra.mxu0 %v453
    %586 = vmatprep.subr.bf16.mxu0 %v450
    %587 = vmatpush2.bf16.msra.mxu0 %v449
    %588 = vmatprep.subr.bf16.mxu0 %v446
    %589 = vmatpush2.bf16.msra.mxu0 %v445
    %590 = vmatprep.subr.bf16.mxu0 %v442
    %591 = vmatpush2.bf16.msra.mxu0 %v441
    %592 = vmatprep.subr.bf16.mxu0 %v438
    %593 = vmatpush2.bf16.msra.mxu0 %v437
    %594 = vmatprep.subr.bf16.mxu0 %v434
    %595 = vmatpush2.bf16.msra.mxu0 %v433
    %596 = vmatprep.subr.bf16.mxu0 %v430
    %597 = vmatpush2.bf16.msra.mxu0 %v429
    %598 = vmatprep.mubr.bf16.mxu0 %v200
    %599 = vmatmul.mubr.bf16.gmra.mxu0 %v199
    %v600 = vpop.f32.mrf.mxu0
    %v601 = vadd.f32 %v184, %v600
    %v602 = vpop.f32.mrf.mxu0
    %v603 = vadd.f32 %v188, %v602
    %v604 = vpop.f32.mrf.mxu0
    %v605 = vadd.f32 %v184, %v604
    %v606 = vpop.f32.mrf.mxu0
    %v607 = vadd.f32 %v188, %v606
    %608 = vdwg.mxu0
    %v609 = vmax.f32 %v558, 0.0
    %v610 = vmax.f32 %v560, 0.0
    %v611 = vmax.f32 %v601, 0.0
    %v612 = vmax.f32 %v603, 0.0
    %v613 = vmax.f32 %v562, 0.0
    %v614 = vmax.f32 %v564, 0.0
    %v615 = vmax.f32 %v605, 0.0
    %v616 = vmax.f32 %v607, 0.0
    %v617 = vpack.c.bf16 %v613, %v609
    %v618 = vpack.c.bf16 %v614, %v610
    %v619 = vpack.c.bf16 %v615, %v611
    %v620 = vpack.c.bf16 %v616, %v612
    %v621 = vld [vmem:[#allocation8] sm:$0xff]
    %v622 = vld [vmem:[#allocation8 + $0x8] sm:$0xff]
    %v623 = vld [vmem:[#allocation8 + $0x10] sm:$0xff]
    %v624 = vld [vmem:[#allocation8 + $0x18] sm:$0xff]
    %v625 = vld [vmem:[#allocation8 + $0x20] sm:$0xff]
    %v626 = vld [vmem:[#allocation8 + $0x28] sm:$0xff]
    %v627 = vld [vmem:[#allocation8 + $0x30] sm:$0xff]
    %v628 = vld [vmem:[#allocation8 + $0x38] sm:$0xff]
    %v629 = vld [vmem:[#allocation8 + $0x40] sm:$0xff]
    %v630 = vld [vmem:[#allocation8 + $0x48] sm:$0xff]
    %v631 = vld [vmem:[#allocation8 + $0x50] sm:$0xff]
    %v632 = vld [vmem:[#allocation8 + $0x58] sm:$0xff]
    %v633 = vld [vmem:[#allocation8 + $0x60] sm:$0xff]
    %v634 = vld [vmem:[#allocation8 + $0x68] sm:$0xff]
    %v635 = vld [vmem:[#allocation8 + $0x70] sm:$0xff]
    %v636 = vld [vmem:[#allocation8 + $0x78] sm:$0xff]
    %v637 = vld [vmem:[#allocation8 + $0x80] sm:$0xff]
    %v638 = vld [vmem:[#allocation8 + $0x88] sm:$0xff]
    %v639 = vld [vmem:[#allocation8 + $0x90] sm:$0xff]
    %v640 = vld [vmem:[#allocation8 + $0x98] sm:$0xff]
    %v641 = vld [vmem:[#allocation8 + $0xa0] sm:$0xff]
    %v642 = vld [vmem:[#allocation8 + $0xa8] sm:$0xff]
    %v643 = vld [vmem:[#allocation8 + $0xb0] sm:$0xff]
    %v644 = vld [vmem:[#allocation8 + $0xb8] sm:$0xff]
    %v645 = vld [vmem:[#allocation8 + $0xc0] sm:$0xff]
    %v646 = vld [vmem:[#allocation8 + $0xc8] sm:$0xff]
    %v647 = vld [vmem:[#allocation8 + $0xd0] sm:$0xff]
    %v648 = vld [vmem:[#allocation8 + $0xd8] sm:$0xff]
    %v649 = vld [vmem:[#allocation8 + $0xe0] sm:$0xff]
    %v650 = vld [vmem:[#allocation8 + $0xe8] sm:$0xff]
    %v651 = vld [vmem:[#allocation8 + $0xf0] sm:$0xff]
    %v652 = vld [vmem:[#allocation8 + $0xf8] sm:$0xff]
    %v653 = vld [vmem:[#allocation8 + $0x100] sm:$0xff]
    %v654 = vld [vmem:[#allocation8 + $0x108] sm:$0xff]
    %v655 = vld [vmem:[#allocation8 + $0x110] sm:$0xff]
    %v656 = vld [vmem:[#allocation8 + $0x118] sm:$0xff]
    %v657 = vld [vmem:[#allocation8 + $0x120] sm:$0xff]
    %v658 = vld [vmem:[#allocation8 + $0x128] sm:$0xff]
    %v659 = vld [vmem:[#allocation8 + $0x130] sm:$0xff]
    %v660 = vld [vmem:[#allocation8 + $0x138] sm:$0xff]
    %v661 = vld [vmem:[#allocation8 + $0x140] sm:$0xff]
    %v662 = vld [vmem:[#allocation8 + $0x148] sm:$0xff]
    %v663 = vld [vmem:[#allocation8 + $0x150] sm:$0xff]
    %v664 = vld [vmem:[#allocation8 + $0x158] sm:$0xff]
    %v665 = vld [vmem:[#allocation8 + $0x160] sm:$0xff]
    %v666 = vld [vmem:[#allocation8 + $0x168] sm:$0xff]
    %v667 = vld [vmem:[#allocation8 + $0x170] sm:$0xff]
    %v668 = vld [vmem:[#allocation8 + $0x178] sm:$0xff]
    %v669 = vld [vmem:[#allocation8 + $0x180] sm:$0xff]
    %v670 = vld [vmem:[#allocation8 + $0x188] sm:$0xff]
    %v671 = vld [vmem:[#allocation8 + $0x190] sm:$0xff]
    %v672 = vld [vmem:[#allocation8 + $0x198] sm:$0xff]
    %v673 = vld [vmem:[#allocation8 + $0x1a0] sm:$0xff]
    %v674 = vld [vmem:[#allocation8 + $0x1a8] sm:$0xff]
    %v675 = vld [vmem:[#allocation8 + $0x1b0] sm:$0xff]
    %v676 = vld [vmem:[#allocation8 + $0x1b8] sm:$0xff]
    %v677 = vld [vmem:[#allocation8 + $0x1c0] sm:$0xff]
    %v678 = vld [vmem:[#allocation8 + $0x1c8] sm:$0xff]
    %v679 = vld [vmem:[#allocation8 + $0x1d0] sm:$0xff]
    %v680 = vld [vmem:[#allocation8 + $0x1d8] sm:$0xff]
    %v681 = vld [vmem:[#allocation8 + $0x1e0] sm:$0xff]
    %v682 = vld [vmem:[#allocation8 + $0x1e8] sm:$0xff]
    %v683 = vld [vmem:[#allocation8 + $0x1f0] sm:$0xff]
    %v684 = vld [vmem:[#allocation8 + $0x1f8] sm:$0xff]
    %v685 = vld [vmem:[#allocation8 + $0x200] sm:$0xff]
    %v686 = vld [vmem:[#allocation8 + $0x208] sm:$0xff]
    %v687 = vld [vmem:[#allocation8 + $0x210] sm:$0xff]
    %v688 = vld [vmem:[#allocation8 + $0x218] sm:$0xff]
    %v689 = vld [vmem:[#allocation8 + $0x220] sm:$0xff]
    %v690 = vld [vmem:[#allocation8 + $0x228] sm:$0xff]
    %v691 = vld [vmem:[#allocation8 + $0x230] sm:$0xff]
    %v692 = vld [vmem:[#allocation8 + $0x238] sm:$0xff]
    %v693 = vld [vmem:[#allocation8 + $0x240] sm:$0xff]
    %v694 = vld [vmem:[#allocation8 + $0x248] sm:$0xff]
    %v695 = vld [vmem:[#allocation8 + $0x250] sm:$0xff]
    %v696 = vld [vmem:[#allocation8 + $0x258] sm:$0xff]
    %v697 = vld [vmem:[#allocation8 + $0x260] sm:$0xff]
    %v698 = vld [vmem:[#allocation8 + $0x268] sm:$0xff]
    %v699 = vld [vmem:[#allocation8 + $0x270] sm:$0xff]
    %v700 = vld [vmem:[#allocation8 + $0x278] sm:$0xff]
    %v701 = vld [vmem:[#allocation8 + $0x280] sm:$0xff]
    %v702 = vld [vmem:[#allocation8 + $0x288] sm:$0xff]
    %v703 = vld [vmem:[#allocation8 + $0x290] sm:$0xff]
    %v704 = vld [vmem:[#allocation8 + $0x298] sm:$0xff]
    %v705 = vld [vmem:[#allocation8 + $0x2a0] sm:$0xff]
    %v706 = vld [vmem:[#allocation8 + $0x2a8] sm:$0xff]
    %v707 = vld [vmem:[#allocation8 + $0x2b0] sm:$0xff]
    %v708 = vld [vmem:[#allocation8 + $0x2b8] sm:$0xff]
    %v709 = vld [vmem:[#allocation8 + $0x2c0] sm:$0xff]
    %v710 = vld [vmem:[#allocation8 + $0x2c8] sm:$0xff]
    %v711 = vld [vmem:[#allocation8 + $0x2d0] sm:$0xff]
    %v712 = vld [vmem:[#allocation8 + $0x2d8] sm:$0xff]
    %v713 = vld [vmem:[#allocation8 + $0x2e0] sm:$0xff]
    %v714 = vld [vmem:[#allocation8 + $0x2e8] sm:$0xff]
    %v715 = vld [vmem:[#allocation8 + $0x2f0] sm:$0xff]
    %v716 = vld [vmem:[#allocation8 + $0x2f8] sm:$0xff]
    %v717 = vld [vmem:[#allocation8 + $0x300] sm:$0xff]
    %v718 = vld [vmem:[#allocation8 + $0x308] sm:$0xff]
    %v719 = vld [vmem:[#allocation8 + $0x310] sm:$0xff]
    %v720 = vld [vmem:[#allocation8 + $0x318] sm:$0xff]
    %v721 = vld [vmem:[#allocation8 + $0x320] sm:$0xff]
    %v722 = vld [vmem:[#allocation8 + $0x328] sm:$0xff]
    %v723 = vld [vmem:[#allocation8 + $0x330] sm:$0xff]
    %v724 = vld [vmem:[#allocation8 + $0x338] sm:$0xff]
    %v725 = vld [vmem:[#allocation8 + $0x340] sm:$0xff]
    %v726 = vld [vmem:[#allocation8 + $0x348] sm:$0xff]
    %v727 = vld [vmem:[#allocation8 + $0x350] sm:$0xff]
    %v728 = vld [vmem:[#allocation8 + $0x358] sm:$0xff]
    %v729 = vld [vmem:[#allocation8 + $0x360] sm:$0xff]
    %v730 = vld [vmem:[#allocation8 + $0x368] sm:$0xff]
    %v731 = vld [vmem:[#allocation8 + $0x370] sm:$0xff]
    %v732 = vld [vmem:[#allocation8 + $0x378] sm:$0xff]
    %v733 = vld [vmem:[#allocation8 + $0x380] sm:$0xff]
    %v734 = vld [vmem:[#allocation8 + $0x388] sm:$0xff]
    %v735 = vld [vmem:[#allocation8 + $0x390] sm:$0xff]
    %v736 = vld [vmem:[#allocation8 + $0x398] sm:$0xff]
    %v737 = vld [vmem:[#allocation8 + $0x3a0] sm:$0xff]
    %v738 = vld [vmem:[#allocation8 + $0x3a8] sm:$0xff]
    %v739 = vld [vmem:[#allocation8 + $0x3b0] sm:$0xff]
    %v740 = vld [vmem:[#allocation8 + $0x3b8] sm:$0xff]
    %v741 = vld [vmem:[#allocation8 + $0x3c0] sm:$0xff]
    %v742 = vld [vmem:[#allocation8 + $0x3c8] sm:$0xff]
    %v743 = vld [vmem:[#allocation8 + $0x3d0] sm:$0xff]
    %v744 = vld [vmem:[#allocation8 + $0x3d8] sm:$0xff]
    %v745 = vld [vmem:[#allocation8 + $0x3e0] sm:$0xff]
    %v746 = vld [vmem:[#allocation8 + $0x3e8] sm:$0xff]
    %v747 = vld [vmem:[#allocation8 + $0x3f0] sm:$0xff]
    %v748 = vld [vmem:[#allocation8 + $0x3f8] sm:$0xff]
    %v749 = vld [vmem:[#allocation8 + $0x400] sm:$0xff]
    %v750 = vld [vmem:[#allocation8 + $0x408] sm:$0xff]
    %v751 = vld [vmem:[#allocation8 + $0x410] sm:$0xff]
    %v752 = vld [vmem:[#allocation8 + $0x418] sm:$0xff]
    %v753 = vld [vmem:[#allocation8 + $0x420] sm:$0xff]
    %v754 = vld [vmem:[#allocation8 + $0x428] sm:$0xff]
    %v755 = vld [vmem:[#allocation8 + $0x430] sm:$0xff]
    %v756 = vld [vmem:[#allocation8 + $0x438] sm:$0xff]
    %v757 = vld [vmem:[#allocation8 + $0x440] sm:$0xff]
    %v758 = vld [vmem:[#allocation8 + $0x448] sm:$0xff]
    %v759 = vld [vmem:[#allocation8 + $0x450] sm:$0xff]
    %v760 = vld [vmem:[#allocation8 + $0x458] sm:$0xff]
    %v761 = vld [vmem:[#allocation8 + $0x460] sm:$0xff]
    %v762 = vld [vmem:[#allocation8 + $0x468] sm:$0xff]
    %v763 = vld [vmem:[#allocation8 + $0x470] sm:$0xff]
    %v764 = vld [vmem:[#allocation8 + $0x478] sm:$0xff]
    %v765 = vld [vmem:[#allocation8 + $0x480] sm:$0xff]
    %v766 = vld [vmem:[#allocation8 + $0x488] sm:$0xff]
    %v767 = vld [vmem:[#allocation8 + $0x490] sm:$0xff]
    %v768 = vld [vmem:[#allocation8 + $0x498] sm:$0xff]
    %v769 = vld [vmem:[#allocation8 + $0x4a0] sm:$0xff]
    %v770 = vld [vmem:[#allocation8 + $0x4a8] sm:$0xff]
    %v771 = vld [vmem:[#allocation8 + $0x4b0] sm:$0xff]
    %v772 = vld [vmem:[#allocation8 + $0x4b8] sm:$0xff]
    %v773 = vld [vmem:[#allocation8 + $0x4c0] sm:$0xff]
    %v774 = vld [vmem:[#allocation8 + $0x4c8] sm:$0xff]
    %v775 = vld [vmem:[#allocation8 + $0x4d0] sm:$0xff]
    %v776 = vld [vmem:[#allocation8 + $0x4d8] sm:$0xff]
    %v777 = vld [vmem:[#allocation8 + $0x4e0] sm:$0xff]
    %v778 = vld [vmem:[#allocation8 + $0x4e8] sm:$0xff]
    %v779 = vld [vmem:[#allocation8 + $0x4f0] sm:$0xff]
    %v780 = vld [vmem:[#allocation8 + $0x4f8] sm:$0xff]
    %v781 = vld [vmem:[#allocation8 + $0x500] sm:$0xff]
    %v782 = vld [vmem:[#allocation8 + $0x508] sm:$0xff]
    %v783 = vld [vmem:[#allocation8 + $0x510] sm:$0xff]
    %v784 = vld [vmem:[#allocation8 + $0x518] sm:$0xff]
    %v785 = vld [vmem:[#allocation8 + $0x520] sm:$0xff]
    %v786 = vld [vmem:[#allocation8 + $0x528] sm:$0xff]
    %v787 = vld [vmem:[#allocation8 + $0x530] sm:$0xff]
    %v788 = vld [vmem:[#allocation8 + $0x538] sm:$0xff]
    %v789 = vld [vmem:[#allocation8 + $0x540] sm:$0xff]
    %v790 = vld [vmem:[#allocation8 + $0x548] sm:$0xff]
    %v791 = vld [vmem:[#allocation8 + $0x550] sm:$0xff]
    %v792 = vld [vmem:[#allocation8 + $0x558] sm:$0xff]
    %v793 = vld [vmem:[#allocation8 + $0x560] sm:$0xff]
    %v794 = vld [vmem:[#allocation8 + $0x568] sm:$0xff]
    %v795 = vld [vmem:[#allocation8 + $0x570] sm:$0xff]
    %v796 = vld [vmem:[#allocation8 + $0x578] sm:$0xff]
    %v797 = vld [vmem:[#allocation8 + $0x580] sm:$0xff]
    %v798 = vld [vmem:[#allocation8 + $0x588] sm:$0xff]
    %v799 = vld [vmem:[#allocation8 + $0x590] sm:$0xff]
    %v800 = vld [vmem:[#allocation8 + $0x598] sm:$0xff]
    %v801 = vld [vmem:[#allocation8 + $0x5a0] sm:$0xff]
    %v802 = vld [vmem:[#allocation8 + $0x5a8] sm:$0xff]
    %v803 = vld [vmem:[#allocation8 + $0x5b0] sm:$0xff]
    %v804 = vld [vmem:[#allocation8 + $0x5b8] sm:$0xff]
    %v805 = vld [vmem:[#allocation8 + $0x5c0] sm:$0xff]
    %v806 = vld [vmem:[#allocation8 + $0x5c8] sm:$0xff]
    %v807 = vld [vmem:[#allocation8 + $0x5d0] sm:$0xff]
    %v808 = vld [vmem:[#allocation8 + $0x5d8] sm:$0xff]
    %v809 = vld [vmem:[#allocation8 + $0x5e0] sm:$0xff]
    %v810 = vld [vmem:[#allocation8 + $0x5e8] sm:$0xff]
    %v811 = vld [vmem:[#allocation8 + $0x5f0] sm:$0xff]
    %v812 = vld [vmem:[#allocation8 + $0x5f8] sm:$0xff]
    %v813 = vld [vmem:[#allocation8 + $0x600] sm:$0xff]
    %v814 = vld [vmem:[#allocation8 + $0x608] sm:$0xff]
    %v815 = vld [vmem:[#allocation8 + $0x610] sm:$0xff]
    %v816 = vld [vmem:[#allocation8 + $0x618] sm:$0xff]
    %v817 = vld [vmem:[#allocation8 + $0x620] sm:$0xff]
    %v818 = vld [vmem:[#allocation8 + $0x628] sm:$0xff]
    %v819 = vld [vmem:[#allocation8 + $0x630] sm:$0xff]
    %v820 = vld [vmem:[#allocation8 + $0x638] sm:$0xff]
    %v821 = vld [vmem:[#allocation8 + $0x640] sm:$0xff]
    %v822 = vld [vmem:[#allocation8 + $0x648] sm:$0xff]
    %v823 = vld [vmem:[#allocation8 + $0x650] sm:$0xff]
    %v824 = vld [vmem:[#allocation8 + $0x658] sm:$0xff]
    %v825 = vld [vmem:[#allocation8 + $0x660] sm:$0xff]
    %v826 = vld [vmem:[#allocation8 + $0x668] sm:$0xff]
    %v827 = vld [vmem:[#allocation8 + $0x670] sm:$0xff]
    %v828 = vld [vmem:[#allocation8 + $0x678] sm:$0xff]
    %v829 = vld [vmem:[#allocation8 + $0x680] sm:$0xff]
    %v830 = vld [vmem:[#allocation8 + $0x688] sm:$0xff]
    %v831 = vld [vmem:[#allocation8 + $0x690] sm:$0xff]
    %v832 = vld [vmem:[#allocation8 + $0x698] sm:$0xff]
    %v833 = vld [vmem:[#allocation8 + $0x6a0] sm:$0xff]
    %v834 = vld [vmem:[#allocation8 + $0x6a8] sm:$0xff]
    %v835 = vld [vmem:[#allocation8 + $0x6b0] sm:$0xff]
    %v836 = vld [vmem:[#allocation8 + $0x6b8] sm:$0xff]
    %v837 = vld [vmem:[#allocation8 + $0x6c0] sm:$0xff]
    %v838 = vld [vmem:[#allocation8 + $0x6c8] sm:$0xff]
    %v839 = vld [vmem:[#allocation8 + $0x6d0] sm:$0xff]
    %v840 = vld [vmem:[#allocation8 + $0x6d8] sm:$0xff]
    %v841 = vld [vmem:[#allocation8 + $0x6e0] sm:$0xff]
    %v842 = vld [vmem:[#allocation8 + $0x6e8] sm:$0xff]
    %v843 = vld [vmem:[#allocation8 + $0x6f0] sm:$0xff]
    %v844 = vld [vmem:[#allocation8 + $0x6f8] sm:$0xff]
    %v845 = vld [vmem:[#allocation8 + $0x700] sm:$0xff]
    %v846 = vld [vmem:[#allocation8 + $0x708] sm:$0xff]
    %v847 = vld [vmem:[#allocation8 + $0x710] sm:$0xff]
    %v848 = vld [vmem:[#allocation8 + $0x718] sm:$0xff]
    %v849 = vld [vmem:[#allocation8 + $0x720] sm:$0xff]
    %v850 = vld [vmem:[#allocation8 + $0x728] sm:$0xff]
    %v851 = vld [vmem:[#allocation8 + $0x730] sm:$0xff]
    %v852 = vld [vmem:[#allocation8 + $0x738] sm:$0xff]
    %v853 = vld [vmem:[#allocation8 + $0x740] sm:$0xff]
    %v854 = vld [vmem:[#allocation8 + $0x748] sm:$0xff]
    %v855 = vld [vmem:[#allocation8 + $0x750] sm:$0xff]
    %v856 = vld [vmem:[#allocation8 + $0x758] sm:$0xff]
    %v857 = vld [vmem:[#allocation8 + $0x760] sm:$0xff]
    %v858 = vld [vmem:[#allocation8 + $0x768] sm:$0xff]
    %v859 = vld [vmem:[#allocation8 + $0x770] sm:$0xff]
    %v860 = vld [vmem:[#allocation8 + $0x778] sm:$0xff]
    %v861 = vld [vmem:[#allocation8 + $0x780] sm:$0xff]
    %v862 = vld [vmem:[#allocation8 + $0x788] sm:$0xff]
    %v863 = vld [vmem:[#allocation8 + $0x790] sm:$0xff]
    %v864 = vld [vmem:[#allocation8 + $0x798] sm:$0xff]
    %v865 = vld [vmem:[#allocation8 + $0x7a0] sm:$0xff]
    %v866 = vld [vmem:[#allocation8 + $0x7a8] sm:$0xff]
    %v867 = vld [vmem:[#allocation8 + $0x7b0] sm:$0xff]
    %v868 = vld [vmem:[#allocation8 + $0x7b8] sm:$0xff]
    %v869 = vld [vmem:[#allocation8 + $0x7c0] sm:$0xff]
    %v870 = vld [vmem:[#allocation8 + $0x7c8] sm:$0xff]
    %v871 = vld [vmem:[#allocation8 + $0x7d0] sm:$0xff]
    %v872 = vld [vmem:[#allocation8 + $0x7d8] sm:$0xff]
    %v873 = vld [vmem:[#allocation8 + $0x7e0] sm:$0xff]
    %v874 = vld [vmem:[#allocation8 + $0x7e8] sm:$0xff]
    %v875 = vld [vmem:[#allocation8 + $0x7f0] sm:$0xff]
    %v876 = vld [vmem:[#allocation8 + $0x7f8] sm:$0xff]
    %v877 = vld [vmem:[#allocation10] sm:$0xff]
    %v879 = vlaneseq
    %v880 = vshrl.u32 %v879, 7
    %v881 = vsub.s32 0, %v880
    %v882 = vrot.slane %v877, %v881
    %v883 = vlaneseq
    %v884 = vshrl.u32 %v883, 7
    %v885 = vsub.s32 1, %v884
    %v886 = vrot.slane %v877, %v885
    %v887 = vlaneseq
    %v888 = vshrl.u32 %v887, 7
    %v889 = vsub.s32 2, %v888
    %v890 = vrot.slane %v877, %v889
    %v891 = vlaneseq
    %v892 = vshrl.u32 %v891, 7
    %v893 = vsub.s32 3, %v892
    %v894 = vrot.slane %v877, %v893
    %v895 = vlaneseq
    %v896 = vshrl.u32 %v895, 7
    %v897 = vsub.s32 4, %v896
    %v898 = vrot.slane %v877, %v897
    %v899 = vlaneseq
    %v900 = vshrl.u32 %v899, 7
    %v901 = vsub.s32 5, %v900
    %v902 = vrot.slane %v877, %v901
    %v903 = vlaneseq
    %v904 = vshrl.u32 %v903, 7
    %v905 = vsub.s32 6, %v904
    %v906 = vrot.slane %v877, %v905
    %v907 = vlaneseq
    %v908 = vshrl.u32 %v907, 7
    %v909 = vsub.s32 7, %v908
    %v910 = vrot.slane %v877, %v909
    %v1175 = vunpack.c.l.b16 %v621
    %v1176 = vunpack.c.h.b16 %v621
    %v1177 = vunpack.c.l.b16 %v622
    %v1178 = vunpack.c.h.b16 %v622
    %v1179 = vunpack.c.l.b16 %v623
    %v1180 = vunpack.c.h.b16 %v623
    %v1181 = vunpack.c.l.b16 %v624
    %v1182 = vunpack.c.h.b16 %v624
    %v1183 = vunpack.c.l.b16 %v625
    %v1184 = vunpack.c.h.b16 %v625
    %v1185 = vunpack.c.l.b16 %v626
    %v1186 = vunpack.c.h.b16 %v626
    %v1187 = vunpack.c.l.b16 %v627
    %v1188 = vunpack.c.h.b16 %v627
    %v1189 = vunpack.c.l.b16 %v628
    %v1190 = vunpack.c.h.b16 %v628
    %v1191 = vunpack.c.l.b16 %v629
    %v1192 = vunpack.c.h.b16 %v629
    %v1193 = vunpack.c.l.b16 %v630
    %v1194 = vunpack.c.h.b16 %v630
    %v1195 = vunpack.c.l.b16 %v631
    %v1196 = vunpack.c.h.b16 %v631
    %v1197 = vunpack.c.l.b16 %v632
    %v1198 = vunpack.c.h.b16 %v632
    %v1199 = vunpack.c.l.b16 %v633
    %v1200 = vunpack.c.h.b16 %v633
    %v1201 = vunpack.c.l.b16 %v634
    %v1202 = vunpack.c.h.b16 %v634
    %v1203 = vunpack.c.l.b16 %v635
    %v1204 = vunpack.c.h.b16 %v635
    %v1205 = vunpack.c.l.b16 %v636
    %v1206 = vunpack.c.h.b16 %v636
    %v1207 = vunpack.c.l.b16 %v637
    %v1208 = vunpack.c.h.b16 %v637
    %v1209 = vunpack.c.l.b16 %v638
    %v1210 = vunpack.c.h.b16 %v638
    %v1211 = vunpack.c.l.b16 %v639
    %v1212 = vunpack.c.h.b16 %v639
    %v1213 = vunpack.c.l.b16 %v640
    %v1214 = vunpack.c.h.b16 %v640
    %v1215 = vunpack.c.l.b16 %v641
    %v1216 = vunpack.c.h.b16 %v641
    %v1217 = vunpack.c.l.b16 %v642
    %v1218 = vunpack.c.h.b16 %v642
    %v1219 = vunpack.c.l.b16 %v643
    %v1220 = vunpack.c.h.b16 %v643
    %v1221 = vunpack.c.l.b16 %v644
    %v1222 = vunpack.c.h.b16 %v644
    %v1223 = vunpack.c.l.b16 %v645
    %v1224 = vunpack.c.h.b16 %v645
    %v1225 = vunpack.c.l.b16 %v646
    %v1226 = vunpack.c.h.b16 %v646
    %v1227 = vunpack.c.l.b16 %v647
    %v1228 = vunpack.c.h.b16 %v647
    %v1229 = vunpack.c.l.b16 %v648
    %v1230 = vunpack.c.h.b16 %v648
    %v1231 = vunpack.c.l.b16 %v649
    %v1232 = vunpack.c.h.b16 %v649
    %v1233 = vunpack.c.l.b16 %v650
    %v1234 = vunpack.c.h.b16 %v650
    %v1235 = vunpack.c.l.b16 %v651
    %v1236 = vunpack.c.h.b16 %v651
    %v1237 = vunpack.c.l.b16 %v652
    %v1238 = vunpack.c.h.b16 %v652
    %v1239 = vunpack.c.l.b16 %v653
    %v1240 = vunpack.c.h.b16 %v653
    %v1241 = vunpack.c.l.b16 %v654
    %v1242 = vunpack.c.h.b16 %v654
    %v1243 = vunpack.c.l.b16 %v655
    %v1244 = vunpack.c.h.b16 %v655
    %v1245 = vunpack.c.l.b16 %v656
    %v1246 = vunpack.c.h.b16 %v656
    %v1247 = vunpack.c.l.b16 %v657
    %v1248 = vunpack.c.h.b16 %v657
    %v1249 = vunpack.c.l.b16 %v658
    %v1250 = vunpack.c.h.b16 %v658
    %v1251 = vunpack.c.l.b16 %v659
    %v1252 = vunpack.c.h.b16 %v659
    %v1253 = vunpack.c.l.b16 %v660
    %v1254 = vunpack.c.h.b16 %v660
    %v1255 = vunpack.c.l.b16 %v661
    %v1256 = vunpack.c.h.b16 %v661
    %v1257 = vunpack.c.l.b16 %v662
    %v1258 = vunpack.c.h.b16 %v662
    %v1259 = vunpack.c.l.b16 %v663
    %v1260 = vunpack.c.h.b16 %v663
    %v1261 = vunpack.c.l.b16 %v664
    %v1262 = vunpack.c.h.b16 %v664
    %v1263 = vunpack.c.l.b16 %v665
    %v1264 = vunpack.c.h.b16 %v665
    %v1265 = vunpack.c.l.b16 %v666
    %v1266 = vunpack.c.h.b16 %v666
    %v1267 = vunpack.c.l.b16 %v667
    %v1268 = vunpack.c.h.b16 %v667
    %v1269 = vunpack.c.l.b16 %v668
    %v1270 = vunpack.c.h.b16 %v668
    %v1271 = vunpack.c.l.b16 %v669
    %v1272 = vunpack.c.h.b16 %v669
    %v1273 = vunpack.c.l.b16 %v670
    %v1274 = vunpack.c.h.b16 %v670
    %v1275 = vunpack.c.l.b16 %v671
    %v1276 = vunpack.c.h.b16 %v671
    %v1277 = vunpack.c.l.b16 %v672
    %v1278 = vunpack.c.h.b16 %v672
    %v1279 = vunpack.c.l.b16 %v673
    %v1280 = vunpack.c.h.b16 %v673
    %v1281 = vunpack.c.l.b16 %v674
    %v1282 = vunpack.c.h.b16 %v674
    %v1283 = vunpack.c.l.b16 %v675
    %v1284 = vunpack.c.h.b16 %v675
    %v1285 = vunpack.c.l.b16 %v676
    %v1286 = vunpack.c.h.b16 %v676
    %v1287 = vunpack.c.l.b16 %v677
    %v1288 = vunpack.c.h.b16 %v677
    %v1289 = vunpack.c.l.b16 %v678
    %v1290 = vunpack.c.h.b16 %v678
    %v1291 = vunpack.c.l.b16 %v679
    %v1292 = vunpack.c.h.b16 %v679
    %v1293 = vunpack.c.l.b16 %v680
    %v1294 = vunpack.c.h.b16 %v680
    %v1295 = vunpack.c.l.b16 %v681
    %v1296 = vunpack.c.h.b16 %v681
    %v1297 = vunpack.c.l.b16 %v682
    %v1298 = vunpack.c.h.b16 %v682
    %v1299 = vunpack.c.l.b16 %v683
    %v1300 = vunpack.c.h.b16 %v683
    %v1301 = vunpack.c.l.b16 %v684
    %v1302 = vunpack.c.h.b16 %v684
    %v1303 = vunpack.c.l.b16 %v685
    %v1304 = vunpack.c.h.b16 %v685
    %v1305 = vunpack.c.l.b16 %v686
    %v1306 = vunpack.c.h.b16 %v686
    %v1307 = vunpack.c.l.b16 %v687
    %v1308 = vunpack.c.h.b16 %v687
    %v1309 = vunpack.c.l.b16 %v688
    %v1310 = vunpack.c.h.b16 %v688
    %v1311 = vunpack.c.l.b16 %v689
    %v1312 = vunpack.c.h.b16 %v689
    %v1313 = vunpack.c.l.b16 %v690
    %v1314 = vunpack.c.h.b16 %v690
    %v1315 = vunpack.c.l.b16 %v691
    %v1316 = vunpack.c.h.b16 %v691
    %v1317 = vunpack.c.l.b16 %v692
    %v1318 = vunpack.c.h.b16 %v692
    %v1319 = vunpack.c.l.b16 %v693
    %v1320 = vunpack.c.h.b16 %v693
    %v1321 = vunpack.c.l.b16 %v694
    %v1322 = vunpack.c.h.b16 %v694
    %v1323 = vunpack.c.l.b16 %v695
    %v1324 = vunpack.c.h.b16 %v695
    %v1325 = vunpack.c.l.b16 %v696
    %v1326 = vunpack.c.h.b16 %v696
    %v1327 = vunpack.c.l.b16 %v697
    %v1328 = vunpack.c.h.b16 %v697
    %v1329 = vunpack.c.l.b16 %v698
    %v1330 = vunpack.c.h.b16 %v698
    %v1331 = vunpack.c.l.b16 %v699
    %v1332 = vunpack.c.h.b16 %v699
    %v1333 = vunpack.c.l.b16 %v700
    %v1334 = vunpack.c.h.b16 %v700
    %v1335 = vunpack.c.l.b16 %v701
    %v1336 = vunpack.c.h.b16 %v701
    %v1337 = vunpack.c.l.b16 %v702
    %v1338 = vunpack.c.h.b16 %v702
    %v1339 = vunpack.c.l.b16 %v703
    %v1340 = vunpack.c.h.b16 %v703
    %v1341 = vunpack.c.l.b16 %v704
    %v1342 = vunpack.c.h.b16 %v704
    %v1343 = vunpack.c.l.b16 %v705
    %v1344 = vunpack.c.h.b16 %v705
    %v1345 = vunpack.c.l.b16 %v706
    %v1346 = vunpack.c.h.b16 %v706
    %v1347 = vunpack.c.l.b16 %v707
    %v1348 = vunpack.c.h.b16 %v707
    %v1349 = vunpack.c.l.b16 %v708
    %v1350 = vunpack.c.h.b16 %v708
    %v1351 = vunpack.c.l.b16 %v709
    %v1352 = vunpack.c.h.b16 %v709
    %v1353 = vunpack.c.l.b16 %v710
    %v1354 = vunpack.c.h.b16 %v710
    %v1355 = vunpack.c.l.b16 %v711
    %v1356 = vunpack.c.h.b16 %v711
    %v1357 = vunpack.c.l.b16 %v712
    %v1358 = vunpack.c.h.b16 %v712
    %v1359 = vunpack.c.l.b16 %v713
    %v1360 = vunpack.c.h.b16 %v713
    %v1361 = vunpack.c.l.b16 %v714
    %v1362 = vunpack.c.h.b16 %v714
    %v1363 = vunpack.c.l.b16 %v715
    %v1364 = vunpack.c.h.b16 %v715
    %v1365 = vunpack.c.l.b16 %v716
    %v1366 = vunpack.c.h.b16 %v716
    %v1367 = vunpack.c.l.b16 %v717
    %v1368 = vunpack.c.h.b16 %v717
    %v1369 = vunpack.c.l.b16 %v718
    %v1370 = vunpack.c.h.b16 %v718
    %v1371 = vunpack.c.l.b16 %v719
    %v1372 = vunpack.c.h.b16 %v719
    %v1373 = vunpack.c.l.b16 %v720
    %v1374 = vunpack.c.h.b16 %v720
    %v1375 = vunpack.c.l.b16 %v721
    %v1376 = vunpack.c.h.b16 %v721
    %v1377 = vunpack.c.l.b16 %v722
    %v1378 = vunpack.c.h.b16 %v722
    %v1379 = vunpack.c.l.b16 %v723
    %v1380 = vunpack.c.h.b16 %v723
    %v1381 = vunpack.c.l.b16 %v724
    %v1382 = vunpack.c.h.b16 %v724
    %v1383 = vunpack.c.l.b16 %v725
    %v1384 = vunpack.c.h.b16 %v725
    %v1385 = vunpack.c.l.b16 %v726
    %v1386 = vunpack.c.h.b16 %v726
    %v1387 = vunpack.c.l.b16 %v727
    %v1388 = vunpack.c.h.b16 %v727
    %v1389 = vunpack.c.l.b16 %v728
    %v1390 = vunpack.c.h.b16 %v728
    %v1391 = vunpack.c.l.b16 %v729
    %v1392 = vunpack.c.h.b16 %v729
    %v1393 = vunpack.c.l.b16 %v730
    %v1394 = vunpack.c.h.b16 %v730
    %v1395 = vunpack.c.l.b16 %v731
    %v1396 = vunpack.c.h.b16 %v731
    %v1397 = vunpack.c.l.b16 %v732
    %v1398 = vunpack.c.h.b16 %v732
    %v1399 = vunpack.c.l.b16 %v733
    %v1400 = vunpack.c.h.b16 %v733
    %v1401 = vunpack.c.l.b16 %v734
    %v1402 = vunpack.c.h.b16 %v734
    %v1403 = vunpack.c.l.b16 %v735
    %v1404 = vunpack.c.h.b16 %v735
    %v1405 = vunpack.c.l.b16 %v736
    %v1406 = vunpack.c.h.b16 %v736
    %v1407 = vunpack.c.l.b16 %v737
    %v1408 = vunpack.c.h.b16 %v737
    %v1409 = vunpack.c.l.b16 %v738
    %v1410 = vunpack.c.h.b16 %v738
    %v1411 = vunpack.c.l.b16 %v739
    %v1412 = vunpack.c.h.b16 %v739
    %v1413 = vunpack.c.l.b16 %v740
    %v1414 = vunpack.c.h.b16 %v740
    %v1415 = vunpack.c.l.b16 %v741
    %v1416 = vunpack.c.h.b16 %v741
    %v1417 = vunpack.c.l.b16 %v742
    %v1418 = vunpack.c.h.b16 %v742
    %v1419 = vunpack.c.l.b16 %v743
    %v1420 = vunpack.c.h.b16 %v743
    %v1421 = vunpack.c.l.b16 %v744
    %v1422 = vunpack.c.h.b16 %v744
    %v1423 = vunpack.c.l.b16 %v745
    %v1424 = vunpack.c.h.b16 %v745
    %v1425 = vunpack.c.l.b16 %v746
    %v1426 = vunpack.c.h.b16 %v746
    %v1427 = vunpack.c.l.b16 %v747
    %v1428 = vunpack.c.h.b16 %v747
    %v1429 = vunpack.c.l.b16 %v748
    %v1430 = vunpack.c.h.b16 %v748
    %v1431 = vunpack.c.l.b16 %v749
    %v1432 = vunpack.c.h.b16 %v749
    %v1433 = vunpack.c.l.b16 %v750
    %v1434 = vunpack.c.h.b16 %v750
    %v1435 = vunpack.c.l.b16 %v751
    %v1436 = vunpack.c.h.b16 %v751
    %v1437 = vunpack.c.l.b16 %v752
    %v1438 = vunpack.c.h.b16 %v752
    %v1439 = vunpack.c.l.b16 %v753
    %v1440 = vunpack.c.h.b16 %v753
    %v1441 = vunpack.c.l.b16 %v754
    %v1442 = vunpack.c.h.b16 %v754
    %v1443 = vunpack.c.l.b16 %v755
    %v1444 = vunpack.c.h.b16 %v755
    %v1445 = vunpack.c.l.b16 %v756
    %v1446 = vunpack.c.h.b16 %v756
    %v1447 = vunpack.c.l.b16 %v757
    %v1448 = vunpack.c.h.b16 %v757
    %v1449 = vunpack.c.l.b16 %v758
    %v1450 = vunpack.c.h.b16 %v758
    %v1451 = vunpack.c.l.b16 %v759
    %v1452 = vunpack.c.h.b16 %v759
    %v1453 = vunpack.c.l.b16 %v760
    %v1454 = vunpack.c.h.b16 %v760
    %v1455 = vunpack.c.l.b16 %v761
    %v1456 = vunpack.c.h.b16 %v761
    %v1457 = vunpack.c.l.b16 %v762
    %v1458 = vunpack.c.h.b16 %v762
    %v1459 = vunpack.c.l.b16 %v763
    %v1460 = vunpack.c.h.b16 %v763
    %v1461 = vunpack.c.l.b16 %v764
    %v1462 = vunpack.c.h.b16 %v764
    %v1463 = vunpack.c.l.b16 %v765
    %v1464 = vunpack.c.h.b16 %v765
    %v1465 = vunpack.c.l.b16 %v766
    %v1466 = vunpack.c.h.b16 %v766
    %v1467 = vunpack.c.l.b16 %v767
    %v1468 = vunpack.c.h.b16 %v767
    %v1469 = vunpack.c.l.b16 %v768
    %v1470 = vunpack.c.h.b16 %v768
    %v1471 = vunpack.c.l.b16 %v769
    %v1472 = vunpack.c.h.b16 %v769
    %v1473 = vunpack.c.l.b16 %v770
    %v1474 = vunpack.c.h.b16 %v770
    %v1475 = vunpack.c.l.b16 %v771
    %v1476 = vunpack.c.h.b16 %v771
    %v1477 = vunpack.c.l.b16 %v772
    %v1478 = vunpack.c.h.b16 %v772
    %v1479 = vunpack.c.l.b16 %v773
    %v1480 = vunpack.c.h.b16 %v773
    %v1481 = vunpack.c.l.b16 %v774
    %v1482 = vunpack.c.h.b16 %v774
    %v1483 = vunpack.c.l.b16 %v775
    %v1484 = vunpack.c.h.b16 %v775
    %v1485 = vunpack.c.l.b16 %v776
    %v1486 = vunpack.c.h.b16 %v776
    %v1487 = vunpack.c.l.b16 %v777
    %v1488 = vunpack.c.h.b16 %v777
    %v1489 = vunpack.c.l.b16 %v778
    %v1490 = vunpack.c.h.b16 %v778
    %v1491 = vunpack.c.l.b16 %v779
    %v1492 = vunpack.c.h.b16 %v779
    %v1493 = vunpack.c.l.b16 %v780
    %v1494 = vunpack.c.h.b16 %v780
    %v1495 = vunpack.c.l.b16 %v781
    %v1496 = vunpack.c.h.b16 %v781
    %v1497 = vunpack.c.l.b16 %v782
    %v1498 = vunpack.c.h.b16 %v782
    %v1499 = vunpack.c.l.b16 %v783
    %v1500 = vunpack.c.h.b16 %v783
    %v1501 = vunpack.c.l.b16 %v784
    %v1502 = vunpack.c.h.b16 %v784
    %v1503 = vunpack.c.l.b16 %v785
    %v1504 = vunpack.c.h.b16 %v785
    %v1505 = vunpack.c.l.b16 %v786
    %v1506 = vunpack.c.h.b16 %v786
    %v1507 = vunpack.c.l.b16 %v787
    %v1508 = vunpack.c.h.b16 %v787
    %v1509 = vunpack.c.l.b16 %v788
    %v1510 = vunpack.c.h.b16 %v788
    %v1511 = vunpack.c.l.b16 %v789
    %v1512 = vunpack.c.h.b16 %v789
    %v1513 = vunpack.c.l.b16 %v790
    %v1514 = vunpack.c.h.b16 %v790
    %v1515 = vunpack.c.l.b16 %v791
    %v1516 = vunpack.c.h.b16 %v791
    %v1517 = vunpack.c.l.b16 %v792
    %v1518 = vunpack.c.h.b16 %v792
    %v1519 = vunpack.c.l.b16 %v793
    %v1520 = vunpack.c.h.b16 %v793
    %v1521 = vunpack.c.l.b16 %v794
    %v1522 = vunpack.c.h.b16 %v794
    %v1523 = vunpack.c.l.b16 %v795
    %v1524 = vunpack.c.h.b16 %v795
    %v1525 = vunpack.c.l.b16 %v796
    %v1526 = vunpack.c.h.b16 %v796
    %v1527 = vunpack.c.l.b16 %v797
    %v1528 = vunpack.c.h.b16 %v797
    %v1529 = vunpack.c.l.b16 %v798
    %v1530 = vunpack.c.h.b16 %v798
    %v1531 = vunpack.c.l.b16 %v799
    %v1532 = vunpack.c.h.b16 %v799
    %v1533 = vunpack.c.l.b16 %v800
    %v1534 = vunpack.c.h.b16 %v800
    %v1535 = vunpack.c.l.b16 %v801
    %v1536 = vunpack.c.h.b16 %v801
    %v1537 = vunpack.c.l.b16 %v802
    %v1538 = vunpack.c.h.b16 %v802
    %v1539 = vunpack.c.l.b16 %v803
    %v1540 = vunpack.c.h.b16 %v803
    %v1541 = vunpack.c.l.b16 %v804
    %v1542 = vunpack.c.h.b16 %v804
    %v1543 = vunpack.c.l.b16 %v805
    %v1544 = vunpack.c.h.b16 %v805
    %v1545 = vunpack.c.l.b16 %v806
    %v1546 = vunpack.c.h.b16 %v806
    %v1547 = vunpack.c.l.b16 %v807
    %v1548 = vunpack.c.h.b16 %v807
    %v1549 = vunpack.c.l.b16 %v808
    %v1550 = vunpack.c.h.b16 %v808
    %v1551 = vunpack.c.l.b16 %v809
    %v1552 = vunpack.c.h.b16 %v809
    %v1553 = vunpack.c.l.b16 %v810
    %v1554 = vunpack.c.h.b16 %v810
    %v1555 = vunpack.c.l.b16 %v811
    %v1556 = vunpack.c.h.b16 %v811
    %v1557 = vunpack.c.l.b16 %v812
    %v1558 = vunpack.c.h.b16 %v812
    %v1559 = vunpack.c.l.b16 %v813
    %v1560 = vunpack.c.h.b16 %v813
    %v1561 = vunpack.c.l.b16 %v814
    %v1562 = vunpack.c.h.b16 %v814
    %v1563 = vunpack.c.l.b16 %v815
    %v1564 = vunpack.c.h.b16 %v815
    %v1565 = vunpack.c.l.b16 %v816
    %v1566 = vunpack.c.h.b16 %v816
    %v1567 = vunpack.c.l.b16 %v817
    %v1568 = vunpack.c.h.b16 %v817
    %v1569 = vunpack.c.l.b16 %v818
    %v1570 = vunpack.c.h.b16 %v818
    %v1571 = vunpack.c.l.b16 %v819
    %v1572 = vunpack.c.h.b16 %v819
    %v1573 = vunpack.c.l.b16 %v820
    %v1574 = vunpack.c.h.b16 %v820
    %v1575 = vunpack.c.l.b16 %v821
    %v1576 = vunpack.c.h.b16 %v821
    %v1577 = vunpack.c.l.b16 %v822
    %v1578 = vunpack.c.h.b16 %v822
    %v1579 = vunpack.c.l.b16 %v823
    %v1580 = vunpack.c.h.b16 %v823
    %v1581 = vunpack.c.l.b16 %v824
    %v1582 = vunpack.c.h.b16 %v824
    %v1583 = vunpack.c.l.b16 %v825
    %v1584 = vunpack.c.h.b16 %v825
    %v1585 = vunpack.c.l.b16 %v826
    %v1586 = vunpack.c.h.b16 %v826
    %v1587 = vunpack.c.l.b16 %v827
    %v1588 = vunpack.c.h.b16 %v827
    %v1589 = vunpack.c.l.b16 %v828
    %v1590 = vunpack.c.h.b16 %v828
    %v1591 = vunpack.c.l.b16 %v829
    %v1592 = vunpack.c.h.b16 %v829
    %v1593 = vunpack.c.l.b16 %v830
    %v1594 = vunpack.c.h.b16 %v830
    %v1595 = vunpack.c.l.b16 %v831
    %v1596 = vunpack.c.h.b16 %v831
    %v1597 = vunpack.c.l.b16 %v832
    %v1598 = vunpack.c.h.b16 %v832
    %v1599 = vunpack.c.l.b16 %v833
    %v1600 = vunpack.c.h.b16 %v833
    %v1601 = vunpack.c.l.b16 %v834
    %v1602 = vunpack.c.h.b16 %v834
    %v1603 = vunpack.c.l.b16 %v835
    %v1604 = vunpack.c.h.b16 %v835
    %v1605 = vunpack.c.l.b16 %v836
    %v1606 = vunpack.c.h.b16 %v836
    %v1607 = vunpack.c.l.b16 %v837
    %v1608 = vunpack.c.h.b16 %v837
    %v1609 = vunpack.c.l.b16 %v838
    %v1610 = vunpack.c.h.b16 %v838
    %v1611 = vunpack.c.l.b16 %v839
    %v1612 = vunpack.c.h.b16 %v839
    %v1613 = vunpack.c.l.b16 %v840
    %v1614 = vunpack.c.h.b16 %v840
    %v1615 = vunpack.c.l.b16 %v841
    %v1616 = vunpack.c.h.b16 %v841
    %v1617 = vunpack.c.l.b16 %v842
    %v1618 = vunpack.c.h.b16 %v842
    %v1619 = vunpack.c.l.b16 %v843
    %v1620 = vunpack.c.h.b16 %v843
    %v1621 = vunpack.c.l.b16 %v844
    %v1622 = vunpack.c.h.b16 %v844
    %v1623 = vunpack.c.l.b16 %v845
    %v1624 = vunpack.c.h.b16 %v845
    %v1625 = vunpack.c.l.b16 %v846
    %v1626 = vunpack.c.h.b16 %v846
    %v1627 = vunpack.c.l.b16 %v847
    %v1628 = vunpack.c.h.b16 %v847
    %v1629 = vunpack.c.l.b16 %v848
    %v1630 = vunpack.c.h.b16 %v848
    %v1631 = vunpack.c.l.b16 %v849
    %v1632 = vunpack.c.h.b16 %v849
    %v1633 = vunpack.c.l.b16 %v850
    %v1634 = vunpack.c.h.b16 %v850
    %v1635 = vunpack.c.l.b16 %v851
    %v1636 = vunpack.c.h.b16 %v851
    %v1637 = vunpack.c.l.b16 %v852
    %v1638 = vunpack.c.h.b16 %v852
    %v1639 = vunpack.c.l.b16 %v853
    %v1640 = vunpack.c.h.b16 %v853
    %v1641 = vunpack.c.l.b16 %v854
    %v1642 = vunpack.c.h.b16 %v854
    %v1643 = vunpack.c.l.b16 %v855
    %v1644 = vunpack.c.h.b16 %v855
    %v1645 = vunpack.c.l.b16 %v856
    %v1646 = vunpack.c.h.b16 %v856
    %v1647 = vunpack.c.l.b16 %v857
    %v1648 = vunpack.c.h.b16 %v857
    %v1649 = vunpack.c.l.b16 %v858
    %v1650 = vunpack.c.h.b16 %v858
    %v1651 = vunpack.c.l.b16 %v859
    %v1652 = vunpack.c.h.b16 %v859
    %v1653 = vunpack.c.l.b16 %v860
    %v1654 = vunpack.c.h.b16 %v860
    %v1655 = vunpack.c.l.b16 %v861
    %v1656 = vunpack.c.h.b16 %v861
    %v1657 = vunpack.c.l.b16 %v862
    %v1658 = vunpack.c.h.b16 %v862
    %v1659 = vunpack.c.l.b16 %v863
    %v1660 = vunpack.c.h.b16 %v863
    %v1661 = vunpack.c.l.b16 %v864
    %v1662 = vunpack.c.h.b16 %v864
    %v1663 = vunpack.c.l.b16 %v865
    %v1664 = vunpack.c.h.b16 %v865
    %v1665 = vunpack.c.l.b16 %v866
    %v1666 = vunpack.c.h.b16 %v866
    %v1667 = vunpack.c.l.b16 %v867
    %v1668 = vunpack.c.h.b16 %v867
    %v1669 = vunpack.c.l.b16 %v868
    %v1670 = vunpack.c.h.b16 %v868
    %v1671 = vunpack.c.l.b16 %v869
    %v1672 = vunpack.c.h.b16 %v869
    %v1673 = vunpack.c.l.b16 %v870
    %v1674 = vunpack.c.h.b16 %v870
    %v1675 = vunpack.c.l.b16 %v871
    %v1676 = vunpack.c.h.b16 %v871
    %v1677 = vunpack.c.l.b16 %v872
    %v1678 = vunpack.c.h.b16 %v872
    %v1679 = vunpack.c.l.b16 %v873
    %v1680 = vunpack.c.h.b16 %v873
    %v1681 = vunpack.c.l.b16 %v874
    %v1682 = vunpack.c.h.b16 %v874
    %v1683 = vunpack.c.l.b16 %v875
    %v1684 = vunpack.c.h.b16 %v875
    %v1685 = vunpack.c.l.b16 %v876
    %v1686 = vunpack.c.h.b16 %v876
    %v1687 = vpack.c.b16 %v1183, %v1175
    %v1688 = vpack.c.b16 %v1184, %v1176
    %v1689 = vpack.c.b16 %v1185, %v1177
    %v1690 = vpack.c.b16 %v1186, %v1178
    %v1691 = vpack.c.b16 %v1187, %v1179
    %v1692 = vpack.c.b16 %v1188, %v1180
    %v1693 = vpack.c.b16 %v1189, %v1181
    %v1694 = vpack.c.b16 %v1190, %v1182
    %v1695 = vpack.c.b16 %v1199, %v1191
    %v1696 = vpack.c.b16 %v1200, %v1192
    %v1697 = vpack.c.b16 %v1201, %v1193
    %v1698 = vpack.c.b16 %v1202, %v1194
    %v1699 = vpack.c.b16 %v1203, %v1195
    %v1700 = vpack.c.b16 %v1204, %v1196
    %v1701 = vpack.c.b16 %v1205, %v1197
    %v1702 = vpack.c.b16 %v1206, %v1198
    %v1703 = vpack.c.b16 %v1215, %v1207
    %v1704 = vpack.c.b16 %v1216, %v1208
    %v1705 = vpack.c.b16 %v1217, %v1209
    %v1706 = vpack.c.b16 %v1218, %v1210
    %v1707 = vpack.c.b16 %v1219, %v1211
    %v1708 = vpack.c.b16 %v1220, %v1212
    %v1709 = vpack.c.b16 %v1221, %v1213
    %v1710 = vpack.c.b16 %v1222, %v1214
    %v1711 = vpack.c.b16 %v1231, %v1223
    %v1712 = vpack.c.b16 %v1232, %v1224
    %v1713 = vpack.c.b16 %v1233, %v1225
    %v1714 = vpack.c.b16 %v1234, %v1226
    %v1715 = vpack.c.b16 %v1235, %v1227
    %v1716 = vpack.c.b16 %v1236, %v1228
    %v1717 = vpack.c.b16 %v1237, %v1229
    %v1718 = vpack.c.b16 %v1238, %v1230
    %v1719 = vpack.c.b16 %v1247, %v1239
    %v1720 = vpack.c.b16 %v1248, %v1240
    %v1721 = vpack.c.b16 %v1249, %v1241
    %v1722 = vpack.c.b16 %v1250, %v1242
    %v1723 = vpack.c.b16 %v1251, %v1243
    %v1724 = vpack.c.b16 %v1252, %v1244
    %v1725 = vpack.c.b16 %v1253, %v1245
    %v1726 = vpack.c.b16 %v1254, %v1246
    %v1727 = vpack.c.b16 %v1263, %v1255
    %v1728 = vpack.c.b16 %v1264, %v1256
    %v1729 = vpack.c.b16 %v1265, %v1257
    %v1730 = vpack.c.b16 %v1266, %v1258
    %v1731 = vpack.c.b16 %v1267, %v1259
    %v1732 = vpack.c.b16 %v1268, %v1260
    %v1733 = vpack.c.b16 %v1269, %v1261
    %v1734 = vpack.c.b16 %v1270, %v1262
    %v1735 = vpack.c.b16 %v1279, %v1271
    %v1736 = vpack.c.b16 %v1280, %v1272
    %v1737 = vpack.c.b16 %v1281, %v1273
    %v1738 = vpack.c.b16 %v1282, %v1274
    %v1739 = vpack.c.b16 %v1283, %v1275
    %v1740 = vpack.c.b16 %v1284, %v1276
    %v1741 = vpack.c.b16 %v1285, %v1277
    %v1742 = vpack.c.b16 %v1286, %v1278
    %v1743 = vpack.c.b16 %v1295, %v1287
    %v1744 = vpack.c.b16 %v1296, %v1288
    %v1745 = vpack.c.b16 %v1297, %v1289
    %v1746 = vpack.c.b16 %v1298, %v1290
    %v1747 = vpack.c.b16 %v1299, %v1291
    %v1748 = vpack.c.b16 %v1300, %v1292
    %v1749 = vpack.c.b16 %v1301, %v1293
    %v1750 = vpack.c.b16 %v1302, %v1294
    %v1751 = vpack.c.b16 %v1311, %v1303
    %v1752 = vpack.c.b16 %v1312, %v1304
    %v1753 = vpack.c.b16 %v1313, %v1305
    %v1754 = vpack.c.b16 %v1314, %v1306
    %v1755 = vpack.c.b16 %v1315, %v1307
    %v1756 = vpack.c.b16 %v1316, %v1308
    %v1757 = vpack.c.b16 %v1317, %v1309
    %v1758 = vpack.c.b16 %v1318, %v1310
    %v1759 = vpack.c.b16 %v1327, %v1319
    %v1760 = vpack.c.b16 %v1328, %v1320
    %v1761 = vpack.c.b16 %v1329, %v1321
    %v1762 = vpack.c.b16 %v1330, %v1322
    %v1763 = vpack.c.b16 %v1331, %v1323
    %v1764 = vpack.c.b16 %v1332, %v1324
    %v1765 = vpack.c.b16 %v1333, %v1325
    %v1766 = vpack.c.b16 %v1334, %v1326
    %v1767 = vpack.c.b16 %v1343, %v1335
    %v1768 = vpack.c.b16 %v1344, %v1336
    %v1769 = vpack.c.b16 %v1345, %v1337
    %v1770 = vpack.c.b16 %v1346, %v1338
    %v1771 = vpack.c.b16 %v1347, %v1339
    %v1772 = vpack.c.b16 %v1348, %v1340
    %v1773 = vpack.c.b16 %v1349, %v1341
    %v1774 = vpack.c.b16 %v1350, %v1342
    %v1775 = vpack.c.b16 %v1359, %v1351
    %v1776 = vpack.c.b16 %v1360, %v1352
    %v1777 = vpack.c.b16 %v1361, %v1353
    %v1778 = vpack.c.b16 %v1362, %v1354
    %v1779 = vpack.c.b16 %v1363, %v1355
    %v1780 = vpack.c.b16 %v1364, %v1356
    %v1781 = vpack.c.b16 %v1365, %v1357
    %v1782 = vpack.c.b16 %v1366, %v1358
    %v1783 = vpack.c.b16 %v1375, %v1367
    %v1784 = vpack.c.b16 %v1376, %v1368
    %v1785 = vpack.c.b16 %v1377, %v1369
    %v1786 = vpack.c.b16 %v1378, %v1370
    %v1787 = vpack.c.b16 %v1379, %v1371
    %v1788 = vpack.c.b16 %v1380, %v1372
    %v1789 = vpack.c.b16 %v1381, %v1373
    %v1790 = vpack.c.b16 %v1382, %v1374
    %v1791 = vpack.c.b16 %v1391, %v1383
    %v1792 = vpack.c.b16 %v1392, %v1384
    %v1793 = vpack.c.b16 %v1393, %v1385
    %v1794 = vpack.c.b16 %v1394, %v1386
    %v1795 = vpack.c.b16 %v1395, %v1387
    %v1796 = vpack.c.b16 %v1396, %v1388
    %v1797 = vpack.c.b16 %v1397, %v1389
    %v1798 = vpack.c.b16 %v1398, %v1390
    %v1799 = vpack.c.b16 %v1407, %v1399
    %v1800 = vpack.c.b16 %v1408, %v1400
    %v1801 = vpack.c.b16 %v1409, %v1401
    %v1802 = vpack.c.b16 %v1410, %v1402
    %v1803 = vpack.c.b16 %v1411, %v1403
    %v1804 = vpack.c.b16 %v1412, %v1404
    %v1805 = vpack.c.b16 %v1413, %v1405
    %v1806 = vpack.c.b16 %v1414, %v1406
    %v1807 = vpack.c.b16 %v1423, %v1415
    %v1808 = vpack.c.b16 %v1424, %v1416
    %v1809 = vpack.c.b16 %v1425, %v1417
    %v1810 = vpack.c.b16 %v1426, %v1418
    %v1811 = vpack.c.b16 %v1427, %v1419
    %v1812 = vpack.c.b16 %v1428, %v1420
    %v1813 = vpack.c.b16 %v1429, %v1421
    %v1814 = vpack.c.b16 %v1430, %v1422
    %v1815 = vpack.c.b16 %v1439, %v1431
    %v1816 = vpack.c.b16 %v1440, %v1432
    %v1817 = vpack.c.b16 %v1441, %v1433
    %v1818 = vpack.c.b16 %v1442, %v1434
    %v1819 = vpack.c.b16 %v1443, %v1435
    %v1820 = vpack.c.b16 %v1444, %v1436
    %v1821 = vpack.c.b16 %v1445, %v1437
    %v1822 = vpack.c.b16 %v1446, %v1438
    %v1823 = vpack.c.b16 %v1455, %v1447
    %v1824 = vpack.c.b16 %v1456, %v1448
    %v1825 = vpack.c.b16 %v1457, %v1449
    %v1826 = vpack.c.b16 %v1458, %v1450
    %v1827 = vpack.c.b16 %v1459, %v1451
    %v1828 = vpack.c.b16 %v1460, %v1452
    %v1829 = vpack.c.b16 %v1461, %v1453
    %v1830 = vpack.c.b16 %v1462, %v1454
    %v1831 = vpack.c.b16 %v1471, %v1463
    %v1832 = vpack.c.b16 %v1472, %v1464
    %v1833 = vpack.c.b16 %v1473, %v1465
    %v1834 = vpack.c.b16 %v1474, %v1466
    %v1835 = vpack.c.b16 %v1475, %v1467
    %v1836 = vpack.c.b16 %v1476, %v1468
    %v1837 = vpack.c.b16 %v1477, %v1469
    %v1838 = vpack.c.b16 %v1478, %v1470
    %v1839 = vpack.c.b16 %v1487, %v1479
    %v1840 = vpack.c.b16 %v1488, %v1480
    %v1841 = vpack.c.b16 %v1489, %v1481
    %v1842 = vpack.c.b16 %v1490, %v1482
    %v1843 = vpack.c.b16 %v1491, %v1483
    %v1844 = vpack.c.b16 %v1492, %v1484
    %v1845 = vpack.c.b16 %v1493, %v1485
    %v1846 = vpack.c.b16 %v1494, %v1486
    %v1847 = vpack.c.b16 %v1503, %v1495
    %v1848 = vpack.c.b16 %v1504, %v1496
    %v1849 = vpack.c.b16 %v1505, %v1497
    %v1850 = vpack.c.b16 %v1506, %v1498
    %v1851 = vpack.c.b16 %v1507, %v1499
    %v1852 = vpack.c.b16 %v1508, %v1500
    %v1853 = vpack.c.b16 %v1509, %v1501
    %v1854 = vpack.c.b16 %v1510, %v1502
    %v1855 = vpack.c.b16 %v1519, %v1511
    %v1856 = vpack.c.b16 %v1520, %v1512
    %v1857 = vpack.c.b16 %v1521, %v1513
    %v1858 = vpack.c.b16 %v1522, %v1514
    %v1859 = vpack.c.b16 %v1523, %v1515
    %v1860 = vpack.c.b16 %v1524, %v1516
    %v1861 = vpack.c.b16 %v1525, %v1517
    %v1862 = vpack.c.b16 %v1526, %v1518
    %v1863 = vpack.c.b16 %v1535, %v1527
    %v1864 = vpack.c.b16 %v1536, %v1528
    %v1865 = vpack.c.b16 %v1537, %v1529
    %v1866 = vpack.c.b16 %v1538, %v1530
    %v1867 = vpack.c.b16 %v1539, %v1531
    %v1868 = vpack.c.b16 %v1540, %v1532
    %v1869 = vpack.c.b16 %v1541, %v1533
    %v1870 = vpack.c.b16 %v1542, %v1534
    %v1871 = vpack.c.b16 %v1551, %v1543
    %v1872 = vpack.c.b16 %v1552, %v1544
    %v1873 = vpack.c.b16 %v1553, %v1545
    %v1874 = vpack.c.b16 %v1554, %v1546
    %v1875 = vpack.c.b16 %v1555, %v1547
    %v1876 = vpack.c.b16 %v1556, %v1548
    %v1877 = vpack.c.b16 %v1557, %v1549
    %v1878 = vpack.c.b16 %v1558, %v1550
    %v1879 = vpack.c.b16 %v1567, %v1559
    %v1880 = vpack.c.b16 %v1568, %v1560
    %v1881 = vpack.c.b16 %v1569, %v1561
    %v1882 = vpack.c.b16 %v1570, %v1562
    %v1883 = vpack.c.b16 %v1571, %v1563
    %v1884 = vpack.c.b16 %v1572, %v1564
    %v1885 = vpack.c.b16 %v1573, %v1565
    %v1886 = vpack.c.b16 %v1574, %v1566
    %v1887 = vpack.c.b16 %v1583, %v1575
    %v1888 = vpack.c.b16 %v1584, %v1576
    %v1889 = vpack.c.b16 %v1585, %v1577
    %v1890 = vpack.c.b16 %v1586, %v1578
    %v1891 = vpack.c.b16 %v1587, %v1579
    %v1892 = vpack.c.b16 %v1588, %v1580
    %v1893 = vpack.c.b16 %v1589, %v1581
    %v1894 = vpack.c.b16 %v1590, %v1582
    %v1895 = vpack.c.b16 %v1599, %v1591
    %v1896 = vpack.c.b16 %v1600, %v1592
    %v1897 = vpack.c.b16 %v1601, %v1593
    %v1898 = vpack.c.b16 %v1602, %v1594
    %v1899 = vpack.c.b16 %v1603, %v1595
    %v1900 = vpack.c.b16 %v1604, %v1596
    %v1901 = vpack.c.b16 %v1605, %v1597
    %v1902 = vpack.c.b16 %v1606, %v1598
    %v1903 = vpack.c.b16 %v1615, %v1607
    %v1904 = vpack.c.b16 %v1616, %v1608
    %v1905 = vpack.c.b16 %v1617, %v1609
    %v1906 = vpack.c.b16 %v1618, %v1610
    %v1907 = vpack.c.b16 %v1619, %v1611
    %v1908 = vpack.c.b16 %v1620, %v1612
    %v1909 = vpack.c.b16 %v1621, %v1613
    %v1910 = vpack.c.b16 %v1622, %v1614
    %v1911 = vpack.c.b16 %v1631, %v1623
    %v1912 = vpack.c.b16 %v1632, %v1624
    %v1913 = vpack.c.b16 %v1633, %v1625
    %v1914 = vpack.c.b16 %v1634, %v1626
    %v1915 = vpack.c.b16 %v1635, %v1627
    %v1916 = vpack.c.b16 %v1636, %v1628
    %v1917 = vpack.c.b16 %v1637, %v1629
    %v1918 = vpack.c.b16 %v1638, %v1630
    %v1919 = vpack.c.b16 %v1647, %v1639
    %v1920 = vpack.c.b16 %v1648, %v1640
    %v1921 = vpack.c.b16 %v1649, %v1641
    %v1922 = vpack.c.b16 %v1650, %v1642
    %v1923 = vpack.c.b16 %v1651, %v1643
    %v1924 = vpack.c.b16 %v1652, %v1644
    %v1925 = vpack.c.b16 %v1653, %v1645
    %v1926 = vpack.c.b16 %v1654, %v1646
    %v1927 = vpack.c.b16 %v1663, %v1655
    %v1928 = vpack.c.b16 %v1664, %v1656
    %v1929 = vpack.c.b16 %v1665, %v1657
    %v1930 = vpack.c.b16 %v1666, %v1658
    %v1931 = vpack.c.b16 %v1667, %v1659
    %v1932 = vpack.c.b16 %v1668, %v1660
    %v1933 = vpack.c.b16 %v1669, %v1661
    %v1934 = vpack.c.b16 %v1670, %v1662
    %v1935 = vpack.c.b16 %v1679, %v1671
    %v1936 = vpack.c.b16 %v1680, %v1672
    %v1937 = vpack.c.b16 %v1681, %v1673
    %v1938 = vpack.c.b16 %v1682, %v1674
    %v1939 = vpack.c.b16 %v1683, %v1675
    %v1940 = vpack.c.b16 %v1684, %v1676
    %v1941 = vpack.c.b16 %v1685, %v1677
    %v1942 = vpack.c.b16 %v1686, %v1678
    %2199 = vmatprep.subr.bf16.mxu0 %v1744
    %2200 = vmatpush1.bf16.msra.mxu0 %v1743
    %2201 = vmatprep.subr.bf16.mxu0 %v1736
    %2202 = vmatpush1.bf16.msra.mxu0 %v1735
    %2203 = vmatprep.subr.bf16.mxu0 %v1728
    %2204 = vmatpush1.bf16.msra.mxu0 %v1727
    %2205 = vmatprep.subr.bf16.mxu0 %v1720
    %2206 = vmatpush1.bf16.msra.mxu0 %v1719
    %2207 = vmatprep.subr.bf16.mxu0 %v1712
    %2208 = vmatpush1.bf16.msra.mxu0 %v1711
    %2209 = vmatprep.subr.bf16.mxu0 %v1704
    %2210 = vmatpush1.bf16.msra.mxu0 %v1703
    %2211 = vmatprep.subr.bf16.mxu0 %v1696
    %2212 = vmatpush1.bf16.msra.mxu0 %v1695
    %2213 = vmatprep.subr.bf16.mxu0 %v1688
    %2214 = vmatpush1.bf16.msra.mxu0 %v1687
    %2215 = vmatprep.subr.bf16.mxu0 %v1808
    %2216 = vmatpush2.bf16.msra.mxu0 %v1807
    %2217 = vmatprep.subr.bf16.mxu0 %v1800
    %2218 = vmatpush2.bf16.msra.mxu0 %v1799
    %2219 = vmatprep.subr.bf16.mxu0 %v1792
    %2220 = vmatpush2.bf16.msra.mxu0 %v1791
    %2221 = vmatprep.subr.bf16.mxu0 %v1784
    %2222 = vmatpush2.bf16.msra.mxu0 %v1783
    %2223 = vmatprep.subr.bf16.mxu0 %v1776
    %2224 = vmatpush2.bf16.msra.mxu0 %v1775
    %2225 = vmatprep.subr.bf16.mxu0 %v1768
    %2226 = vmatpush2.bf16.msra.mxu0 %v1767
    %2227 = vmatprep.subr.bf16.mxu0 %v1760
    %2228 = vmatpush2.bf16.msra.mxu0 %v1759
    %2229 = vmatprep.subr.bf16.mxu0 %v1752
    %2230 = vmatpush2.bf16.msra.mxu0 %v1751
    %2231 = vmatprep.mubr.bf16.mxu0 %v618
    %2232 = vmatmul.mubr.bf16.gmra.mxu0 %v617
    %v2233 = vpop.f32.mrf.mxu0
    %v2234 = vadd.f32 %v882, %v2233
    %v2235 = vpop.f32.mrf.mxu0
    %v2236 = vadd.f32 %v886, %v2235
    %v2237 = vpop.f32.mrf.mxu0
    %v2238 = vadd.f32 %v882, %v2237
    %v2239 = vpop.f32.mrf.mxu0
    %v2240 = vadd.f32 %v886, %v2239
    %2241 = vdwg.mxu0
    %2242 = vmatprep.subr.bf16.mxu0 %v1872
    %2243 = vmatpush1.bf16.msra.mxu0 %v1871
    %2244 = vmatprep.subr.bf16.mxu0 %v1864
    %2245 = vmatpush1.bf16.msra.mxu0 %v1863
    %2246 = vmatprep.subr.bf16.mxu0 %v1856
    %2247 = vmatpush1.bf16.msra.mxu0 %v1855
    %2248 = vmatprep.subr.bf16.mxu0 %v1848
    %2249 = vmatpush1.bf16.msra.mxu0 %v1847
    %2250 = vmatprep.subr.bf16.mxu0 %v1840
    %2251 = vmatpush1.bf16.msra.mxu0 %v1839
    %2252 = vmatprep.subr.bf16.mxu0 %v1832
    %2253 = vmatpush1.bf16.msra.mxu0 %v1831
    %2254 = vmatprep.subr.bf16.mxu0 %v1824
    %2255 = vmatpush1.bf16.msra.mxu0 %v1823
    %2256 = vmatprep.subr.bf16.mxu0 %v1816
    %2257 = vmatpush1.bf16.msra.mxu0 %v1815
    %2258 = vmatprep.subr.bf16.mxu0 %v1936
    %2259 = vmatpush2.bf16.msra.mxu0 %v1935
    %2260 = vmatprep.subr.bf16.mxu0 %v1928
    %2261 = vmatpush2.bf16.msra.mxu0 %v1927
    %2262 = vmatprep.subr.bf16.mxu0 %v1920
    %2263 = vmatpush2.bf16.msra.mxu0 %v1919
    %2264 = vmatprep.subr.bf16.mxu0 %v1912
    %2265 = vmatpush2.bf16.msra.mxu0 %v1911
    %2266 = vmatprep.subr.bf16.mxu0 %v1904
    %2267 = vmatpush2.bf16.msra.mxu0 %v1903
    %2268 = vmatprep.subr.bf16.mxu0 %v1896
    %2269 = vmatpush2.bf16.msra.mxu0 %v1895
    %2270 = vmatprep.subr.bf16.mxu0 %v1888
    %2271 = vmatpush2.bf16.msra.mxu0 %v1887
    %2272 = vmatprep.subr.bf16.mxu0 %v1880
    %2273 = vmatpush2.bf16.msra.mxu0 %v1879
    %2274 = vmatprep.mubr.bf16.mxu0 %v620
    %2275 = vmatmul.mubr.bf16.gmra.mxu0 %v619
    %v2276 = vpop.f32.mrf.mxu0
    %v2277 = vadd.f32 %v2234, %v2276
    %v2278 = vpop.f32.mrf.mxu0
    %v2279 = vadd.f32 %v2236, %v2278
    %v2280 = vpop.f32.mrf.mxu0
    %v2281 = vadd.f32 %v2238, %v2280
    %v2282 = vpop.f32.mrf.mxu0
    %v2283 = vadd.f32 %v2240, %v2282
    %2284 = vdwg.mxu0
    %2285 = vmatprep.subr.bf16.mxu0 %v1746
    %2286 = vmatpush1.bf16.msra.mxu0 %v1745
    %2287 = vmatprep.subr.bf16.mxu0 %v1738
    %2288 = vmatpush1.bf16.msra.mxu0 %v1737
    %2289 = vmatprep.subr.bf16.mxu0 %v1730
    %2290 = vmatpush1.bf16.msra.mxu0 %v1729
    %2291 = vmatprep.subr.bf16.mxu0 %v1722
    %2292 = vmatpush1.bf16.msra.mxu0 %v1721
    %2293 = vmatprep.subr.bf16.mxu0 %v1714
    %2294 = vmatpush1.bf16.msra.mxu0 %v1713
    %2295 = vmatprep.subr.bf16.mxu0 %v1706
    %2296 = vmatpush1.bf16.msra.mxu0 %v1705
    %2297 = vmatprep.subr.bf16.mxu0 %v1698
    %2298 = vmatpush1.bf16.msra.mxu0 %v1697
    %2299 = vmatprep.subr.bf16.mxu0 %v1690
    %2300 = vmatpush1.bf16.msra.mxu0 %v1689
    %2301 = vmatprep.subr.bf16.mxu0 %v1810
    %2302 = vmatpush2.bf16.msra.mxu0 %v1809
    %2303 = vmatprep.subr.bf16.mxu0 %v1802
    %2304 = vmatpush2.bf16.msra.mxu0 %v1801
    %2305 = vmatprep.subr.bf16.mxu0 %v1794
    %2306 = vmatpush2.bf16.msra.mxu0 %v1793
    %2307 = vmatprep.subr.bf16.mxu0 %v1786
    %2308 = vmatpush2.bf16.msra.mxu0 %v1785
    %2309 = vmatprep.subr.bf16.mxu0 %v1778
    %2310 = vmatpush2.bf16.msra.mxu0 %v1777
    %2311 = vmatprep.subr.bf16.mxu0 %v1770
    %2312 = vmatpush2.bf16.msra.mxu0 %v1769
    %2313 = vmatprep.subr.bf16.mxu0 %v1762
    %2314 = vmatpush2.bf16.msra.mxu0 %v1761
    %2315 = vmatprep.subr.bf16.mxu0 %v1754
    %2316 = vmatpush2.bf16.msra.mxu0 %v1753
    %2317 = vmatprep.mubr.bf16.mxu0 %v618
    %2318 = vmatmul.mubr.bf16.gmra.mxu0 %v617
    %v2319 = vpop.f32.mrf.mxu0
    %v2320 = vadd.f32 %v890, %v2319
    %v2321 = vpop.f32.mrf.mxu0
    %v2322 = vadd.f32 %v894, %v2321
    %v2323 = vpop.f32.mrf.mxu0
    %v2324 = vadd.f32 %v890, %v2323
    %v2325 = vpop.f32.mrf.mxu0
    %v2326 = vadd.f32 %v894, %v2325
    %2327 = vdwg.mxu0
    %2328 = vmatprep.subr.bf16.mxu0 %v1874
    %2329 = vmatpush1.bf16.msra.mxu0 %v1873
    %2330 = vmatprep.subr.bf16.mxu0 %v1866
    %2331 = vmatpush1.bf16.msra.mxu0 %v1865
    %2332 = vmatprep.subr.bf16.mxu0 %v1858
    %2333 = vmatpush1.bf16.msra.mxu0 %v1857
    %2334 = vmatprep.subr.bf16.mxu0 %v1850
    %2335 = vmatpush1.bf16.msra.mxu0 %v1849
    %2336 = vmatprep.subr.bf16.mxu0 %v1842
    %2337 = vmatpush1.bf16.msra.mxu0 %v1841
    %2338 = vmatprep.subr.bf16.mxu0 %v1834
    %2339 = vmatpush1.bf16.msra.mxu0 %v1833
    %2340 = vmatprep.subr.bf16.mxu0 %v1826
    %2341 = vmatpush1.bf16.msra.mxu0 %v1825
    %2342 = vmatprep.subr.bf16.mxu0 %v1818
    %2343 = vmatpush1.bf16.msra.mxu0 %v1817
    %2344 = vmatprep.subr.bf16.mxu0 %v1938
    %2345 = vmatpush2.bf16.msra.mxu0 %v1937
    %2346 = vmatprep.subr.bf16.mxu0 %v1930
    %2347 = vmatpush2.bf16.msra.mxu0 %v1929
    %2348 = vmatprep.subr.bf16.mxu0 %v1922
    %2349 = vmatpush2.bf16.msra.mxu0 %v1921
    %2350 = vmatprep.subr.bf16.mxu0 %v1914
    %2351 = vmatpush2.bf16.msra.mxu0 %v1913
    %2352 = vmatprep.subr.bf16.mxu0 %v1906
    %2353 = vmatpush2.bf16.msra.mxu0 %v1905
    %2354 = vmatprep.subr.bf16.mxu0 %v1898
    %2355 = vmatpush2.bf16.msra.mxu0 %v1897
    %2356 = vmatprep.subr.bf16.mxu0 %v1890
    %2357 = vmatpush2.bf16.msra.mxu0 %v1889
    %2358 = vmatprep.subr.bf16.mxu0 %v1882
    %2359 = vmatpush2.bf16.msra.mxu0 %v1881
    %2360 = vmatprep.mubr.bf16.mxu0 %v620
    %2361 = vmatmul.mubr.bf16.gmra.mxu0 %v619
    %v2362 = vpop.f32.mrf.mxu0
    %v2363 = vadd.f32 %v2320, %v2362
    %v2364 = vpop.f32.mrf.mxu0
    %v2365 = vadd.f32 %v2322, %v2364
    %v2366 = vpop.f32.mrf.mxu0
    %v2367 = vadd.f32 %v2324, %v2366
    %v2368 = vpop.f32.mrf.mxu0
    %v2369 = vadd.f32 %v2326, %v2368
    %2370 = vdwg.mxu0
    %2371 = vmatprep.subr.bf16.mxu0 %v1748
    %2372 = vmatpush1.bf16.msra.mxu0 %v1747
    %2373 = vmatprep.subr.bf16.mxu0 %v1740
    %2374 = vmatpush1.bf16.msra.mxu0 %v1739
    %2375 = vmatprep.subr.bf16.mxu0 %v1732
    %2376 = vmatpush1.bf16.msra.mxu0 %v1731
    %2377 = vmatprep.subr.bf16.mxu0 %v1724
    %2378 = vmatpush1.bf16.msra.mxu0 %v1723
    %2379 = vmatprep.subr.bf16.mxu0 %v1716
    %2380 = vmatpush1.bf16.msra.mxu0 %v1715
    %2381 = vmatprep.subr.bf16.mxu0 %v1708
    %2382 = vmatpush1.bf16.msra.mxu0 %v1707
    %2383 = vmatprep.subr.bf16.mxu0 %v1700
    %2384 = vmatpush1.bf16.msra.mxu0 %v1699
    %2385 = vmatprep.subr.bf16.mxu0 %v1692
    %2386 = vmatpush1.bf16.msra.mxu0 %v1691
    %2387 = vmatprep.subr.bf16.mxu0 %v1812
    %2388 = vmatpush2.bf16.msra.mxu0 %v1811
    %2389 = vmatprep.subr.bf16.mxu0 %v1804
    %2390 = vmatpush2.bf16.msra.mxu0 %v1803
    %2391 = vmatprep.subr.bf16.mxu0 %v1796
    %2392 = vmatpush2.bf16.msra.mxu0 %v1795
    %2393 = vmatprep.subr.bf16.mxu0 %v1788
    %2394 = vmatpush2.bf16.msra.mxu0 %v1787
    %2395 = vmatprep.subr.bf16.mxu0 %v1780
    %2396 = vmatpush2.bf16.msra.mxu0 %v1779
    %2397 = vmatprep.subr.bf16.mxu0 %v1772
    %2398 = vmatpush2.bf16.msra.mxu0 %v1771
    %2399 = vmatprep.subr.bf16.mxu0 %v1764
    %2400 = vmatpush2.bf16.msra.mxu0 %v1763
    %2401 = vmatprep.subr.bf16.mxu0 %v1756
    %2402 = vmatpush2.bf16.msra.mxu0 %v1755
    %2403 = vmatprep.mubr.bf16.mxu0 %v618
    %2404 = vmatmul.mubr.bf16.gmra.mxu0 %v617
    %v2405 = vpop.f32.mrf.mxu0
    %v2406 = vadd.f32 %v898, %v2405
    %v2407 = vpop.f32.mrf.mxu0
    %v2408 = vadd.f32 %v902, %v2407
    %v2409 = vpop.f32.mrf.mxu0
    %v2410 = vadd.f32 %v898, %v2409
    %v2411 = vpop.f32.mrf.mxu0
    %v2412 = vadd.f32 %v902, %v2411
    %2413 = vdwg.mxu0
    %2414 = vmatprep.subr.bf16.mxu0 %v1876
    %2415 = vmatpush1.bf16.msra.mxu0 %v1875
    %2416 = vmatprep.subr.bf16.mxu0 %v1868
    %2417 = vmatpush1.bf16.msra.mxu0 %v1867
    %2418 = vmatprep.subr.bf16.mxu0 %v1860
    %2419 = vmatpush1.bf16.msra.mxu0 %v1859
    %2420 = vmatprep.subr.bf16.mxu0 %v1852
    %2421 = vmatpush1.bf16.msra.mxu0 %v1851
    %2422 = vmatprep.subr.bf16.mxu0 %v1844
    %2423 = vmatpush1.bf16.msra.mxu0 %v1843
    %2424 = vmatprep.subr.bf16.mxu0 %v1836
    %2425 = vmatpush1.bf16.msra.mxu0 %v1835
    %2426 = vmatprep.subr.bf16.mxu0 %v1828
    %2427 = vmatpush1.bf16.msra.mxu0 %v1827
    %2428 = vmatprep.subr.bf16.mxu0 %v1820
    %2429 = vmatpush1.bf16.msra.mxu0 %v1819
    %2430 = vmatprep.subr.bf16.mxu0 %v1940
    %2431 = vmatpush2.bf16.msra.mxu0 %v1939
    %2432 = vmatprep.subr.bf16.mxu0 %v1932
    %2433 = vmatpush2.bf16.msra.mxu0 %v1931
    %2434 = vmatprep.subr.bf16.mxu0 %v1924
    %2435 = vmatpush2.bf16.msra.mxu0 %v1923
    %2436 = vmatprep.subr.bf16.mxu0 %v1916
    %2437 = vmatpush2.bf16.msra.mxu0 %v1915
    %2438 = vmatprep.subr.bf16.mxu0 %v1908
    %2439 = vmatpush2.bf16.msra.mxu0 %v1907
    %2440 = vmatprep.subr.bf16.mxu0 %v1900
    %2441 = vmatpush2.bf16.msra.mxu0 %v1899
    %2442 = vmatprep.subr.bf16.mxu0 %v1892
    %2443 = vmatpush2.bf16.msra.mxu0 %v1891
    %2444 = vmatprep.subr.bf16.mxu0 %v1884
    %2445 = vmatpush2.bf16.msra.mxu0 %v1883
    %2446 = vmatprep.mubr.bf16.mxu0 %v620
    %2447 = vmatmul.mubr.bf16.gmra.mxu0 %v619
    %v2448 = vpop.f32.mrf.mxu0
    %v2449 = vadd.f32 %v2406, %v2448
    %v2450 = vpop.f32.mrf.mxu0
    %v2451 = vadd.f32 %v2408, %v2450
    %v2452 = vpop.f32.mrf.mxu0
    %v2453 = vadd.f32 %v2410, %v2452
    %v2454 = vpop.f32.mrf.mxu0
    %v2455 = vadd.f32 %v2412, %v2454
    %2456 = vdwg.mxu0
    %2457 = vmatprep.subr.bf16.mxu0 %v1750
    %2458 = vmatpush1.bf16.msra.mxu0 %v1749
    %2459 = vmatprep.subr.bf16.mxu0 %v1742
    %2460 = vmatpush1.bf16.msra.mxu0 %v1741
    %2461 = vmatprep.subr.bf16.mxu0 %v1734
    %2462 = vmatpush1.bf16.msra.mxu0 %v1733
    %2463 = vmatprep.subr.bf16.mxu0 %v1726
    %2464 = vmatpush1.bf16.msra.mxu0 %v1725
    %2465 = vmatprep.subr.bf16.mxu0 %v1718
    %2466 = vmatpush1.bf16.msra.mxu0 %v1717
    %2467 = vmatprep.subr.bf16.mxu0 %v1710
    %2468 = vmatpush1.bf16.msra.mxu0 %v1709
    %2469 = vmatprep.subr.bf16.mxu0 %v1702
    %2470 = vmatpush1.bf16.msra.mxu0 %v1701
    %2471 = vmatprep.subr.bf16.mxu0 %v1694
    %2472 = vmatpush1.bf16.msra.mxu0 %v1693
    %2473 = vmatprep.subr.bf16.mxu0 %v1814
    %2474 = vmatpush2.bf16.msra.mxu0 %v1813
    %2475 = vmatprep.subr.bf16.mxu0 %v1806
    %2476 = vmatpush2.bf16.msra.mxu0 %v1805
    %2477 = vmatprep.subr.bf16.mxu0 %v1798
    %2478 = vmatpush2.bf16.msra.mxu0 %v1797
    %2479 = vmatprep.subr.bf16.mxu0 %v1790
    %2480 = vmatpush2.bf16.msra.mxu0 %v1789
    %2481 = vmatprep.subr.bf16.mxu0 %v1782
    %2482 = vmatpush2.bf16.msra.mxu0 %v1781
    %2483 = vmatprep.subr.bf16.mxu0 %v1774
    %2484 = vmatpush2.bf16.msra.mxu0 %v1773
    %2485 = vmatprep.subr.bf16.mxu0 %v1766
    %2486 = vmatpush2.bf16.msra.mxu0 %v1765
    %2487 = vmatprep.subr.bf16.mxu0 %v1758
    %2488 = vmatpush2.bf16.msra.mxu0 %v1757
    %2489 = vmatprep.mubr.bf16.mxu0 %v618
    %2490 = vmatmul.mubr.bf16.gmra.mxu0 %v617
    %v2491 = vpop.f32.mrf.mxu0
    %v2492 = vadd.f32 %v906, %v2491
    %v2493 = vpop.f32.mrf.mxu0
    %v2494 = vadd.f32 %v910, %v2493
    %v2495 = vpop.f32.mrf.mxu0
    %v2496 = vadd.f32 %v906, %v2495
    %v2497 = vpop.f32.mrf.mxu0
    %v2498 = vadd.f32 %v910, %v2497
    %2499 = vdwg.mxu0
    %2500 = vmatprep.subr.bf16.mxu0 %v1878
    %2501 = vmatpush1.bf16.msra.mxu0 %v1877
    %2502 = vmatprep.subr.bf16.mxu0 %v1870
    %2503 = vmatpush1.bf16.msra.mxu0 %v1869
    %2504 = vmatprep.subr.bf16.mxu0 %v1862
    %2505 = vmatpush1.bf16.msra.mxu0 %v1861
    %2506 = vmatprep.subr.bf16.mxu0 %v1854
    %2507 = vmatpush1.bf16.msra.mxu0 %v1853
    %2508 = vmatprep.subr.bf16.mxu0 %v1846
    %2509 = vmatpush1.bf16.msra.mxu0 %v1845
    %2510 = vmatprep.subr.bf16.mxu0 %v1838
    %2511 = vmatpush1.bf16.msra.mxu0 %v1837
    %2512 = vmatprep.subr.bf16.mxu0 %v1830
    %2513 = vmatpush1.bf16.msra.mxu0 %v1829
    %2514 = vmatprep.subr.bf16.mxu0 %v1822
    %2515 = vmatpush1.bf16.msra.mxu0 %v1821
    %2516 = vmatprep.subr.bf16.mxu0 %v1942
    %2517 = vmatpush2.bf16.msra.mxu0 %v1941
    %2518 = vmatprep.subr.bf16.mxu0 %v1934
    %2519 = vmatpush2.bf16.msra.mxu0 %v1933
    %2520 = vmatprep.subr.bf16.mxu0 %v1926
    %2521 = vmatpush2.bf16.msra.mxu0 %v1925
    %2522 = vmatprep.subr.bf16.mxu0 %v1918
    %2523 = vmatpush2.bf16.msra.mxu0 %v1917
    %2524 = vmatprep.subr.bf16.mxu0 %v1910
    %2525 = vmatpush2.bf16.msra.mxu0 %v1909
    %2526 = vmatprep.subr.bf16.mxu0 %v1902
    %2527 = vmatpush2.bf16.msra.mxu0 %v1901
    %2528 = vmatprep.subr.bf16.mxu0 %v1894
    %2529 = vmatpush2.bf16.msra.mxu0 %v1893
    %2530 = vmatprep.subr.bf16.mxu0 %v1886
    %2531 = vmatpush2.bf16.msra.mxu0 %v1885
    %2532 = vmatprep.mubr.bf16.mxu0 %v620
    %2533 = vmatmul.mubr.bf16.gmra.mxu0 %v619
    %v2534 = vpop.f32.mrf.mxu0
    %v2535 = vadd.f32 %v2492, %v2534
    %v2536 = vpop.f32.mrf.mxu0
    %v2537 = vadd.f32 %v2494, %v2536
    %v2538 = vpop.f32.mrf.mxu0
    %v2539 = vadd.f32 %v2496, %v2538
    %v2540 = vpop.f32.mrf.mxu0
    %v2541 = vadd.f32 %v2498, %v2540
    %2542 = vdwg.mxu0
    %v2543 = vmax.f32 %v2277, 0.0
    %v2544 = vmax.f32 %v2279, 0.0
    %v2545 = vmax.f32 %v2363, 0.0
    %v2546 = vmax.f32 %v2365, 0.0
    %v2547 = vmax.f32 %v2449, 0.0
    %v2548 = vmax.f32 %v2451, 0.0
    %v2549 = vmax.f32 %v2535, 0.0
    %v2550 = vmax.f32 %v2537, 0.0
    %v2551 = vmax.f32 %v2281, 0.0
    %v2552 = vmax.f32 %v2283, 0.0
    %v2553 = vmax.f32 %v2367, 0.0
    %v2554 = vmax.f32 %v2369, 0.0
    %v2555 = vmax.f32 %v2453, 0.0
    %v2556 = vmax.f32 %v2455, 0.0
    %v2557 = vmax.f32 %v2539, 0.0
    %v2558 = vmax.f32 %v2541, 0.0
    %v2559 = vpack.c.bf16 %v2551, %v2543
    %v2560 = vpack.c.bf16 %v2552, %v2544
    %v2561 = vpack.c.bf16 %v2553, %v2545
    %v2562 = vpack.c.bf16 %v2554, %v2546
    %v2563 = vpack.c.bf16 %v2555, %v2547
    %v2564 = vpack.c.bf16 %v2556, %v2548
    %v2565 = vpack.c.bf16 %v2557, %v2549
    %v2566 = vpack.c.bf16 %v2558, %v2550
    %v2567 = vld [vmem:[#allocation11] sm:$0xff]
    %v2568 = vld [vmem:[#allocation11 + $0x8] sm:$0xff]
    %v2569 = vld [vmem:[#allocation11 + $0x10] sm:$0xff]
    %v2570 = vld [vmem:[#allocation11 + $0x18] sm:$0xff]
    %v2571 = vld [vmem:[#allocation11 + $0x20] sm:$0xff]
    %v2572 = vld [vmem:[#allocation11 + $0x28] sm:$0xff]
    %v2573 = vld [vmem:[#allocation11 + $0x30] sm:$0xff]
    %v2574 = vld [vmem:[#allocation11 + $0x38] sm:$0xff]
    %v2575 = vld [vmem:[#allocation11 + $0x40] sm:$0xff]
    %v2576 = vld [vmem:[#allocation11 + $0x48] sm:$0xff]
    %v2577 = vld [vmem:[#allocation11 + $0x50] sm:$0xff]
    %v2578 = vld [vmem:[#allocation11 + $0x58] sm:$0xff]
    %v2579 = vld [vmem:[#allocation11 + $0x60] sm:$0xff]
    %v2580 = vld [vmem:[#allocation11 + $0x68] sm:$0xff]
    %v2581 = vld [vmem:[#allocation11 + $0x70] sm:$0xff]
    %v2582 = vld [vmem:[#allocation11 + $0x78] sm:$0xff]
    %v2583 = vld [vmem:[#allocation11 + $0x80] sm:$0xff]
    %v2584 = vld [vmem:[#allocation11 + $0x88] sm:$0xff]
    %v2585 = vld [vmem:[#allocation11 + $0x90] sm:$0xff]
    %v2586 = vld [vmem:[#allocation11 + $0x98] sm:$0xff]
    %v2587 = vld [vmem:[#allocation11 + $0xa0] sm:$0xff]
    %v2588 = vld [vmem:[#allocation11 + $0xa8] sm:$0xff]
    %v2589 = vld [vmem:[#allocation11 + $0xb0] sm:$0xff]
    %v2590 = vld [vmem:[#allocation11 + $0xb8] sm:$0xff]
    %v2591 = vld [vmem:[#allocation11 + $0xc0] sm:$0xff]
    %v2592 = vld [vmem:[#allocation11 + $0xc8] sm:$0xff]
    %v2593 = vld [vmem:[#allocation11 + $0xd0] sm:$0xff]
    %v2594 = vld [vmem:[#allocation11 + $0xd8] sm:$0xff]
    %v2595 = vld [vmem:[#allocation11 + $0xe0] sm:$0xff]
    %v2596 = vld [vmem:[#allocation11 + $0xe8] sm:$0xff]
    %v2597 = vld [vmem:[#allocation11 + $0xf0] sm:$0xff]
    %v2598 = vld [vmem:[#allocation11 + $0xf8] sm:$0xff]
    %v2599 = vld [vmem:[#allocation11 + $0x100] sm:$0xff]
    %v2600 = vld [vmem:[#allocation11 + $0x108] sm:$0xff]
    %v2601 = vld [vmem:[#allocation11 + $0x110] sm:$0xff]
    %v2602 = vld [vmem:[#allocation11 + $0x118] sm:$0xff]
    %v2603 = vld [vmem:[#allocation11 + $0x120] sm:$0xff]
    %v2604 = vld [vmem:[#allocation11 + $0x128] sm:$0xff]
    %v2605 = vld [vmem:[#allocation11 + $0x130] sm:$0xff]
    %v2606 = vld [vmem:[#allocation11 + $0x138] sm:$0xff]
    %v2607 = vld [vmem:[#allocation11 + $0x140] sm:$0xff]
    %v2608 = vld [vmem:[#allocation11 + $0x148] sm:$0xff]
    %v2609 = vld [vmem:[#allocation11 + $0x150] sm:$0xff]
    %v2610 = vld [vmem:[#allocation11 + $0x158] sm:$0xff]
    %v2611 = vld [vmem:[#allocation11 + $0x160] sm:$0xff]
    %v2612 = vld [vmem:[#allocation11 + $0x168] sm:$0xff]
    %v2613 = vld [vmem:[#allocation11 + $0x170] sm:$0xff]
    %v2614 = vld [vmem:[#allocation11 + $0x178] sm:$0xff]
    %v2615 = vld [vmem:[#allocation11 + $0x180] sm:$0xff]
    %v2616 = vld [vmem:[#allocation11 + $0x188] sm:$0xff]
    %v2617 = vld [vmem:[#allocation11 + $0x190] sm:$0xff]
    %v2618 = vld [vmem:[#allocation11 + $0x198] sm:$0xff]
    %v2619 = vld [vmem:[#allocation11 + $0x1a0] sm:$0xff]
    %v2620 = vld [vmem:[#allocation11 + $0x1a8] sm:$0xff]
    %v2621 = vld [vmem:[#allocation11 + $0x1b0] sm:$0xff]
    %v2622 = vld [vmem:[#allocation11 + $0x1b8] sm:$0xff]
    %v2623 = vld [vmem:[#allocation11 + $0x1c0] sm:$0xff]
    %v2624 = vld [vmem:[#allocation11 + $0x1c8] sm:$0xff]
    %v2625 = vld [vmem:[#allocation11 + $0x1d0] sm:$0xff]
    %v2626 = vld [vmem:[#allocation11 + $0x1d8] sm:$0xff]
    %v2627 = vld [vmem:[#allocation11 + $0x1e0] sm:$0xff]
    %v2628 = vld [vmem:[#allocation11 + $0x1e8] sm:$0xff]
    %v2629 = vld [vmem:[#allocation11 + $0x1f0] sm:$0xff]
    %v2630 = vld [vmem:[#allocation11 + $0x1f8] sm:$0xff]
    %v2631 = vld [vmem:[#allocation11 + $0x200] sm:$0xff]
    %v2632 = vld [vmem:[#allocation11 + $0x208] sm:$0xff]
    %v2633 = vld [vmem:[#allocation11 + $0x210] sm:$0xff]
    %v2634 = vld [vmem:[#allocation11 + $0x218] sm:$0xff]
    %v2635 = vld [vmem:[#allocation11 + $0x220] sm:$0xff]
    %v2636 = vld [vmem:[#allocation11 + $0x228] sm:$0xff]
    %v2637 = vld [vmem:[#allocation11 + $0x230] sm:$0xff]
    %v2638 = vld [vmem:[#allocation11 + $0x238] sm:$0xff]
    %v2639 = vld [vmem:[#allocation11 + $0x240] sm:$0xff]
    %v2640 = vld [vmem:[#allocation11 + $0x248] sm:$0xff]
    %v2641 = vld [vmem:[#allocation11 + $0x250] sm:$0xff]
    %v2642 = vld [vmem:[#allocation11 + $0x258] sm:$0xff]
    %v2643 = vld [vmem:[#allocation11 + $0x260] sm:$0xff]
    %v2644 = vld [vmem:[#allocation11 + $0x268] sm:$0xff]
    %v2645 = vld [vmem:[#allocation11 + $0x270] sm:$0xff]
    %v2646 = vld [vmem:[#allocation11 + $0x278] sm:$0xff]
    %v2647 = vld [vmem:[#allocation11 + $0x280] sm:$0xff]
    %v2648 = vld [vmem:[#allocation11 + $0x288] sm:$0xff]
    %v2649 = vld [vmem:[#allocation11 + $0x290] sm:$0xff]
    %v2650 = vld [vmem:[#allocation11 + $0x298] sm:$0xff]
    %v2651 = vld [vmem:[#allocation11 + $0x2a0] sm:$0xff]
    %v2652 = vld [vmem:[#allocation11 + $0x2a8] sm:$0xff]
    %v2653 = vld [vmem:[#allocation11 + $0x2b0] sm:$0xff]
    %v2654 = vld [vmem:[#allocation11 + $0x2b8] sm:$0xff]
    %v2655 = vld [vmem:[#allocation11 + $0x2c0] sm:$0xff]
    %v2656 = vld [vmem:[#allocation11 + $0x2c8] sm:$0xff]
    %v2657 = vld [vmem:[#allocation11 + $0x2d0] sm:$0xff]
    %v2658 = vld [vmem:[#allocation11 + $0x2d8] sm:$0xff]
    %v2659 = vld [vmem:[#allocation11 + $0x2e0] sm:$0xff]
    %v2660 = vld [vmem:[#allocation11 + $0x2e8] sm:$0xff]
    %v2661 = vld [vmem:[#allocation11 + $0x2f0] sm:$0xff]
    %v2662 = vld [vmem:[#allocation11 + $0x2f8] sm:$0xff]
    %v2663 = vld [vmem:[#allocation11 + $0x300] sm:$0xff]
    %v2664 = vld [vmem:[#allocation11 + $0x308] sm:$0xff]
    %v2665 = vld [vmem:[#allocation11 + $0x310] sm:$0xff]
    %v2666 = vld [vmem:[#allocation11 + $0x318] sm:$0xff]
    %v2667 = vld [vmem:[#allocation11 + $0x320] sm:$0xff]
    %v2668 = vld [vmem:[#allocation11 + $0x328] sm:$0xff]
    %v2669 = vld [vmem:[#allocation11 + $0x330] sm:$0xff]
    %v2670 = vld [vmem:[#allocation11 + $0x338] sm:$0xff]
    %v2671 = vld [vmem:[#allocation11 + $0x340] sm:$0xff]
    %v2672 = vld [vmem:[#allocation11 + $0x348] sm:$0xff]
    %v2673 = vld [vmem:[#allocation11 + $0x350] sm:$0xff]
    %v2674 = vld [vmem:[#allocation11 + $0x358] sm:$0xff]
    %v2675 = vld [vmem:[#allocation11 + $0x360] sm:$0xff]
    %v2676 = vld [vmem:[#allocation11 + $0x368] sm:$0xff]
    %v2677 = vld [vmem:[#allocation11 + $0x370] sm:$0xff]
    %v2678 = vld [vmem:[#allocation11 + $0x378] sm:$0xff]
    %v2679 = vld [vmem:[#allocation11 + $0x380] sm:$0xff]
    %v2680 = vld [vmem:[#allocation11 + $0x388] sm:$0xff]
    %v2681 = vld [vmem:[#allocation11 + $0x390] sm:$0xff]
    %v2682 = vld [vmem:[#allocation11 + $0x398] sm:$0xff]
    %v2683 = vld [vmem:[#allocation11 + $0x3a0] sm:$0xff]
    %v2684 = vld [vmem:[#allocation11 + $0x3a8] sm:$0xff]
    %v2685 = vld [vmem:[#allocation11 + $0x3b0] sm:$0xff]
    %v2686 = vld [vmem:[#allocation11 + $0x3b8] sm:$0xff]
    %v2687 = vld [vmem:[#allocation11 + $0x3c0] sm:$0xff]
    %v2688 = vld [vmem:[#allocation11 + $0x3c8] sm:$0xff]
    %v2689 = vld [vmem:[#allocation11 + $0x3d0] sm:$0xff]
    %v2690 = vld [vmem:[#allocation11 + $0x3d8] sm:$0xff]
    %v2691 = vld [vmem:[#allocation11 + $0x3e0] sm:$0xff]
    %v2692 = vld [vmem:[#allocation11 + $0x3e8] sm:$0xff]
    %v2693 = vld [vmem:[#allocation11 + $0x3f0] sm:$0xff]
    %v2694 = vld [vmem:[#allocation11 + $0x3f8] sm:$0xff]
    %v2695 = vld [vmem:[#allocation11 + $0x400] sm:$0xff]
    %v2696 = vld [vmem:[#allocation11 + $0x408] sm:$0xff]
    %v2697 = vld [vmem:[#allocation11 + $0x410] sm:$0xff]
    %v2698 = vld [vmem:[#allocation11 + $0x418] sm:$0xff]
    %v2699 = vld [vmem:[#allocation11 + $0x420] sm:$0xff]
    %v2700 = vld [vmem:[#allocation11 + $0x428] sm:$0xff]
    %v2701 = vld [vmem:[#allocation11 + $0x430] sm:$0xff]
    %v2702 = vld [vmem:[#allocation11 + $0x438] sm:$0xff]
    %v2703 = vld [vmem:[#allocation11 + $0x440] sm:$0xff]
    %v2704 = vld [vmem:[#allocation11 + $0x448] sm:$0xff]
    %v2705 = vld [vmem:[#allocation11 + $0x450] sm:$0xff]
    %v2706 = vld [vmem:[#allocation11 + $0x458] sm:$0xff]
    %v2707 = vld [vmem:[#allocation11 + $0x460] sm:$0xff]
    %v2708 = vld [vmem:[#allocation11 + $0x468] sm:$0xff]
    %v2709 = vld [vmem:[#allocation11 + $0x470] sm:$0xff]
    %v2710 = vld [vmem:[#allocation11 + $0x478] sm:$0xff]
    %v2711 = vld [vmem:[#allocation11 + $0x480] sm:$0xff]
    %v2712 = vld [vmem:[#allocation11 + $0x488] sm:$0xff]
    %v2713 = vld [vmem:[#allocation11 + $0x490] sm:$0xff]
    %v2714 = vld [vmem:[#allocation11 + $0x498] sm:$0xff]
    %v2715 = vld [vmem:[#allocation11 + $0x4a0] sm:$0xff]
    %v2716 = vld [vmem:[#allocation11 + $0x4a8] sm:$0xff]
    %v2717 = vld [vmem:[#allocation11 + $0x4b0] sm:$0xff]
    %v2718 = vld [vmem:[#allocation11 + $0x4b8] sm:$0xff]
    %v2719 = vld [vmem:[#allocation11 + $0x4c0] sm:$0xff]
    %v2720 = vld [vmem:[#allocation11 + $0x4c8] sm:$0xff]
    %v2721 = vld [vmem:[#allocation11 + $0x4d0] sm:$0xff]
    %v2722 = vld [vmem:[#allocation11 + $0x4d8] sm:$0xff]
    %v2723 = vld [vmem:[#allocation11 + $0x4e0] sm:$0xff]
    %v2724 = vld [vmem:[#allocation11 + $0x4e8] sm:$0xff]
    %v2725 = vld [vmem:[#allocation11 + $0x4f0] sm:$0xff]
    %v2726 = vld [vmem:[#allocation11 + $0x4f8] sm:$0xff]
    %v2727 = vld [vmem:[#allocation11 + $0x500] sm:$0xff]
    %v2728 = vld [vmem:[#allocation11 + $0x508] sm:$0xff]
    %v2729 = vld [vmem:[#allocation11 + $0x510] sm:$0xff]
    %v2730 = vld [vmem:[#allocation11 + $0x518] sm:$0xff]
    %v2731 = vld [vmem:[#allocation11 + $0x520] sm:$0xff]
    %v2732 = vld [vmem:[#allocation11 + $0x528] sm:$0xff]
    %v2733 = vld [vmem:[#allocation11 + $0x530] sm:$0xff]
    %v2734 = vld [vmem:[#allocation11 + $0x538] sm:$0xff]
    %v2735 = vld [vmem:[#allocation11 + $0x540] sm:$0xff]
    %v2736 = vld [vmem:[#allocation11 + $0x548] sm:$0xff]
    %v2737 = vld [vmem:[#allocation11 + $0x550] sm:$0xff]
    %v2738 = vld [vmem:[#allocation11 + $0x558] sm:$0xff]
    %v2739 = vld [vmem:[#allocation11 + $0x560] sm:$0xff]
    %v2740 = vld [vmem:[#allocation11 + $0x568] sm:$0xff]
    %v2741 = vld [vmem:[#allocation11 + $0x570] sm:$0xff]
    %v2742 = vld [vmem:[#allocation11 + $0x578] sm:$0xff]
    %v2743 = vld [vmem:[#allocation11 + $0x580] sm:$0xff]
    %v2744 = vld [vmem:[#allocation11 + $0x588] sm:$0xff]
    %v2745 = vld [vmem:[#allocation11 + $0x590] sm:$0xff]
    %v2746 = vld [vmem:[#allocation11 + $0x598] sm:$0xff]
    %v2747 = vld [vmem:[#allocation11 + $0x5a0] sm:$0xff]
    %v2748 = vld [vmem:[#allocation11 + $0x5a8] sm:$0xff]
    %v2749 = vld [vmem:[#allocation11 + $0x5b0] sm:$0xff]
    %v2750 = vld [vmem:[#allocation11 + $0x5b8] sm:$0xff]
    %v2751 = vld [vmem:[#allocation11 + $0x5c0] sm:$0xff]
    %v2752 = vld [vmem:[#allocation11 + $0x5c8] sm:$0xff]
    %v2753 = vld [vmem:[#allocation11 + $0x5d0] sm:$0xff]
    %v2754 = vld [vmem:[#allocation11 + $0x5d8] sm:$0xff]
    %v2755 = vld [vmem:[#allocation11 + $0x5e0] sm:$0xff]
    %v2756 = vld [vmem:[#allocation11 + $0x5e8] sm:$0xff]
    %v2757 = vld [vmem:[#allocation11 + $0x5f0] sm:$0xff]
    %v2758 = vld [vmem:[#allocation11 + $0x5f8] sm:$0xff]
    %v2759 = vld [vmem:[#allocation11 + $0x600] sm:$0xff]
    %v2760 = vld [vmem:[#allocation11 + $0x608] sm:$0xff]
    %v2761 = vld [vmem:[#allocation11 + $0x610] sm:$0xff]
    %v2762 = vld [vmem:[#allocation11 + $0x618] sm:$0xff]
    %v2763 = vld [vmem:[#allocation11 + $0x620] sm:$0xff]
    %v2764 = vld [vmem:[#allocation11 + $0x628] sm:$0xff]
    %v2765 = vld [vmem:[#allocation11 + $0x630] sm:$0xff]
    %v2766 = vld [vmem:[#allocation11 + $0x638] sm:$0xff]
    %v2767 = vld [vmem:[#allocation11 + $0x640] sm:$0xff]
    %v2768 = vld [vmem:[#allocation11 + $0x648] sm:$0xff]
    %v2769 = vld [vmem:[#allocation11 + $0x650] sm:$0xff]
    %v2770 = vld [vmem:[#allocation11 + $0x658] sm:$0xff]
    %v2771 = vld [vmem:[#allocation11 + $0x660] sm:$0xff]
    %v2772 = vld [vmem:[#allocation11 + $0x668] sm:$0xff]
    %v2773 = vld [vmem:[#allocation11 + $0x670] sm:$0xff]
    %v2774 = vld [vmem:[#allocation11 + $0x678] sm:$0xff]
    %v2775 = vld [vmem:[#allocation11 + $0x680] sm:$0xff]
    %v2776 = vld [vmem:[#allocation11 + $0x688] sm:$0xff]
    %v2777 = vld [vmem:[#allocation11 + $0x690] sm:$0xff]
    %v2778 = vld [vmem:[#allocation11 + $0x698] sm:$0xff]
    %v2779 = vld [vmem:[#allocation11 + $0x6a0] sm:$0xff]
    %v2780 = vld [vmem:[#allocation11 + $0x6a8] sm:$0xff]
    %v2781 = vld [vmem:[#allocation11 + $0x6b0] sm:$0xff]
    %v2782 = vld [vmem:[#allocation11 + $0x6b8] sm:$0xff]
    %v2783 = vld [vmem:[#allocation11 + $0x6c0] sm:$0xff]
    %v2784 = vld [vmem:[#allocation11 + $0x6c8] sm:$0xff]
    %v2785 = vld [vmem:[#allocation11 + $0x6d0] sm:$0xff]
    %v2786 = vld [vmem:[#allocation11 + $0x6d8] sm:$0xff]
    %v2787 = vld [vmem:[#allocation11 + $0x6e0] sm:$0xff]
    %v2788 = vld [vmem:[#allocation11 + $0x6e8] sm:$0xff]
    %v2789 = vld [vmem:[#allocation11 + $0x6f0] sm:$0xff]
    %v2790 = vld [vmem:[#allocation11 + $0x6f8] sm:$0xff]
    %v2791 = vld [vmem:[#allocation11 + $0x700] sm:$0xff]
    %v2792 = vld [vmem:[#allocation11 + $0x708] sm:$0xff]
    %v2793 = vld [vmem:[#allocation11 + $0x710] sm:$0xff]
    %v2794 = vld [vmem:[#allocation11 + $0x718] sm:$0xff]
    %v2795 = vld [vmem:[#allocation11 + $0x720] sm:$0xff]
    %v2796 = vld [vmem:[#allocation11 + $0x728] sm:$0xff]
    %v2797 = vld [vmem:[#allocation11 + $0x730] sm:$0xff]
    %v2798 = vld [vmem:[#allocation11 + $0x738] sm:$0xff]
    %v2799 = vld [vmem:[#allocation11 + $0x740] sm:$0xff]
    %v2800 = vld [vmem:[#allocation11 + $0x748] sm:$0xff]
    %v2801 = vld [vmem:[#allocation11 + $0x750] sm:$0xff]
    %v2802 = vld [vmem:[#allocation11 + $0x758] sm:$0xff]
    %v2803 = vld [vmem:[#allocation11 + $0x760] sm:$0xff]
    %v2804 = vld [vmem:[#allocation11 + $0x768] sm:$0xff]
    %v2805 = vld [vmem:[#allocation11 + $0x770] sm:$0xff]
    %v2806 = vld [vmem:[#allocation11 + $0x778] sm:$0xff]
    %v2807 = vld [vmem:[#allocation11 + $0x780] sm:$0xff]
    %v2808 = vld [vmem:[#allocation11 + $0x788] sm:$0xff]
    %v2809 = vld [vmem:[#allocation11 + $0x790] sm:$0xff]
    %v2810 = vld [vmem:[#allocation11 + $0x798] sm:$0xff]
    %v2811 = vld [vmem:[#allocation11 + $0x7a0] sm:$0xff]
    %v2812 = vld [vmem:[#allocation11 + $0x7a8] sm:$0xff]
    %v2813 = vld [vmem:[#allocation11 + $0x7b0] sm:$0xff]
    %v2814 = vld [vmem:[#allocation11 + $0x7b8] sm:$0xff]
    %v2815 = vld [vmem:[#allocation11 + $0x7c0] sm:$0xff]
    %v2816 = vld [vmem:[#allocation11 + $0x7c8] sm:$0xff]
    %v2817 = vld [vmem:[#allocation11 + $0x7d0] sm:$0xff]
    %v2818 = vld [vmem:[#allocation11 + $0x7d8] sm:$0xff]
    %v2819 = vld [vmem:[#allocation11 + $0x7e0] sm:$0xff]
    %v2820 = vld [vmem:[#allocation11 + $0x7e8] sm:$0xff]
    %v2821 = vld [vmem:[#allocation11 + $0x7f0] sm:$0xff]
    %v2822 = vld [vmem:[#allocation11 + $0x7f8] sm:$0xff]
    %v2823 = vld [vmem:[%s6] sm:$0xf]
    %v2825 = vlaneseq
    %v2826 = vshrl.u32 %v2825, 7
    %v2827 = vsub.s32 0, %v2826
    %v2828 = vrot.slane %v2823, %v2827
    %v2829 = vlaneseq
    %v2830 = vshrl.u32 %v2829, 7
    %v2831 = vsub.s32 1, %v2830
    %v2832 = vrot.slane %v2823, %v2831
    %v2833 = vlaneseq
    %v2834 = vshrl.u32 %v2833, 7
    %v2835 = vsub.s32 2, %v2834
    %v2836 = vrot.slane %v2823, %v2835
    %v2837 = vlaneseq
    %v2838 = vshrl.u32 %v2837, 7
    %v2839 = vsub.s32 3, %v2838
    %v2840 = vrot.slane %v2823, %v2839
    %v3101 = vunpack.c.l.b16 %v2567
    %v3102 = vunpack.c.h.b16 %v2567
    %v3103 = vunpack.c.l.b16 %v2568
    %v3104 = vunpack.c.h.b16 %v2568
    %v3105 = vunpack.c.l.b16 %v2569
    %v3106 = vunpack.c.h.b16 %v2569
    %v3107 = vunpack.c.l.b16 %v2570
    %v3108 = vunpack.c.h.b16 %v2570
    %v3109 = vunpack.c.l.b16 %v2571
    %v3110 = vunpack.c.h.b16 %v2571
    %v3111 = vunpack.c.l.b16 %v2572
    %v3112 = vunpack.c.h.b16 %v2572
    %v3113 = vunpack.c.l.b16 %v2573
    %v3114 = vunpack.c.h.b16 %v2573
    %v3115 = vunpack.c.l.b16 %v2574
    %v3116 = vunpack.c.h.b16 %v2574
    %v3117 = vunpack.c.l.b16 %v2575
    %v3118 = vunpack.c.h.b16 %v2575
    %v3119 = vunpack.c.l.b16 %v2576
    %v3120 = vunpack.c.h.b16 %v2576
    %v3121 = vunpack.c.l.b16 %v2577
    %v3122 = vunpack.c.h.b16 %v2577
    %v3123 = vunpack.c.l.b16 %v2578
    %v3124 = vunpack.c.h.b16 %v2578
    %v3125 = vunpack.c.l.b16 %v2579
    %v3126 = vunpack.c.h.b16 %v2579
    %v3127 = vunpack.c.l.b16 %v2580
    %v3128 = vunpack.c.h.b16 %v2580
    %v3129 = vunpack.c.l.b16 %v2581
    %v3130 = vunpack.c.h.b16 %v2581
    %v3131 = vunpack.c.l.b16 %v2582
    %v3132 = vunpack.c.h.b16 %v2582
    %v3133 = vunpack.c.l.b16 %v2583
    %v3134 = vunpack.c.h.b16 %v2583
    %v3135 = vunpack.c.l.b16 %v2584
    %v3136 = vunpack.c.h.b16 %v2584
    %v3137 = vunpack.c.l.b16 %v2585
    %v3138 = vunpack.c.h.b16 %v2585
    %v3139 = vunpack.c.l.b16 %v2586
    %v3140 = vunpack.c.h.b16 %v2586
    %v3141 = vunpack.c.l.b16 %v2587
    %v3142 = vunpack.c.h.b16 %v2587
    %v3143 = vunpack.c.l.b16 %v2588
    %v3144 = vunpack.c.h.b16 %v2588
    %v3145 = vunpack.c.l.b16 %v2589
    %v3146 = vunpack.c.h.b16 %v2589
    %v3147 = vunpack.c.l.b16 %v2590
    %v3148 = vunpack.c.h.b16 %v2590
    %v3149 = vunpack.c.l.b16 %v2591
    %v3150 = vunpack.c.h.b16 %v2591
    %v3151 = vunpack.c.l.b16 %v2592
    %v3152 = vunpack.c.h.b16 %v2592
    %v3153 = vunpack.c.l.b16 %v2593
    %v3154 = vunpack.c.h.b16 %v2593
    %v3155 = vunpack.c.l.b16 %v2594
    %v3156 = vunpack.c.h.b16 %v2594
    %v3157 = vunpack.c.l.b16 %v2595
    %v3158 = vunpack.c.h.b16 %v2595
    %v3159 = vunpack.c.l.b16 %v2596
    %v3160 = vunpack.c.h.b16 %v2596
    %v3161 = vunpack.c.l.b16 %v2597
    %v3162 = vunpack.c.h.b16 %v2597
    %v3163 = vunpack.c.l.b16 %v2598
    %v3164 = vunpack.c.h.b16 %v2598
    %v3165 = vunpack.c.l.b16 %v2599
    %v3166 = vunpack.c.h.b16 %v2599
    %v3167 = vunpack.c.l.b16 %v2600
    %v3168 = vunpack.c.h.b16 %v2600
    %v3169 = vunpack.c.l.b16 %v2601
    %v3170 = vunpack.c.h.b16 %v2601
    %v3171 = vunpack.c.l.b16 %v2602
    %v3172 = vunpack.c.h.b16 %v2602
    %v3173 = vunpack.c.l.b16 %v2603
    %v3174 = vunpack.c.h.b16 %v2603
    %v3175 = vunpack.c.l.b16 %v2604
    %v3176 = vunpack.c.h.b16 %v2604
    %v3177 = vunpack.c.l.b16 %v2605
    %v3178 = vunpack.c.h.b16 %v2605
    %v3179 = vunpack.c.l.b16 %v2606
    %v3180 = vunpack.c.h.b16 %v2606
    %v3181 = vunpack.c.l.b16 %v2607
    %v3182 = vunpack.c.h.b16 %v2607
    %v3183 = vunpack.c.l.b16 %v2608
    %v3184 = vunpack.c.h.b16 %v2608
    %v3185 = vunpack.c.l.b16 %v2609
    %v3186 = vunpack.c.h.b16 %v2609
    %v3187 = vunpack.c.l.b16 %v2610
    %v3188 = vunpack.c.h.b16 %v2610
    %v3189 = vunpack.c.l.b16 %v2611
    %v3190 = vunpack.c.h.b16 %v2611
    %v3191 = vunpack.c.l.b16 %v2612
    %v3192 = vunpack.c.h.b16 %v2612
    %v3193 = vunpack.c.l.b16 %v2613
    %v3194 = vunpack.c.h.b16 %v2613
    %v3195 = vunpack.c.l.b16 %v2614
    %v3196 = vunpack.c.h.b16 %v2614
    %v3197 = vunpack.c.l.b16 %v2615
    %v3198 = vunpack.c.h.b16 %v2615
    %v3199 = vunpack.c.l.b16 %v2616
    %v3200 = vunpack.c.h.b16 %v2616
    %v3201 = vunpack.c.l.b16 %v2617
    %v3202 = vunpack.c.h.b16 %v2617
    %v3203 = vunpack.c.l.b16 %v2618
    %v3204 = vunpack.c.h.b16 %v2618
    %v3205 = vunpack.c.l.b16 %v2619
    %v3206 = vunpack.c.h.b16 %v2619
    %v3207 = vunpack.c.l.b16 %v2620
    %v3208 = vunpack.c.h.b16 %v2620
    %v3209 = vunpack.c.l.b16 %v2621
    %v3210 = vunpack.c.h.b16 %v2621
    %v3211 = vunpack.c.l.b16 %v2622
    %v3212 = vunpack.c.h.b16 %v2622
    %v3213 = vunpack.c.l.b16 %v2623
    %v3214 = vunpack.c.h.b16 %v2623
    %v3215 = vunpack.c.l.b16 %v2624
    %v3216 = vunpack.c.h.b16 %v2624
    %v3217 = vunpack.c.l.b16 %v2625
    %v3218 = vunpack.c.h.b16 %v2625
    %v3219 = vunpack.c.l.b16 %v2626
    %v3220 = vunpack.c.h.b16 %v2626
    %v3221 = vunpack.c.l.b16 %v2627
    %v3222 = vunpack.c.h.b16 %v2627
    %v3223 = vunpack.c.l.b16 %v2628
    %v3224 = vunpack.c.h.b16 %v2628
    %v3225 = vunpack.c.l.b16 %v2629
    %v3226 = vunpack.c.h.b16 %v2629
    %v3227 = vunpack.c.l.b16 %v2630
    %v3228 = vunpack.c.h.b16 %v2630
    %v3229 = vunpack.c.l.b16 %v2631
    %v3230 = vunpack.c.h.b16 %v2631
    %v3231 = vunpack.c.l.b16 %v2632
    %v3232 = vunpack.c.h.b16 %v2632
    %v3233 = vunpack.c.l.b16 %v2633
    %v3234 = vunpack.c.h.b16 %v2633
    %v3235 = vunpack.c.l.b16 %v2634
    %v3236 = vunpack.c.h.b16 %v2634
    %v3237 = vunpack.c.l.b16 %v2635
    %v3238 = vunpack.c.h.b16 %v2635
    %v3239 = vunpack.c.l.b16 %v2636
    %v3240 = vunpack.c.h.b16 %v2636
    %v3241 = vunpack.c.l.b16 %v2637
    %v3242 = vunpack.c.h.b16 %v2637
    %v3243 = vunpack.c.l.b16 %v2638
    %v3244 = vunpack.c.h.b16 %v2638
    %v3245 = vunpack.c.l.b16 %v2639
    %v3246 = vunpack.c.h.b16 %v2639
    %v3247 = vunpack.c.l.b16 %v2640
    %v3248 = vunpack.c.h.b16 %v2640
    %v3249 = vunpack.c.l.b16 %v2641
    %v3250 = vunpack.c.h.b16 %v2641
    %v3251 = vunpack.c.l.b16 %v2642
    %v3252 = vunpack.c.h.b16 %v2642
    %v3253 = vunpack.c.l.b16 %v2643
    %v3254 = vunpack.c.h.b16 %v2643
    %v3255 = vunpack.c.l.b16 %v2644
    %v3256 = vunpack.c.h.b16 %v2644
    %v3257 = vunpack.c.l.b16 %v2645
    %v3258 = vunpack.c.h.b16 %v2645
    %v3259 = vunpack.c.l.b16 %v2646
    %v3260 = vunpack.c.h.b16 %v2646
    %v3261 = vunpack.c.l.b16 %v2647
    %v3262 = vunpack.c.h.b16 %v2647
    %v3263 = vunpack.c.l.b16 %v2648
    %v3264 = vunpack.c.h.b16 %v2648
    %v3265 = vunpack.c.l.b16 %v2649
    %v3266 = vunpack.c.h.b16 %v2649
    %v3267 = vunpack.c.l.b16 %v2650
    %v3268 = vunpack.c.h.b16 %v2650
    %v3269 = vunpack.c.l.b16 %v2651
    %v3270 = vunpack.c.h.b16 %v2651
    %v3271 = vunpack.c.l.b16 %v2652
    %v3272 = vunpack.c.h.b16 %v2652
    %v3273 = vunpack.c.l.b16 %v2653
    %v3274 = vunpack.c.h.b16 %v2653
    %v3275 = vunpack.c.l.b16 %v2654
    %v3276 = vunpack.c.h.b16 %v2654
    %v3277 = vunpack.c.l.b16 %v2655
    %v3278 = vunpack.c.h.b16 %v2655
    %v3279 = vunpack.c.l.b16 %v2656
    %v3280 = vunpack.c.h.b16 %v2656
    %v3281 = vunpack.c.l.b16 %v2657
    %v3282 = vunpack.c.h.b16 %v2657
    %v3283 = vunpack.c.l.b16 %v2658
    %v3284 = vunpack.c.h.b16 %v2658
    %v3285 = vunpack.c.l.b16 %v2659
    %v3286 = vunpack.c.h.b16 %v2659
    %v3287 = vunpack.c.l.b16 %v2660
    %v3288 = vunpack.c.h.b16 %v2660
    %v3289 = vunpack.c.l.b16 %v2661
    %v3290 = vunpack.c.h.b16 %v2661
    %v3291 = vunpack.c.l.b16 %v2662
    %v3292 = vunpack.c.h.b16 %v2662
    %v3293 = vunpack.c.l.b16 %v2663
    %v3294 = vunpack.c.h.b16 %v2663
    %v3295 = vunpack.c.l.b16 %v2664
    %v3296 = vunpack.c.h.b16 %v2664
    %v3297 = vunpack.c.l.b16 %v2665
    %v3298 = vunpack.c.h.b16 %v2665
    %v3299 = vunpack.c.l.b16 %v2666
    %v3300 = vunpack.c.h.b16 %v2666
    %v3301 = vunpack.c.l.b16 %v2667
    %v3302 = vunpack.c.h.b16 %v2667
    %v3303 = vunpack.c.l.b16 %v2668
    %v3304 = vunpack.c.h.b16 %v2668
    %v3305 = vunpack.c.l.b16 %v2669
    %v3306 = vunpack.c.h.b16 %v2669
    %v3307 = vunpack.c.l.b16 %v2670
    %v3308 = vunpack.c.h.b16 %v2670
    %v3309 = vunpack.c.l.b16 %v2671
    %v3310 = vunpack.c.h.b16 %v2671
    %v3311 = vunpack.c.l.b16 %v2672
    %v3312 = vunpack.c.h.b16 %v2672
    %v3313 = vunpack.c.l.b16 %v2673
    %v3314 = vunpack.c.h.b16 %v2673
    %v3315 = vunpack.c.l.b16 %v2674
    %v3316 = vunpack.c.h.b16 %v2674
    %v3317 = vunpack.c.l.b16 %v2675
    %v3318 = vunpack.c.h.b16 %v2675
    %v3319 = vunpack.c.l.b16 %v2676
    %v3320 = vunpack.c.h.b16 %v2676
    %v3321 = vunpack.c.l.b16 %v2677
    %v3322 = vunpack.c.h.b16 %v2677
    %v3323 = vunpack.c.l.b16 %v2678
    %v3324 = vunpack.c.h.b16 %v2678
    %v3325 = vunpack.c.l.b16 %v2679
    %v3326 = vunpack.c.h.b16 %v2679
    %v3327 = vunpack.c.l.b16 %v2680
    %v3328 = vunpack.c.h.b16 %v2680
    %v3329 = vunpack.c.l.b16 %v2681
    %v3330 = vunpack.c.h.b16 %v2681
    %v3331 = vunpack.c.l.b16 %v2682
    %v3332 = vunpack.c.h.b16 %v2682
    %v3333 = vunpack.c.l.b16 %v2683
    %v3334 = vunpack.c.h.b16 %v2683
    %v3335 = vunpack.c.l.b16 %v2684
    %v3336 = vunpack.c.h.b16 %v2684
    %v3337 = vunpack.c.l.b16 %v2685
    %v3338 = vunpack.c.h.b16 %v2685
    %v3339 = vunpack.c.l.b16 %v2686
    %v3340 = vunpack.c.h.b16 %v2686
    %v3341 = vunpack.c.l.b16 %v2687
    %v3342 = vunpack.c.h.b16 %v2687
    %v3343 = vunpack.c.l.b16 %v2688
    %v3344 = vunpack.c.h.b16 %v2688
    %v3345 = vunpack.c.l.b16 %v2689
    %v3346 = vunpack.c.h.b16 %v2689
    %v3347 = vunpack.c.l.b16 %v2690
    %v3348 = vunpack.c.h.b16 %v2690
    %v3349 = vunpack.c.l.b16 %v2691
    %v3350 = vunpack.c.h.b16 %v2691
    %v3351 = vunpack.c.l.b16 %v2692
    %v3352 = vunpack.c.h.b16 %v2692
    %v3353 = vunpack.c.l.b16 %v2693
    %v3354 = vunpack.c.h.b16 %v2693
    %v3355 = vunpack.c.l.b16 %v2694
    %v3356 = vunpack.c.h.b16 %v2694
    %v3357 = vunpack.c.l.b16 %v2695
    %v3358 = vunpack.c.h.b16 %v2695
    %v3359 = vunpack.c.l.b16 %v2696
    %v3360 = vunpack.c.h.b16 %v2696
    %v3361 = vunpack.c.l.b16 %v2697
    %v3362 = vunpack.c.h.b16 %v2697
    %v3363 = vunpack.c.l.b16 %v2698
    %v3364 = vunpack.c.h.b16 %v2698
    %v3365 = vunpack.c.l.b16 %v2699
    %v3366 = vunpack.c.h.b16 %v2699
    %v3367 = vunpack.c.l.b16 %v2700
    %v3368 = vunpack.c.h.b16 %v2700
    %v3369 = vunpack.c.l.b16 %v2701
    %v3370 = vunpack.c.h.b16 %v2701
    %v3371 = vunpack.c.l.b16 %v2702
    %v3372 = vunpack.c.h.b16 %v2702
    %v3373 = vunpack.c.l.b16 %v2703
    %v3374 = vunpack.c.h.b16 %v2703
    %v3375 = vunpack.c.l.b16 %v2704
    %v3376 = vunpack.c.h.b16 %v2704
    %v3377 = vunpack.c.l.b16 %v2705
    %v3378 = vunpack.c.h.b16 %v2705
    %v3379 = vunpack.c.l.b16 %v2706
    %v3380 = vunpack.c.h.b16 %v2706
    %v3381 = vunpack.c.l.b16 %v2707
    %v3382 = vunpack.c.h.b16 %v2707
    %v3383 = vunpack.c.l.b16 %v2708
    %v3384 = vunpack.c.h.b16 %v2708
    %v3385 = vunpack.c.l.b16 %v2709
    %v3386 = vunpack.c.h.b16 %v2709
    %v3387 = vunpack.c.l.b16 %v2710
    %v3388 = vunpack.c.h.b16 %v2710
    %v3389 = vunpack.c.l.b16 %v2711
    %v3390 = vunpack.c.h.b16 %v2711
    %v3391 = vunpack.c.l.b16 %v2712
    %v3392 = vunpack.c.h.b16 %v2712
    %v3393 = vunpack.c.l.b16 %v2713
    %v3394 = vunpack.c.h.b16 %v2713
    %v3395 = vunpack.c.l.b16 %v2714
    %v3396 = vunpack.c.h.b16 %v2714
    %v3397 = vunpack.c.l.b16 %v2715
    %v3398 = vunpack.c.h.b16 %v2715
    %v3399 = vunpack.c.l.b16 %v2716
    %v3400 = vunpack.c.h.b16 %v2716
    %v3401 = vunpack.c.l.b16 %v2717
    %v3402 = vunpack.c.h.b16 %v2717
    %v3403 = vunpack.c.l.b16 %v2718
    %v3404 = vunpack.c.h.b16 %v2718
    %v3405 = vunpack.c.l.b16 %v2719
    %v3406 = vunpack.c.h.b16 %v2719
    %v3407 = vunpack.c.l.b16 %v2720
    %v3408 = vunpack.c.h.b16 %v2720
    %v3409 = vunpack.c.l.b16 %v2721
    %v3410 = vunpack.c.h.b16 %v2721
    %v3411 = vunpack.c.l.b16 %v2722
    %v3412 = vunpack.c.h.b16 %v2722
    %v3413 = vunpack.c.l.b16 %v2723
    %v3414 = vunpack.c.h.b16 %v2723
    %v3415 = vunpack.c.l.b16 %v2724
    %v3416 = vunpack.c.h.b16 %v2724
    %v3417 = vunpack.c.l.b16 %v2725
    %v3418 = vunpack.c.h.b16 %v2725
    %v3419 = vunpack.c.l.b16 %v2726
    %v3420 = vunpack.c.h.b16 %v2726
    %v3421 = vunpack.c.l.b16 %v2727
    %v3422 = vunpack.c.h.b16 %v2727
    %v3423 = vunpack.c.l.b16 %v2728
    %v3424 = vunpack.c.h.b16 %v2728
    %v3425 = vunpack.c.l.b16 %v2729
    %v3426 = vunpack.c.h.b16 %v2729
    %v3427 = vunpack.c.l.b16 %v2730
    %v3428 = vunpack.c.h.b16 %v2730
    %v3429 = vunpack.c.l.b16 %v2731
    %v3430 = vunpack.c.h.b16 %v2731
    %v3431 = vunpack.c.l.b16 %v2732
    %v3432 = vunpack.c.h.b16 %v2732
    %v3433 = vunpack.c.l.b16 %v2733
    %v3434 = vunpack.c.h.b16 %v2733
    %v3435 = vunpack.c.l.b16 %v2734
    %v3436 = vunpack.c.h.b16 %v2734
    %v3437 = vunpack.c.l.b16 %v2735
    %v3438 = vunpack.c.h.b16 %v2735
    %v3439 = vunpack.c.l.b16 %v2736
    %v3440 = vunpack.c.h.b16 %v2736
    %v3441 = vunpack.c.l.b16 %v2737
    %v3442 = vunpack.c.h.b16 %v2737
    %v3443 = vunpack.c.l.b16 %v2738
    %v3444 = vunpack.c.h.b16 %v2738
    %v3445 = vunpack.c.l.b16 %v2739
    %v3446 = vunpack.c.h.b16 %v2739
    %v3447 = vunpack.c.l.b16 %v2740
    %v3448 = vunpack.c.h.b16 %v2740
    %v3449 = vunpack.c.l.b16 %v2741
    %v3450 = vunpack.c.h.b16 %v2741
    %v3451 = vunpack.c.l.b16 %v2742
    %v3452 = vunpack.c.h.b16 %v2742
    %v3453 = vunpack.c.l.b16 %v2743
    %v3454 = vunpack.c.h.b16 %v2743
    %v3455 = vunpack.c.l.b16 %v2744
    %v3456 = vunpack.c.h.b16 %v2744
    %v3457 = vunpack.c.l.b16 %v2745
    %v3458 = vunpack.c.h.b16 %v2745
    %v3459 = vunpack.c.l.b16 %v2746
    %v3460 = vunpack.c.h.b16 %v2746
    %v3461 = vunpack.c.l.b16 %v2747
    %v3462 = vunpack.c.h.b16 %v2747
    %v3463 = vunpack.c.l.b16 %v2748
    %v3464 = vunpack.c.h.b16 %v2748
    %v3465 = vunpack.c.l.b16 %v2749
    %v3466 = vunpack.c.h.b16 %v2749
    %v3467 = vunpack.c.l.b16 %v2750
    %v3468 = vunpack.c.h.b16 %v2750
    %v3469 = vunpack.c.l.b16 %v2751
    %v3470 = vunpack.c.h.b16 %v2751
    %v3471 = vunpack.c.l.b16 %v2752
    %v3472 = vunpack.c.h.b16 %v2752
    %v3473 = vunpack.c.l.b16 %v2753
    %v3474 = vunpack.c.h.b16 %v2753
    %v3475 = vunpack.c.l.b16 %v2754
    %v3476 = vunpack.c.h.b16 %v2754
    %v3477 = vunpack.c.l.b16 %v2755
    %v3478 = vunpack.c.h.b16 %v2755
    %v3479 = vunpack.c.l.b16 %v2756
    %v3480 = vunpack.c.h.b16 %v2756
    %v3481 = vunpack.c.l.b16 %v2757
    %v3482 = vunpack.c.h.b16 %v2757
    %v3483 = vunpack.c.l.b16 %v2758
    %v3484 = vunpack.c.h.b16 %v2758
    %v3485 = vunpack.c.l.b16 %v2759
    %v3486 = vunpack.c.h.b16 %v2759
    %v3487 = vunpack.c.l.b16 %v2760
    %v3488 = vunpack.c.h.b16 %v2760
    %v3489 = vunpack.c.l.b16 %v2761
    %v3490 = vunpack.c.h.b16 %v2761
    %v3491 = vunpack.c.l.b16 %v2762
    %v3492 = vunpack.c.h.b16 %v2762
    %v3493 = vunpack.c.l.b16 %v2763
    %v3494 = vunpack.c.h.b16 %v2763
    %v3495 = vunpack.c.l.b16 %v2764
    %v3496 = vunpack.c.h.b16 %v2764
    %v3497 = vunpack.c.l.b16 %v2765
    %v3498 = vunpack.c.h.b16 %v2765
    %v3499 = vunpack.c.l.b16 %v2766
    %v3500 = vunpack.c.h.b16 %v2766
    %v3501 = vunpack.c.l.b16 %v2767
    %v3502 = vunpack.c.h.b16 %v2767
    %v3503 = vunpack.c.l.b16 %v2768
    %v3504 = vunpack.c.h.b16 %v2768
    %v3505 = vunpack.c.l.b16 %v2769
    %v3506 = vunpack.c.h.b16 %v2769
    %v3507 = vunpack.c.l.b16 %v2770
    %v3508 = vunpack.c.h.b16 %v2770
    %v3509 = vunpack.c.l.b16 %v2771
    %v3510 = vunpack.c.h.b16 %v2771
    %v3511 = vunpack.c.l.b16 %v2772
    %v3512 = vunpack.c.h.b16 %v2772
    %v3513 = vunpack.c.l.b16 %v2773
    %v3514 = vunpack.c.h.b16 %v2773
    %v3515 = vunpack.c.l.b16 %v2774
    %v3516 = vunpack.c.h.b16 %v2774
    %v3517 = vunpack.c.l.b16 %v2775
    %v3518 = vunpack.c.h.b16 %v2775
    %v3519 = vunpack.c.l.b16 %v2776
    %v3520 = vunpack.c.h.b16 %v2776
    %v3521 = vunpack.c.l.b16 %v2777
    %v3522 = vunpack.c.h.b16 %v2777
    %v3523 = vunpack.c.l.b16 %v2778
    %v3524 = vunpack.c.h.b16 %v2778
    %v3525 = vunpack.c.l.b16 %v2779
    %v3526 = vunpack.c.h.b16 %v2779
    %v3527 = vunpack.c.l.b16 %v2780
    %v3528 = vunpack.c.h.b16 %v2780
    %v3529 = vunpack.c.l.b16 %v2781
    %v3530 = vunpack.c.h.b16 %v2781
    %v3531 = vunpack.c.l.b16 %v2782
    %v3532 = vunpack.c.h.b16 %v2782
    %v3533 = vunpack.c.l.b16 %v2783
    %v3534 = vunpack.c.h.b16 %v2783
    %v3535 = vunpack.c.l.b16 %v2784
    %v3536 = vunpack.c.h.b16 %v2784
    %v3537 = vunpack.c.l.b16 %v2785
    %v3538 = vunpack.c.h.b16 %v2785
    %v3539 = vunpack.c.l.b16 %v2786
    %v3540 = vunpack.c.h.b16 %v2786
    %v3541 = vunpack.c.l.b16 %v2787
    %v3542 = vunpack.c.h.b16 %v2787
    %v3543 = vunpack.c.l.b16 %v2788
    %v3544 = vunpack.c.h.b16 %v2788
    %v3545 = vunpack.c.l.b16 %v2789
    %v3546 = vunpack.c.h.b16 %v2789
    %v3547 = vunpack.c.l.b16 %v2790
    %v3548 = vunpack.c.h.b16 %v2790
    %v3549 = vunpack.c.l.b16 %v2791
    %v3550 = vunpack.c.h.b16 %v2791
    %v3551 = vunpack.c.l.b16 %v2792
    %v3552 = vunpack.c.h.b16 %v2792
    %v3553 = vunpack.c.l.b16 %v2793
    %v3554 = vunpack.c.h.b16 %v2793
    %v3555 = vunpack.c.l.b16 %v2794
    %v3556 = vunpack.c.h.b16 %v2794
    %v3557 = vunpack.c.l.b16 %v2795
    %v3558 = vunpack.c.h.b16 %v2795
    %v3559 = vunpack.c.l.b16 %v2796
    %v3560 = vunpack.c.h.b16 %v2796
    %v3561 = vunpack.c.l.b16 %v2797
    %v3562 = vunpack.c.h.b16 %v2797
    %v3563 = vunpack.c.l.b16 %v2798
    %v3564 = vunpack.c.h.b16 %v2798
    %v3565 = vunpack.c.l.b16 %v2799
    %v3566 = vunpack.c.h.b16 %v2799
    %v3567 = vunpack.c.l.b16 %v2800
    %v3568 = vunpack.c.h.b16 %v2800
    %v3569 = vunpack.c.l.b16 %v2801
    %v3570 = vunpack.c.h.b16 %v2801
    %v3571 = vunpack.c.l.b16 %v2802
    %v3572 = vunpack.c.h.b16 %v2802
    %v3573 = vunpack.c.l.b16 %v2803
    %v3574 = vunpack.c.h.b16 %v2803
    %v3575 = vunpack.c.l.b16 %v2804
    %v3576 = vunpack.c.h.b16 %v2804
    %v3577 = vunpack.c.l.b16 %v2805
    %v3578 = vunpack.c.h.b16 %v2805
    %v3579 = vunpack.c.l.b16 %v2806
    %v3580 = vunpack.c.h.b16 %v2806
    %v3581 = vunpack.c.l.b16 %v2807
    %v3582 = vunpack.c.h.b16 %v2807
    %v3583 = vunpack.c.l.b16 %v2808
    %v3584 = vunpack.c.h.b16 %v2808
    %v3585 = vunpack.c.l.b16 %v2809
    %v3586 = vunpack.c.h.b16 %v2809
    %v3587 = vunpack.c.l.b16 %v2810
    %v3588 = vunpack.c.h.b16 %v2810
    %v3589 = vunpack.c.l.b16 %v2811
    %v3590 = vunpack.c.h.b16 %v2811
    %v3591 = vunpack.c.l.b16 %v2812
    %v3592 = vunpack.c.h.b16 %v2812
    %v3593 = vunpack.c.l.b16 %v2813
    %v3594 = vunpack.c.h.b16 %v2813
    %v3595 = vunpack.c.l.b16 %v2814
    %v3596 = vunpack.c.h.b16 %v2814
    %v3597 = vunpack.c.l.b16 %v2815
    %v3598 = vunpack.c.h.b16 %v2815
    %v3599 = vunpack.c.l.b16 %v2816
    %v3600 = vunpack.c.h.b16 %v2816
    %v3601 = vunpack.c.l.b16 %v2817
    %v3602 = vunpack.c.h.b16 %v2817
    %v3603 = vunpack.c.l.b16 %v2818
    %v3604 = vunpack.c.h.b16 %v2818
    %v3605 = vunpack.c.l.b16 %v2819
    %v3606 = vunpack.c.h.b16 %v2819
    %v3607 = vunpack.c.l.b16 %v2820
    %v3608 = vunpack.c.h.b16 %v2820
    %v3609 = vunpack.c.l.b16 %v2821
    %v3610 = vunpack.c.h.b16 %v2821
    %v3611 = vunpack.c.l.b16 %v2822
    %v3612 = vunpack.c.h.b16 %v2822
    %v3613 = vpack.c.b16 %v3105, %v3101
    %v3614 = vpack.c.b16 %v3106, %v3102
    %v3615 = vpack.c.b16 %v3107, %v3103
    %v3616 = vpack.c.b16 %v3108, %v3104
    %v3617 = vpack.c.b16 %v3113, %v3109
    %v3618 = vpack.c.b16 %v3114, %v3110
    %v3619 = vpack.c.b16 %v3115, %v3111
    %v3620 = vpack.c.b16 %v3116, %v3112
    %v3621 = vpack.c.b16 %v3121, %v3117
    %v3622 = vpack.c.b16 %v3122, %v3118
    %v3623 = vpack.c.b16 %v3123, %v3119
    %v3624 = vpack.c.b16 %v3124, %v3120
    %v3625 = vpack.c.b16 %v3129, %v3125
    %v3626 = vpack.c.b16 %v3130, %v3126
    %v3627 = vpack.c.b16 %v3131, %v3127
    %v3628 = vpack.c.b16 %v3132, %v3128
    %v3629 = vpack.c.b16 %v3137, %v3133
    %v3630 = vpack.c.b16 %v3138, %v3134
    %v3631 = vpack.c.b16 %v3139, %v3135
    %v3632 = vpack.c.b16 %v3140, %v3136
    %v3633 = vpack.c.b16 %v3145, %v3141
    %v3634 = vpack.c.b16 %v3146, %v3142
    %v3635 = vpack.c.b16 %v3147, %v3143
    %v3636 = vpack.c.b16 %v3148, %v3144
    %v3637 = vpack.c.b16 %v3153, %v3149
    %v3638 = vpack.c.b16 %v3154, %v3150
    %v3639 = vpack.c.b16 %v3155, %v3151
    %v3640 = vpack.c.b16 %v3156, %v3152
    %v3641 = vpack.c.b16 %v3161, %v3157
    %v3642 = vpack.c.b16 %v3162, %v3158
    %v3643 = vpack.c.b16 %v3163, %v3159
    %v3644 = vpack.c.b16 %v3164, %v3160
    %v3645 = vpack.c.b16 %v3169, %v3165
    %v3646 = vpack.c.b16 %v3170, %v3166
    %v3647 = vpack.c.b16 %v3171, %v3167
    %v3648 = vpack.c.b16 %v3172, %v3168
    %v3649 = vpack.c.b16 %v3177, %v3173
    %v3650 = vpack.c.b16 %v3178, %v3174
    %v3651 = vpack.c.b16 %v3179, %v3175
    %v3652 = vpack.c.b16 %v3180, %v3176
    %v3653 = vpack.c.b16 %v3185, %v3181
    %v3654 = vpack.c.b16 %v3186, %v3182
    %v3655 = vpack.c.b16 %v3187, %v3183
    %v3656 = vpack.c.b16 %v3188, %v3184
    %v3657 = vpack.c.b16 %v3193, %v3189
    %v3658 = vpack.c.b16 %v3194, %v3190
    %v3659 = vpack.c.b16 %v3195, %v3191
    %v3660 = vpack.c.b16 %v3196, %v3192
    %v3661 = vpack.c.b16 %v3201, %v3197
    %v3662 = vpack.c.b16 %v3202, %v3198
    %v3663 = vpack.c.b16 %v3203, %v3199
    %v3664 = vpack.c.b16 %v3204, %v3200
    %v3665 = vpack.c.b16 %v3209, %v3205
    %v3666 = vpack.c.b16 %v3210, %v3206
    %v3667 = vpack.c.b16 %v3211, %v3207
    %v3668 = vpack.c.b16 %v3212, %v3208
    %v3669 = vpack.c.b16 %v3217, %v3213
    %v3670 = vpack.c.b16 %v3218, %v3214
    %v3671 = vpack.c.b16 %v3219, %v3215
    %v3672 = vpack.c.b16 %v3220, %v3216
    %v3673 = vpack.c.b16 %v3225, %v3221
    %v3674 = vpack.c.b16 %v3226, %v3222
    %v3675 = vpack.c.b16 %v3227, %v3223
    %v3676 = vpack.c.b16 %v3228, %v3224
    %v3677 = vpack.c.b16 %v3233, %v3229
    %v3678 = vpack.c.b16 %v3234, %v3230
    %v3679 = vpack.c.b16 %v3235, %v3231
    %v3680 = vpack.c.b16 %v3236, %v3232
    %v3681 = vpack.c.b16 %v3241, %v3237
    %v3682 = vpack.c.b16 %v3242, %v3238
    %v3683 = vpack.c.b16 %v3243, %v3239
    %v3684 = vpack.c.b16 %v3244, %v3240
    %v3685 = vpack.c.b16 %v3249, %v3245
    %v3686 = vpack.c.b16 %v3250, %v3246
    %v3687 = vpack.c.b16 %v3251, %v3247
    %v3688 = vpack.c.b16 %v3252, %v3248
    %v3689 = vpack.c.b16 %v3257, %v3253
    %v3690 = vpack.c.b16 %v3258, %v3254
    %v3691 = vpack.c.b16 %v3259, %v3255
    %v3692 = vpack.c.b16 %v3260, %v3256
    %v3693 = vpack.c.b16 %v3265, %v3261
    %v3694 = vpack.c.b16 %v3266, %v3262
    %v3695 = vpack.c.b16 %v3267, %v3263
    %v3696 = vpack.c.b16 %v3268, %v3264
    %v3697 = vpack.c.b16 %v3273, %v3269
    %v3698 = vpack.c.b16 %v3274, %v3270
    %v3699 = vpack.c.b16 %v3275, %v3271
    %v3700 = vpack.c.b16 %v3276, %v3272
    %v3701 = vpack.c.b16 %v3281, %v3277
    %v3702 = vpack.c.b16 %v3282, %v3278
    %v3703 = vpack.c.b16 %v3283, %v3279
    %v3704 = vpack.c.b16 %v3284, %v3280
    %v3705 = vpack.c.b16 %v3289, %v3285
    %v3706 = vpack.c.b16 %v3290, %v3286
    %v3707 = vpack.c.b16 %v3291, %v3287
    %v3708 = vpack.c.b16 %v3292, %v3288
    %v3709 = vpack.c.b16 %v3297, %v3293
    %v3710 = vpack.c.b16 %v3298, %v3294
    %v3711 = vpack.c.b16 %v3299, %v3295
    %v3712 = vpack.c.b16 %v3300, %v3296
    %v3713 = vpack.c.b16 %v3305, %v3301
    %v3714 = vpack.c.b16 %v3306, %v3302
    %v3715 = vpack.c.b16 %v3307, %v3303
    %v3716 = vpack.c.b16 %v3308, %v3304
    %v3717 = vpack.c.b16 %v3313, %v3309
    %v3718 = vpack.c.b16 %v3314, %v3310
    %v3719 = vpack.c.b16 %v3315, %v3311
    %v3720 = vpack.c.b16 %v3316, %v3312
    %v3721 = vpack.c.b16 %v3321, %v3317
    %v3722 = vpack.c.b16 %v3322, %v3318
    %v3723 = vpack.c.b16 %v3323, %v3319
    %v3724 = vpack.c.b16 %v3324, %v3320
    %v3725 = vpack.c.b16 %v3329, %v3325
    %v3726 = vpack.c.b16 %v3330, %v3326
    %v3727 = vpack.c.b16 %v3331, %v3327
    %v3728 = vpack.c.b16 %v3332, %v3328
    %v3729 = vpack.c.b16 %v3337, %v3333
    %v3730 = vpack.c.b16 %v3338, %v3334
    %v3731 = vpack.c.b16 %v3339, %v3335
    %v3732 = vpack.c.b16 %v3340, %v3336
    %v3733 = vpack.c.b16 %v3345, %v3341
    %v3734 = vpack.c.b16 %v3346, %v3342
    %v3735 = vpack.c.b16 %v3347, %v3343
    %v3736 = vpack.c.b16 %v3348, %v3344
    %v3737 = vpack.c.b16 %v3353, %v3349
    %v3738 = vpack.c.b16 %v3354, %v3350
    %v3739 = vpack.c.b16 %v3355, %v3351
    %v3740 = vpack.c.b16 %v3356, %v3352
    %v3741 = vpack.c.b16 %v3361, %v3357
    %v3742 = vpack.c.b16 %v3362, %v3358
    %v3743 = vpack.c.b16 %v3363, %v3359
    %v3744 = vpack.c.b16 %v3364, %v3360
    %v3745 = vpack.c.b16 %v3369, %v3365
    %v3746 = vpack.c.b16 %v3370, %v3366
    %v3747 = vpack.c.b16 %v3371, %v3367
    %v3748 = vpack.c.b16 %v3372, %v3368
    %v3749 = vpack.c.b16 %v3377, %v3373
    %v3750 = vpack.c.b16 %v3378, %v3374
    %v3751 = vpack.c.b16 %v3379, %v3375
    %v3752 = vpack.c.b16 %v3380, %v3376
    %v3753 = vpack.c.b16 %v3385, %v3381
    %v3754 = vpack.c.b16 %v3386, %v3382
    %v3755 = vpack.c.b16 %v3387, %v3383
    %v3756 = vpack.c.b16 %v3388, %v3384
    %v3757 = vpack.c.b16 %v3393, %v3389
    %v3758 = vpack.c.b16 %v3394, %v3390
    %v3759 = vpack.c.b16 %v3395, %v3391
    %v3760 = vpack.c.b16 %v3396, %v3392
    %v3761 = vpack.c.b16 %v3401, %v3397
    %v3762 = vpack.c.b16 %v3402, %v3398
    %v3763 = vpack.c.b16 %v3403, %v3399
    %v3764 = vpack.c.b16 %v3404, %v3400
    %v3765 = vpack.c.b16 %v3409, %v3405
    %v3766 = vpack.c.b16 %v3410, %v3406
    %v3767 = vpack.c.b16 %v3411, %v3407
    %v3768 = vpack.c.b16 %v3412, %v3408
    %v3769 = vpack.c.b16 %v3417, %v3413
    %v3770 = vpack.c.b16 %v3418, %v3414
    %v3771 = vpack.c.b16 %v3419, %v3415
    %v3772 = vpack.c.b16 %v3420, %v3416
    %v3773 = vpack.c.b16 %v3425, %v3421
    %v3774 = vpack.c.b16 %v3426, %v3422
    %v3775 = vpack.c.b16 %v3427, %v3423
    %v3776 = vpack.c.b16 %v3428, %v3424
    %v3777 = vpack.c.b16 %v3433, %v3429
    %v3778 = vpack.c.b16 %v3434, %v3430
    %v3779 = vpack.c.b16 %v3435, %v3431
    %v3780 = vpack.c.b16 %v3436, %v3432
    %v3781 = vpack.c.b16 %v3441, %v3437
    %v3782 = vpack.c.b16 %v3442, %v3438
    %v3783 = vpack.c.b16 %v3443, %v3439
    %v3784 = vpack.c.b16 %v3444, %v3440
    %v3785 = vpack.c.b16 %v3449, %v3445
    %v3786 = vpack.c.b16 %v3450, %v3446
    %v3787 = vpack.c.b16 %v3451, %v3447
    %v3788 = vpack.c.b16 %v3452, %v3448
    %v3789 = vpack.c.b16 %v3457, %v3453
    %v3790 = vpack.c.b16 %v3458, %v3454
    %v3791 = vpack.c.b16 %v3459, %v3455
    %v3792 = vpack.c.b16 %v3460, %v3456
    %v3793 = vpack.c.b16 %v3465, %v3461
    %v3794 = vpack.c.b16 %v3466, %v3462
    %v3795 = vpack.c.b16 %v3467, %v3463
    %v3796 = vpack.c.b16 %v3468, %v3464
    %v3797 = vpack.c.b16 %v3473, %v3469
    %v3798 = vpack.c.b16 %v3474, %v3470
    %v3799 = vpack.c.b16 %v3475, %v3471
    %v3800 = vpack.c.b16 %v3476, %v3472
    %v3801 = vpack.c.b16 %v3481, %v3477
    %v3802 = vpack.c.b16 %v3482, %v3478
    %v3803 = vpack.c.b16 %v3483, %v3479
    %v3804 = vpack.c.b16 %v3484, %v3480
    %v3805 = vpack.c.b16 %v3489, %v3485
    %v3806 = vpack.c.b16 %v3490, %v3486
    %v3807 = vpack.c.b16 %v3491, %v3487
    %v3808 = vpack.c.b16 %v3492, %v3488
    %v3809 = vpack.c.b16 %v3497, %v3493
    %v3810 = vpack.c.b16 %v3498, %v3494
    %v3811 = vpack.c.b16 %v3499, %v3495
    %v3812 = vpack.c.b16 %v3500, %v3496
    %v3813 = vpack.c.b16 %v3505, %v3501
    %v3814 = vpack.c.b16 %v3506, %v3502
    %v3815 = vpack.c.b16 %v3507, %v3503
    %v3816 = vpack.c.b16 %v3508, %v3504
    %v3817 = vpack.c.b16 %v3513, %v3509
    %v3818 = vpack.c.b16 %v3514, %v3510
    %v3819 = vpack.c.b16 %v3515, %v3511
    %v3820 = vpack.c.b16 %v3516, %v3512
    %v3821 = vpack.c.b16 %v3521, %v3517
    %v3822 = vpack.c.b16 %v3522, %v3518
    %v3823 = vpack.c.b16 %v3523, %v3519
    %v3824 = vpack.c.b16 %v3524, %v3520
    %v3825 = vpack.c.b16 %v3529, %v3525
    %v3826 = vpack.c.b16 %v3530, %v3526
    %v3827 = vpack.c.b16 %v3531, %v3527
    %v3828 = vpack.c.b16 %v3532, %v3528
    %v3829 = vpack.c.b16 %v3537, %v3533
    %v3830 = vpack.c.b16 %v3538, %v3534
    %v3831 = vpack.c.b16 %v3539, %v3535
    %v3832 = vpack.c.b16 %v3540, %v3536
    %v3833 = vpack.c.b16 %v3545, %v3541
    %v3834 = vpack.c.b16 %v3546, %v3542
    %v3835 = vpack.c.b16 %v3547, %v3543
    %v3836 = vpack.c.b16 %v3548, %v3544
    %v3837 = vpack.c.b16 %v3553, %v3549
    %v3838 = vpack.c.b16 %v3554, %v3550
    %v3839 = vpack.c.b16 %v3555, %v3551
    %v3840 = vpack.c.b16 %v3556, %v3552
    %v3841 = vpack.c.b16 %v3561, %v3557
    %v3842 = vpack.c.b16 %v3562, %v3558
    %v3843 = vpack.c.b16 %v3563, %v3559
    %v3844 = vpack.c.b16 %v3564, %v3560
    %v3845 = vpack.c.b16 %v3569, %v3565
    %v3846 = vpack.c.b16 %v3570, %v3566
    %v3847 = vpack.c.b16 %v3571, %v3567
    %v3848 = vpack.c.b16 %v3572, %v3568
    %v3849 = vpack.c.b16 %v3577, %v3573
    %v3850 = vpack.c.b16 %v3578, %v3574
    %v3851 = vpack.c.b16 %v3579, %v3575
    %v3852 = vpack.c.b16 %v3580, %v3576
    %v3853 = vpack.c.b16 %v3585, %v3581
    %v3854 = vpack.c.b16 %v3586, %v3582
    %v3855 = vpack.c.b16 %v3587, %v3583
    %v3856 = vpack.c.b16 %v3588, %v3584
    %v3857 = vpack.c.b16 %v3593, %v3589
    %v3858 = vpack.c.b16 %v3594, %v3590
    %v3859 = vpack.c.b16 %v3595, %v3591
    %v3860 = vpack.c.b16 %v3596, %v3592
    %v3861 = vpack.c.b16 %v3601, %v3597
    %v3862 = vpack.c.b16 %v3602, %v3598
    %v3863 = vpack.c.b16 %v3603, %v3599
    %v3864 = vpack.c.b16 %v3604, %v3600
    %v3865 = vpack.c.b16 %v3609, %v3605
    %v3866 = vpack.c.b16 %v3610, %v3606
    %v3867 = vpack.c.b16 %v3611, %v3607
    %v3868 = vpack.c.b16 %v3612, %v3608
    %4125 = vmatprep.subr.bf16.mxu0 %v3642
    %4126 = vmatpush1.bf16.msra.mxu0 %v3641
    %4127 = vmatprep.subr.bf16.mxu0 %v3638
    %4128 = vmatpush1.bf16.msra.mxu0 %v3637
    %4129 = vmatprep.subr.bf16.mxu0 %v3634
    %4130 = vmatpush1.bf16.msra.mxu0 %v3633
    %4131 = vmatprep.subr.bf16.mxu0 %v3630
    %4132 = vmatpush1.bf16.msra.mxu0 %v3629
    %4133 = vmatprep.subr.bf16.mxu0 %v3626
    %4134 = vmatpush1.bf16.msra.mxu0 %v3625
    %4135 = vmatprep.subr.bf16.mxu0 %v3622
    %4136 = vmatpush1.bf16.msra.mxu0 %v3621
    %4137 = vmatprep.subr.bf16.mxu0 %v3618
    %4138 = vmatpush1.bf16.msra.mxu0 %v3617
    %4139 = vmatprep.subr.bf16.mxu0 %v3614
    %4140 = vmatpush1.bf16.msra.mxu0 %v3613
    %4141 = vmatprep.subr.bf16.mxu0 %v3674
    %4142 = vmatpush2.bf16.msra.mxu0 %v3673
    %4143 = vmatprep.subr.bf16.mxu0 %v3670
    %4144 = vmatpush2.bf16.msra.mxu0 %v3669
    %4145 = vmatprep.subr.bf16.mxu0 %v3666
    %4146 = vmatpush2.bf16.msra.mxu0 %v3665
    %4147 = vmatprep.subr.bf16.mxu0 %v3662
    %4148 = vmatpush2.bf16.msra.mxu0 %v3661
    %4149 = vmatprep.subr.bf16.mxu0 %v3658
    %4150 = vmatpush2.bf16.msra.mxu0 %v3657
    %4151 = vmatprep.subr.bf16.mxu0 %v3654
    %4152 = vmatpush2.bf16.msra.mxu0 %v3653
    %4153 = vmatprep.subr.bf16.mxu0 %v3650
    %4154 = vmatpush2.bf16.msra.mxu0 %v3649
    %4155 = vmatprep.subr.bf16.mxu0 %v3646
    %4156 = vmatpush2.bf16.msra.mxu0 %v3645
    %4157 = vmatprep.mubr.bf16.mxu0 %v2560
    %4158 = vmatmul.mubr.bf16.gmra.mxu0 %v2559
    %v4159 = vpop.f32.mrf.mxu0
    %v4160 = vadd.f32 %v2828, %v4159
    %v4161 = vpop.f32.mrf.mxu0
    %v4162 = vadd.f32 %v2832, %v4161
    %v4163 = vpop.f32.mrf.mxu0
    %v4164 = vadd.f32 %v2828, %v4163
    %v4165 = vpop.f32.mrf.mxu0
    %v4166 = vadd.f32 %v2832, %v4165
    %4167 = vdwg.mxu0
    %4168 = vmatprep.subr.bf16.mxu0 %v3706
    %4169 = vmatpush1.bf16.msra.mxu0 %v3705
    %4170 = vmatprep.subr.bf16.mxu0 %v3702
    %4171 = vmatpush1.bf16.msra.mxu0 %v3701
    %4172 = vmatprep.subr.bf16.mxu0 %v3698
    %4173 = vmatpush1.bf16.msra.mxu0 %v3697
    %4174 = vmatprep.subr.bf16.mxu0 %v3694
    %4175 = vmatpush1.bf16.msra.mxu0 %v3693
    %4176 = vmatprep.subr.bf16.mxu0 %v3690
    %4177 = vmatpush1.bf16.msra.mxu0 %v3689
    %4178 = vmatprep.subr.bf16.mxu0 %v3686
    %4179 = vmatpush1.bf16.msra.mxu0 %v3685
    %4180 = vmatprep.subr.bf16.mxu0 %v3682
    %4181 = vmatpush1.bf16.msra.mxu0 %v3681
    %4182 = vmatprep.subr.bf16.mxu0 %v3678
    %4183 = vmatpush1.bf16.msra.mxu0 %v3677
    %4184 = vmatprep.subr.bf16.mxu0 %v3738
    %4185 = vmatpush2.bf16.msra.mxu0 %v3737
    %4186 = vmatprep.subr.bf16.mxu0 %v3734
    %4187 = vmatpush2.bf16.msra.mxu0 %v3733
    %4188 = vmatprep.subr.bf16.mxu0 %v3730
    %4189 = vmatpush2.bf16.msra.mxu0 %v3729
    %4190 = vmatprep.subr.bf16.mxu0 %v3726
    %4191 = vmatpush2.bf16.msra.mxu0 %v3725
    %4192 = vmatprep.subr.bf16.mxu0 %v3722
    %4193 = vmatpush2.bf16.msra.mxu0 %v3721
    %4194 = vmatprep.subr.bf16.mxu0 %v3718
    %4195 = vmatpush2.bf16.msra.mxu0 %v3717
    %4196 = vmatprep.subr.bf16.mxu0 %v3714
    %4197 = vmatpush2.bf16.msra.mxu0 %v3713
    %4198 = vmatprep.subr.bf16.mxu0 %v3710
    %4199 = vmatpush2.bf16.msra.mxu0 %v3709
    %4200 = vmatprep.mubr.bf16.mxu0 %v2562
    %4201 = vmatmul.mubr.bf16.gmra.mxu0 %v2561
    %v4202 = vpop.f32.mrf.mxu0
    %v4203 = vadd.f32 %v4160, %v4202
    %v4204 = vpop.f32.mrf.mxu0
    %v4205 = vadd.f32 %v4162, %v4204
    %v4206 = vpop.f32.mrf.mxu0
    %v4207 = vadd.f32 %v4164, %v4206
    %v4208 = vpop.f32.mrf.mxu0
    %v4209 = vadd.f32 %v4166, %v4208
    %4210 = vdwg.mxu0
    %4211 = vmatprep.subr.bf16.mxu0 %v3770
    %4212 = vmatpush1.bf16.msra.mxu0 %v3769
    %4213 = vmatprep.subr.bf16.mxu0 %v3766
    %4214 = vmatpush1.bf16.msra.mxu0 %v3765
    %4215 = vmatprep.subr.bf16.mxu0 %v3762
    %4216 = vmatpush1.bf16.msra.mxu0 %v3761
    %4217 = vmatprep.subr.bf16.mxu0 %v3758
    %4218 = vmatpush1.bf16.msra.mxu0 %v3757
    %4219 = vmatprep.subr.bf16.mxu0 %v3754
    %4220 = vmatpush1.bf16.msra.mxu0 %v3753
    %4221 = vmatprep.subr.bf16.mxu0 %v3750
    %4222 = vmatpush1.bf16.msra.mxu0 %v3749
    %4223 = vmatprep.subr.bf16.mxu0 %v3746
    %4224 = vmatpush1.bf16.msra.mxu0 %v3745
    %4225 = vmatprep.subr.bf16.mxu0 %v3742
    %4226 = vmatpush1.bf16.msra.mxu0 %v3741
    %4227 = vmatprep.subr.bf16.mxu0 %v3802
    %4228 = vmatpush2.bf16.msra.mxu0 %v3801
    %4229 = vmatprep.subr.bf16.mxu0 %v3798
    %4230 = vmatpush2.bf16.msra.mxu0 %v3797
    %4231 = vmatprep.subr.bf16.mxu0 %v3794
    %4232 = vmatpush2.bf16.msra.mxu0 %v3793
    %4233 = vmatprep.subr.bf16.mxu0 %v3790
    %4234 = vmatpush2.bf16.msra.mxu0 %v3789
    %4235 = vmatprep.subr.bf16.mxu0 %v3786
    %4236 = vmatpush2.bf16.msra.mxu0 %v3785
    %4237 = vmatprep.subr.bf16.mxu0 %v3782
    %4238 = vmatpush2.bf16.msra.mxu0 %v3781
    %4239 = vmatprep.subr.bf16.mxu0 %v3778
    %4240 = vmatpush2.bf16.msra.mxu0 %v3777
    %4241 = vmatprep.subr.bf16.mxu0 %v3774
    %4242 = vmatpush2.bf16.msra.mxu0 %v3773
    %4243 = vmatprep.mubr.bf16.mxu0 %v2564
    %4244 = vmatmul.mubr.bf16.gmra.mxu0 %v2563
    %v4245 = vpop.f32.mrf.mxu0
    %v4246 = vadd.f32 %v4203, %v4245
    %v4247 = vpop.f32.mrf.mxu0
    %v4248 = vadd.f32 %v4205, %v4247
    %v4249 = vpop.f32.mrf.mxu0
    %v4250 = vadd.f32 %v4207, %v4249
    %v4251 = vpop.f32.mrf.mxu0
    %v4252 = vadd.f32 %v4209, %v4251
    %4253 = vdwg.mxu0
    %4254 = vmatprep.subr.bf16.mxu0 %v3834
    %4255 = vmatpush1.bf16.msra.mxu0 %v3833
    %4256 = vmatprep.subr.bf16.mxu0 %v3830
    %4257 = vmatpush1.bf16.msra.mxu0 %v3829
    %4258 = vmatprep.subr.bf16.mxu0 %v3826
    %4259 = vmatpush1.bf16.msra.mxu0 %v3825
    %4260 = vmatprep.subr.bf16.mxu0 %v3822
    %4261 = vmatpush1.bf16.msra.mxu0 %v3821
    %4262 = vmatprep.subr.bf16.mxu0 %v3818
    %4263 = vmatpush1.bf16.msra.mxu0 %v3817
    %4264 = vmatprep.subr.bf16.mxu0 %v3814
    %4265 = vmatpush1.bf16.msra.mxu0 %v3813
    %4266 = vmatprep.subr.bf16.mxu0 %v3810
    %4267 = vmatpush1.bf16.msra.mxu0 %v3809
    %4268 = vmatprep.subr.bf16.mxu0 %v3806
    %4269 = vmatpush1.bf16.msra.mxu0 %v3805
    %4270 = vmatprep.subr.bf16.mxu0 %v3866
    %4271 = vmatpush2.bf16.msra.mxu0 %v3865
    %4272 = vmatprep.subr.bf16.mxu0 %v3862
    %4273 = vmatpush2.bf16.msra.mxu0 %v3861
    %4274 = vmatprep.subr.bf16.mxu0 %v3858
    %4275 = vmatpush2.bf16.msra.mxu0 %v3857
    %4276 = vmatprep.subr.bf16.mxu0 %v3854
    %4277 = vmatpush2.bf16.msra.mxu0 %v3853
    %4278 = vmatprep.subr.bf16.mxu0 %v3850
    %4279 = vmatpush2.bf16.msra.mxu0 %v3849
    %4280 = vmatprep.subr.bf16.mxu0 %v3846
    %4281 = vmatpush2.bf16.msra.mxu0 %v3845
    %4282 = vmatprep.subr.bf16.mxu0 %v3842
    %4283 = vmatpush2.bf16.msra.mxu0 %v3841
    %4284 = vmatprep.subr.bf16.mxu0 %v3838
    %4285 = vmatpush2.bf16.msra.mxu0 %v3837
    %4286 = vmatprep.mubr.bf16.mxu0 %v2566
    %4287 = vmatmul.mubr.bf16.gmra.mxu0 %v2565
    %v4288 = vpop.f32.mrf.mxu0
    %v4289 = vadd.f32 %v4246, %v4288
    %v4290 = vpop.f32.mrf.mxu0
    %v4291 = vadd.f32 %v4248, %v4290
    %v4292 = vpop.f32.mrf.mxu0
    %v4293 = vadd.f32 %v4250, %v4292
    %v4294 = vpop.f32.mrf.mxu0
    %v4295 = vadd.f32 %v4252, %v4294
    %4296 = vdwg.mxu0
    %4297 = vmatprep.subr.bf16.mxu0 %v3644
    %4298 = vmatpush1.bf16.msra.mxu0 %v3643
    %4299 = vmatprep.subr.bf16.mxu0 %v3640
    %4300 = vmatpush1.bf16.msra.mxu0 %v3639
    %4301 = vmatprep.subr.bf16.mxu0 %v3636
    %4302 = vmatpush1.bf16.msra.mxu0 %v3635
    %4303 = vmatprep.subr.bf16.mxu0 %v3632
    %4304 = vmatpush1.bf16.msra.mxu0 %v3631
    %4305 = vmatprep.subr.bf16.mxu0 %v3628
    %4306 = vmatpush1.bf16.msra.mxu0 %v3627
    %4307 = vmatprep.subr.bf16.mxu0 %v3624
    %4308 = vmatpush1.bf16.msra.mxu0 %v3623
    %4309 = vmatprep.subr.bf16.mxu0 %v3620
    %4310 = vmatpush1.bf16.msra.mxu0 %v3619
    %4311 = vmatprep.subr.bf16.mxu0 %v3616
    %4312 = vmatpush1.bf16.msra.mxu0 %v3615
    %4313 = vmatprep.subr.bf16.mxu0 %v3676
    %4314 = vmatpush2.bf16.msra.mxu0 %v3675
    %4315 = vmatprep.subr.bf16.mxu0 %v3672
    %4316 = vmatpush2.bf16.msra.mxu0 %v3671
    %4317 = vmatprep.subr.bf16.mxu0 %v3668
    %4318 = vmatpush2.bf16.msra.mxu0 %v3667
    %4319 = vmatprep.subr.bf16.mxu0 %v3664
    %4320 = vmatpush2.bf16.msra.mxu0 %v3663
    %4321 = vmatprep.subr.bf16.mxu0 %v3660
    %4322 = vmatpush2.bf16.msra.mxu0 %v3659
    %4323 = vmatprep.subr.bf16.mxu0 %v3656
    %4324 = vmatpush2.bf16.msra.mxu0 %v3655
    %4325 = vmatprep.subr.bf16.mxu0 %v3652
    %4326 = vmatpush2.bf16.msra.mxu0 %v3651
    %4327 = vmatprep.subr.bf16.mxu0 %v3648
    %4328 = vmatpush2.bf16.msra.mxu0 %v3647
    %4329 = vmatprep.mubr.bf16.mxu0 %v2560
    %4330 = vmatmul.mubr.bf16.gmra.mxu0 %v2559
    %v4331 = vpop.f32.mrf.mxu0
    %v4332 = vadd.f32 %v2836, %v4331
    %v4333 = vpop.f32.mrf.mxu0
    %v4334 = vadd.f32 %v2840, %v4333
    %v4335 = vpop.f32.mrf.mxu0
    %v4336 = vadd.f32 %v2836, %v4335
    %v4337 = vpop.f32.mrf.mxu0
    %v4338 = vadd.f32 %v2840, %v4337
    %4339 = vdwg.mxu0
    %4340 = vmatprep.subr.bf16.mxu0 %v3708
    %4341 = vmatpush1.bf16.msra.mxu0 %v3707
    %4342 = vmatprep.subr.bf16.mxu0 %v3704
    %4343 = vmatpush1.bf16.msra.mxu0 %v3703
    %4344 = vmatprep.subr.bf16.mxu0 %v3700
    %4345 = vmatpush1.bf16.msra.mxu0 %v3699
    %4346 = vmatprep.subr.bf16.mxu0 %v3696
    %4347 = vmatpush1.bf16.msra.mxu0 %v3695
    %4348 = vmatprep.subr.bf16.mxu0 %v3692
    %4349 = vmatpush1.bf16.msra.mxu0 %v3691
    %4350 = vmatprep.subr.bf16.mxu0 %v3688
    %4351 = vmatpush1.bf16.msra.mxu0 %v3687
    %4352 = vmatprep.subr.bf16.mxu0 %v3684
    %4353 = vmatpush1.bf16.msra.mxu0 %v3683
    %4354 = vmatprep.subr.bf16.mxu0 %v3680
    %4355 = vmatpush1.bf16.msra.mxu0 %v3679
    %4356 = vmatprep.subr.bf16.mxu0 %v3740
    %4357 = vmatpush2.bf16.msra.mxu0 %v3739
    %4358 = vmatprep.subr.bf16.mxu0 %v3736
    %4359 = vmatpush2.bf16.msra.mxu0 %v3735
    %4360 = vmatprep.subr.bf16.mxu0 %v3732
    %4361 = vmatpush2.bf16.msra.mxu0 %v3731
    %4362 = vmatprep.subr.bf16.mxu0 %v3728
    %4363 = vmatpush2.bf16.msra.mxu0 %v3727
    %4364 = vmatprep.subr.bf16.mxu0 %v3724
    %4365 = vmatpush2.bf16.msra.mxu0 %v3723
    %4366 = vmatprep.subr.bf16.mxu0 %v3720
    %4367 = vmatpush2.bf16.msra.mxu0 %v3719
    %4368 = vmatprep.subr.bf16.mxu0 %v3716
    %4369 = vmatpush2.bf16.msra.mxu0 %v3715
    %4370 = vmatprep.subr.bf16.mxu0 %v3712
    %4371 = vmatpush2.bf16.msra.mxu0 %v3711
    %4372 = vmatprep.mubr.bf16.mxu0 %v2562
    %4373 = vmatmul.mubr.bf16.gmra.mxu0 %v2561
    %v4374 = vpop.f32.mrf.mxu0
    %v4375 = vadd.f32 %v4332, %v4374
    %v4376 = vpop.f32.mrf.mxu0
    %v4377 = vadd.f32 %v4334, %v4376
    %v4378 = vpop.f32.mrf.mxu0
    %v4379 = vadd.f32 %v4336, %v4378
    %v4380 = vpop.f32.mrf.mxu0
    %v4381 = vadd.f32 %v4338, %v4380
    %4382 = vdwg.mxu0
    %4383 = vmatprep.subr.bf16.mxu0 %v3772
    %4384 = vmatpush1.bf16.msra.mxu0 %v3771
    %4385 = vmatprep.subr.bf16.mxu0 %v3768
    %4386 = vmatpush1.bf16.msra.mxu0 %v3767
    %4387 = vmatprep.subr.bf16.mxu0 %v3764
    %4388 = vmatpush1.bf16.msra.mxu0 %v3763
    %4389 = vmatprep.subr.bf16.mxu0 %v3760
    %4390 = vmatpush1.bf16.msra.mxu0 %v3759
    %4391 = vmatprep.subr.bf16.mxu0 %v3756
    %4392 = vmatpush1.bf16.msra.mxu0 %v3755
    %4393 = vmatprep.subr.bf16.mxu0 %v3752
    %4394 = vmatpush1.bf16.msra.mxu0 %v3751
    %4395 = vmatprep.subr.bf16.mxu0 %v3748
    %4396 = vmatpush1.bf16.msra.mxu0 %v3747
    %4397 = vmatprep.subr.bf16.mxu0 %v3744
    %4398 = vmatpush1.bf16.msra.mxu0 %v3743
    %4399 = vmatprep.subr.bf16.mxu0 %v3804
    %4400 = vmatpush2.bf16.msra.mxu0 %v3803
    %4401 = vmatprep.subr.bf16.mxu0 %v3800
    %4402 = vmatpush2.bf16.msra.mxu0 %v3799
    %4403 = vmatprep.subr.bf16.mxu0 %v3796
    %4404 = vmatpush2.bf16.msra.mxu0 %v3795
    %4405 = vmatprep.subr.bf16.mxu0 %v3792
    %4406 = vmatpush2.bf16.msra.mxu0 %v3791
    %4407 = vmatprep.subr.bf16.mxu0 %v3788
    %4408 = vmatpush2.bf16.msra.mxu0 %v3787
    %4409 = vmatprep.subr.bf16.mxu0 %v3784
    %4410 = vmatpush2.bf16.msra.mxu0 %v3783
    %4411 = vmatprep.subr.bf16.mxu0 %v3780
    %4412 = vmatpush2.bf16.msra.mxu0 %v3779
    %4413 = vmatprep.subr.bf16.mxu0 %v3776
    %4414 = vmatpush2.bf16.msra.mxu0 %v3775
    %4415 = vmatprep.mubr.bf16.mxu0 %v2564
    %4416 = vmatmul.mubr.bf16.gmra.mxu0 %v2563
    %v4417 = vpop.f32.mrf.mxu0
    %v4418 = vadd.f32 %v4375, %v4417
    %v4419 = vpop.f32.mrf.mxu0
    %v4420 = vadd.f32 %v4377, %v4419
    %v4421 = vpop.f32.mrf.mxu0
    %v4422 = vadd.f32 %v4379, %v4421
    %v4423 = vpop.f32.mrf.mxu0
    %v4424 = vadd.f32 %v4381, %v4423
    %4425 = vdwg.mxu0
    %4426 = vmatprep.subr.bf16.mxu0 %v3836
    %4427 = vmatpush1.bf16.msra.mxu0 %v3835
    %4428 = vmatprep.subr.bf16.mxu0 %v3832
    %4429 = vmatpush1.bf16.msra.mxu0 %v3831
    %4430 = vmatprep.subr.bf16.mxu0 %v3828
    %4431 = vmatpush1.bf16.msra.mxu0 %v3827
    %4432 = vmatprep.subr.bf16.mxu0 %v3824
    %4433 = vmatpush1.bf16.msra.mxu0 %v3823
    %4434 = vmatprep.subr.bf16.mxu0 %v3820
    %4435 = vmatpush1.bf16.msra.mxu0 %v3819
    %4436 = vmatprep.subr.bf16.mxu0 %v3816
    %4437 = vmatpush1.bf16.msra.mxu0 %v3815
    %4438 = vmatprep.subr.bf16.mxu0 %v3812
    %4439 = vmatpush1.bf16.msra.mxu0 %v3811
    %4440 = vmatprep.subr.bf16.mxu0 %v3808
    %4441 = vmatpush1.bf16.msra.mxu0 %v3807
    %4442 = vmatprep.subr.bf16.mxu0 %v3868
    %4443 = vmatpush2.bf16.msra.mxu0 %v3867
    %4444 = vmatprep.subr.bf16.mxu0 %v3864
    %4445 = vmatpush2.bf16.msra.mxu0 %v3863
    %4446 = vmatprep.subr.bf16.mxu0 %v3860
    %4447 = vmatpush2.bf16.msra.mxu0 %v3859
    %4448 = vmatprep.subr.bf16.mxu0 %v3856
    %4449 = vmatpush2.bf16.msra.mxu0 %v3855
    %4450 = vmatprep.subr.bf16.mxu0 %v3852
    %4451 = vmatpush2.bf16.msra.mxu0 %v3851
    %4452 = vmatprep.subr.bf16.mxu0 %v3848
    %4453 = vmatpush2.bf16.msra.mxu0 %v3847
    %4454 = vmatprep.subr.bf16.mxu0 %v3844
    %4455 = vmatpush2.bf16.msra.mxu0 %v3843
    %4456 = vmatprep.subr.bf16.mxu0 %v3840
    %4457 = vmatpush2.bf16.msra.mxu0 %v3839
    %4458 = vmatprep.mubr.bf16.mxu0 %v2566
    %4459 = vmatmul.mubr.bf16.gmra.mxu0 %v2565
    %v4460 = vpop.f32.mrf.mxu0
    %v4461 = vadd.f32 %v4418, %v4460
    %v4462 = vpop.f32.mrf.mxu0
    %v4463 = vadd.f32 %v4420, %v4462
    %v4464 = vpop.f32.mrf.mxu0
    %v4465 = vadd.f32 %v4422, %v4464
    %v4466 = vpop.f32.mrf.mxu0
    %v4467 = vadd.f32 %v4424, %v4466
    %4468 = vdwg.mxu0
    %v4469 = vmax.f32 %v4289, %v4461
    %v4470 = vmax.f32 %v4291, %v4463
    %v4471 = vmax.f32 %v4469, %v4470
    %4472 = vmax.xlane.f32.xlu0 %v4471
    %v4473 = vpop.xlane.xlu0 %4472
    %v4474 = vmax.f32 %v4293, %v4465
    %v4475 = vmax.f32 %v4295, %v4467
    %v4476 = vmax.f32 %v4474, %v4475
    %4477 = vmax.xlane.f32.xlu0 %v4476
    %v4478 = vpop.xlane.xlu0 %4477
    %v4479 = vsub.f32 %v4289, %v4473
    %v4480 = vsub.f32 %v4291, %v4473
    %v4481 = vsub.f32 %v4461, %v4473
    %v4482 = vsub.f32 %v4463, %v4473
    %v4483 = vsub.f32 %v4293, %v4478
    %v4484 = vsub.f32 %v4295, %v4478
    %v4485 = vsub.f32 %v4465, %v4478
    %v4486 = vsub.f32 %v4467, %v4478
    %v4487 = vmul.f32 %v4479, 1.442695
    %v4488 = vpow.pop %v4487
    %v4489 = vmul.f32 %v4480, 1.442695
    %v4490 = vpow.pop %v4489
    %v4491 = vmul.f32 %v4481, 1.442695
    %v4492 = vpow.pop %v4491
    %v4493 = vmul.f32 %v4482, 1.442695
    %v4494 = vpow.pop %v4493
    %v4495 = vmul.f32 %v4483, 1.442695
    %v4496 = vpow.pop %v4495
    %v4497 = vmul.f32 %v4484, 1.442695
    %v4498 = vpow.pop %v4497
    %v4499 = vmul.f32 %v4485, 1.442695
    %v4500 = vpow.pop %v4499
    %v4501 = vmul.f32 %v4486, 1.442695
    %v4502 = vpow.pop %v4501
    %v4503 = vadd.f32 %v4488, %v4490
    %v4504 = vadd.f32 %v4503, %v4492
    %v4505 = vadd.f32 %v4504, %v4494
    %4506 = vadd.xlane.f32.xlu0 %v4505
    %v4507 = vpop.xlane.xlu0 %4506
    %v4508 = vadd.f32 %v4496, %v4498
    %v4509 = vadd.f32 %v4508, %v4500
    %v4510 = vadd.f32 %v4509, %v4502
    %4511 = vadd.xlane.f32.xlu0 %v4510
    %v4512 = vpop.xlane.xlu0 %4511
    %v4513 = vrcp.pop %v4507
    %v4514 = vmul.f32 %v4488, %v4513
    %v4515 = vmul.f32 %v4490, %v4513
    %v4516 = vmul.f32 %v4492, %v4513
    %v4517 = vmul.f32 %v4494, %v4513
    %v4518 = vrcp.pop %v4512
    %v4519 = vmul.f32 %v4496, %v4518
    %v4520 = vmul.f32 %v4498, %v4518
    %v4521 = vmul.f32 %v4500, %v4518
    %v4522 = vmul.f32 %v4502, %v4518
    %v4523 = vpack.c.bf16 %v4519, %v4514
    %v4524 = vpack.c.bf16 %v4520, %v4515
    %v4525 = vpack.c.bf16 %v4521, %v4516
    %v4526 = vpack.c.bf16 %v4522, %v4517
    %v4531 = vunpack.c.l.b16 %v4523
    %v4532 = vunpack.c.l.b16 %v4524
    %v4533 = vunpack.c.l.b16 %v4525
    %v4534 = vunpack.c.l.b16 %v4526
    %v4535 = vunpack.c.h.b16 %v4523
    %v4536 = vunpack.c.h.b16 %v4524
    %v4537 = vunpack.c.h.b16 %v4525
    %v4538 = vunpack.c.h.b16 %v4526
    %v4539 = vpack.c.b16 %v4532, %v4531
    %v4540 = vpack.c.b16 %v4534, %v4533
    %v4541 = vpack.c.b16 %v4536, %v4535
    %v4542 = vpack.c.b16 %v4538, %v4537
    %4547 = vst [vmem:[#allocation13] sm:$0xff] %v4539
    %4548 = vst [vmem:[#allocation13 + $0x8] sm:$0xff] %v4540
    %4549 = vst [vmem:[#allocation13 + $0x10] sm:$0xff] %v4541
    %4550 = vst [vmem:[#allocation13 + $0x18] sm:$0xff] %v4542
    // Predicated region
    $region54: #{tpu_custom_call.1} parent=1 // pred_check
      _
    $region55: #{tpu_custom_call.1} parent=1 // pred_check_branch
      %4552 = sbr.rel (0) target = $region57
    $region56: #{tpu_custom_call.1} parent=1 // pred_region
      %s4554 = ssub.s32 512, 512
      %4555 = vsyncadd [#allocation4], %s4554
      %s4556 = sshll.u32 [#allocation13], 4
      %s4557 = int_to_ptr.vmem [resolvable:$true] %s4556
      %4562 = dma.vmem_to_hbm [thread:$0]  %s4557, 512, %s7, [#allocation4], 256, 256, 16
    $region57: #{tpu_custom_call.1} parent=1 // pred_fallthru
      _
    // Predicated region
    $region58: #{tpu_custom_call.1} parent=1 // pred_check
      _
    $region59: #{tpu_custom_call.1} parent=1 // pred_check_branch
      %4564 = sbr.rel (0) target = $region61
    $region60: #{tpu_custom_call.1} parent=1 // pred_region
      %4565 = dma.done [#allocation4], 512
    $region61: #{tpu_custom_call.1} parent=1 // pred_fallthru
      _
    %4566 = vsyncpa [#allocation3], 1
    %4567 = vsyncpa [#allocation6], 1
    %4568 = vsyncpa [#allocation9], 1
    %4569 = vsyncpa [#allocation12], 1
    %4570 = vsyncpa [#allocation4], 1

</llo_original>
